<compile_context>
chip_gen: v6e
topology: v6e:2x2x1
jax: 0.10.0
libtpu: 0.0.40
codegen_flags: <defaults>
</compile_context>

<pallas_src>
import functools

import jax
import jax.numpy as jnp
from jax import lax
from jax.experimental import pallas as pl
from jax.experimental.pallas import tpu as pltpu

N_EMBD = 384
NUM_HEADS = 6
HEAD_SIZE = N_EMBD // NUM_HEADS  # 64


# ---------------------------------------------------------------------------
# Fused kernel: one batch element per grid step.
# ---------------------------------------------------------------------------
def _mha_fused_kernel(x_ref, wqkv_ref, wp_ref, bp_ref, o_ref, *,
                      num_heads, head_size):
    T = x_ref.shape[1]
    H, hs = num_heads, head_size

    x = x_ref[0].astype(jnp.bfloat16)                      # (T, C)

    # Fused Q/K/V projection for all heads: one (T,C)@(C,3*H*hs) MXU matmul.
    # Q columns are pre-scaled by C**-0.5 (folded into the weights).
    qkv = jnp.dot(x, wqkv_ref[...],
                  preferred_element_type=jnp.float32)      # (T, 3*H*hs) f32
    q = qkv[:, 0 * H * hs:1 * H * hs]
    k = qkv[:, 1 * H * hs:2 * H * hs]
    v = qkv[:, 2 * H * hs:3 * H * hs]

    # Causal mask built once, shared by all heads.
    row = lax.broadcasted_iota(jnp.int32, (T, T), 0)
    col = lax.broadcasted_iota(jnp.int32, (T, T), 1)
    causal = col <= row
    neg_big = jnp.float32(-1e30)   # large finite negative (robust vs -inf NaNs)

    head_outs = []
    for h in range(H):                                      # static unrolled loop
        qh = q[:, h * hs:(h + 1) * hs].astype(jnp.bfloat16)  # (T, hs)
        kh = k[:, h * hs:(h + 1) * hs].astype(jnp.bfloat16)  # (T, hs)
        vh = v[:, h * hs:(h + 1) * hs].astype(jnp.bfloat16)  # (T, hs)

        # scores = q @ k.T  (scale already folded into q weights)
        s = jnp.einsum("td,sd->ts", qh, kh,
                       preferred_element_type=jnp.float32)   # (T, T) f32
        s = jnp.where(causal, s, neg_big)

        # Numerically stable softmax in f32; reciprocal on the EUP slot.
        m = jnp.max(s, axis=-1, keepdims=True)
        p = jnp.exp(s - m)
        denom = jnp.sum(p, axis=-1, keepdims=True)
        p = p * pl.reciprocal(denom, approx=True)

        # (attention dropout is identity in eval mode)
        head_outs.append(jnp.dot(p.astype(jnp.bfloat16), vh,
                                 preferred_element_type=jnp.float32))  # (T, hs)

    cat = jnp.concatenate(head_outs, axis=-1)               # (T, C) f32

    # Output projection: cat @ Wp.T + bp  (Wp pre-transposed in the wrapper).
    y = jnp.dot(cat.astype(jnp.bfloat16), wp_ref[...],
                preferred_element_type=jnp.float32) + bp_ref[...]

    # (output dropout is identity in eval mode)
    o_ref[...] = y[None, :, :].astype(o_ref.dtype)


# ---------------------------------------------------------------------------
# Wrapper
# ---------------------------------------------------------------------------
@jax.jit
def multi_head_attention(x, wk, wq, wv, wp, bp):
    """x: (B, T, n_embd); wk/wq/wv: (H, hs, n_embd); wp: (n_embd, n_embd); bp: (n_embd,)."""
    B, T, C = x.shape
    H, hs, _ = wk.shape

    # Pre-pack weights: (H, hs, C) -> (C, H*hs) so the kernel does plain x @ W.
    # Fold the module's C**-0.5 attention scale into the Q weights.
    scale = jnp.float32(C) ** -0.5
    wq_p = jnp.transpose(wq, (2, 0, 1)).reshape(C, H * hs) * scale
    wk_p = jnp.transpose(wk, (2, 0, 1)).reshape(C, H * hs)
    wv_p = jnp.transpose(wv, (2, 0, 1)).reshape(C, H * hs)
    wqkv = jnp.concatenate([wq_p, wk_p, wv_p], axis=1).astype(jnp.bfloat16)  # (C, 3*H*hs)
    wp_t = wp.T.astype(jnp.bfloat16)                                         # (C, C)
    bp2d = bp.reshape(1, C).astype(jnp.float32)

    kernel = functools.partial(_mha_fused_kernel, num_heads=H, head_size=hs)

    out = pl.pallas_call(
        kernel,
        out_shape=jax.ShapeDtypeStruct((B, T, C), x.dtype),
        grid=(B,),
        in_specs=[
            pl.BlockSpec((1, T, C), lambda b: (b, 0, 0)),          # x (one batch elem)
            pl.BlockSpec((C, 3 * H * hs), lambda b: (0, 0)),       # packed QKV weights
            pl.BlockSpec((C, C), lambda b: (0, 0)),                # Wp.T
            pl.BlockSpec((1, C), lambda b: (0, 0)),                # bias
        ],
        out_specs=pl.BlockSpec((1, T, C), lambda b: (b, 0, 0)),
        compiler_params=pltpu.CompilerParams(
            dimension_semantics=("parallel",)),
    )(x, wqkv, wp_t, bp2d)

    return out


# ---------------------------------------------------------------------------
# Pure-JAX reference (eval-mode PyTorch semantics) for a correctness check.
# ---------------------------------------------------------------------------
def _reference(x, wk, wq, wv, wp, bp):
    B, T, C = x.shape
    outs = []
    for h in range(wk.shape[0]):
        k = x @ wk[h].T
        q = x @ wq[h].T
        v = x @ wv[h].T
        wei = (q @ jnp.swapaxes(k, -2, -1)) * (C ** -0.5)
        mask = jnp.tril(jnp.ones((T, T), dtype=bool))
        wei = jnp.where(mask, wei, -jnp.inf)
        wei = jax.nn.softmax(wei, axis=-1)
        outs.append(wei @ v)
    cat = jnp.concatenate(outs, axis=-1)
    return cat @ wp.T + bp


if __name__ == "__main__":
    B, T = 2, 64  # small seq (<= block_size=256); n_embd fixed at 384 by the module

    key = jax.random.PRNGKey(0)
    kx, kk, kq, kv, kp, kb = jax.random.split(key, 6)

    x = jax.random.normal(kx, (B, T, N_EMBD), dtype=jnp.float32)

    # Deterministic parameter init (PyTorch Linear-style uniform bounds).
    lim_in = 1.0 / (N_EMBD ** 0.5)
    wk = jax.random.uniform(kk, (NUM_HEADS, HEAD_SIZE, N_EMBD),
                            minval=-lim_in, maxval=lim_in, dtype=jnp.float32)
    wq = jax.random.uniform(kq, (NUM_HEADS, HEAD_SIZE, N_EMBD),
                            minval=-lim_in, maxval=lim_in, dtype=jnp.float32)
    wv = jax.random.uniform(kv, (NUM_HEADS, HEAD_SIZE, N_EMBD),
                            minval=-lim_in, maxval=lim_in, dtype=jnp.float32)
    wp = jax.random.uniform(kp, (N_EMBD, N_EMBD),
                            minval=-lim_in, maxval=lim_in, dtype=jnp.float32)
    bp = jax.random.uniform(kb, (N_EMBD,),
                            minval=-lim_in, maxval=lim_in, dtype=jnp.float32)

    out = multi_head_attention(x, wk, wq, wv, wp, bp)
    out = jax.block_until_ready(out)

    ref = _reference(x, wk, wq, wv, wp, bp)
    assert out.shape == (B, T, N_EMBD)
    # bf16 matmul operands (f32 accumulation) -> tolerance loosened accordingly.
    assert jnp.allclose(out, ref, atol=2e-2, rtol=2e-2), "mismatch vs reference"

    print("KERNEL_OK")
</pallas_src>

<mosaic_0001>
module attributes {stable_mosaic.version = 11 : i64} {
  func.func @_mha_fused_kernel(%arg0: i32, %arg1: memref<1x64x384xf32, #tpu.memory_space<vmem>>, %arg2: memref<384x1152xbf16, #tpu.memory_space<vmem>>, %arg3: memref<384x384xbf16, #tpu.memory_space<vmem>>, %arg4: memref<1x384xf32, #tpu.memory_space<vmem>>, %arg5: memref<1x64x384xf32, #tpu.memory_space<vmem>>) attributes {dimension_semantics = [#tpu.dimension_semantics<parallel>], iteration_bounds = array<i64: 2>, scalar_prefetch = 0 : i64, scratch_operands = 0 : i64, tpu.core_type = #tpu.core_type<tc>, window_params = [{transform_indices = @transform_0, window_bounds = array<i64: 1, 64, 384>}, {pipeline_mode = #tpu.pipeline_mode<synchronous>, transform_indices = @transform_1, window_bounds = array<i64: 384, 1152>}, {pipeline_mode = #tpu.pipeline_mode<synchronous>, transform_indices = @transform_2, window_bounds = array<i64: 384, 384>}, {pipeline_mode = #tpu.pipeline_mode<synchronous>, transform_indices = @transform_3, window_bounds = array<i64: 1, 384>}, {transform_indices = @transform_4, window_bounds = array<i64: 1, 64, 384>}]} {
    %c0 = arith.constant 0 : index
    %c0_0 = arith.constant 0 : index
    %c0_1 = arith.constant 0 : index
    %0 = vector.load %arg1[%c0, %c0_0, %c0_1] : memref<1x64x384xf32, #tpu.memory_space<vmem>>, vector<1x64x384xf32>
    %1 = vector.shape_cast %0 : vector<1x64x384xf32> to vector<64x384xf32>
    %2 = arith.truncf %1 : vector<64x384xf32> to vector<64x384xbf16>
    %c0_2 = arith.constant 0 : index
    %c0_3 = arith.constant 0 : index
    %3 = vector.load %arg2[%c0_2, %c0_3] : memref<384x1152xbf16, #tpu.memory_space<vmem>>, vector<384x1152xbf16>
    %cst = arith.constant dense<0.000000e+00> : vector<64x1152xf32>
    %4 = tpu.matmul %2, %3, %cst {dimension_numbers = #tpu.dot_dimension_numbers<[1], [0], [0], [1], [0, 0, 1, 1], [], []>} : vector<64x384xbf16>, vector<384x1152xbf16>, vector<64x1152xf32> -> vector<64x1152xf32>
    %5 = vector.extract_strided_slice %4 {offsets = [0, 0], sizes = [64, 384], strides = [1, 1]} : vector<64x1152xf32> to vector<64x384xf32>
    %6 = vector.extract_strided_slice %4 {offsets = [0, 384], sizes = [64, 384], strides = [1, 1]} : vector<64x1152xf32> to vector<64x384xf32>
    %7 = vector.extract_strided_slice %4 {offsets = [0, 768], sizes = [64, 384], strides = [1, 1]} : vector<64x1152xf32> to vector<64x384xf32>
    %8 = tpu.iota {dimensions = array<i32: 0>} : vector<64x64xi32>
    %9 = tpu.iota {dimensions = array<i32: 1>} : vector<64x64xi32>
    %10 = arith.cmpi sle, %9, %8 : vector<64x64xi32>
    %11 = vector.extract_strided_slice %5 {offsets = [0, 0], sizes = [64, 64], strides = [1, 1]} : vector<64x384xf32> to vector<64x64xf32>
    %12 = arith.truncf %11 : vector<64x64xf32> to vector<64x64xbf16>
    %13 = vector.extract_strided_slice %6 {offsets = [0, 0], sizes = [64, 64], strides = [1, 1]} : vector<64x384xf32> to vector<64x64xf32>
    %14 = arith.truncf %13 : vector<64x64xf32> to vector<64x64xbf16>
    %15 = vector.extract_strided_slice %7 {offsets = [0, 0], sizes = [64, 64], strides = [1, 1]} : vector<64x384xf32> to vector<64x64xf32>
    %16 = arith.truncf %15 : vector<64x64xf32> to vector<64x64xbf16>
    "tpu.trace_start"() <{level = 10 : i32, message = "td,sd->ts"}> : () -> ()
    %cst_4 = arith.constant dense<0.000000e+00> : vector<64x64xf32>
    %17 = tpu.matmul %12, %14, %cst_4 {dimension_numbers = #tpu.dot_dimension_numbers<[1], [1], [0], [0], [0, 0, 1, 0], [], []>} : vector<64x64xbf16>, vector<64x64xbf16>, vector<64x64xf32> -> vector<64x64xf32>
    %cst_5 = arith.constant -1.000000e+30 : f32
    "tpu.trace_stop"() : () -> ()
    %18 = vector.broadcast %cst_5 : f32 to vector<64x64xf32>
    %19 = arith.select %10, %17, %18 : vector<64x64xi1>, vector<64x64xf32>
    %cst_6 = arith.constant dense<0xFF800000> : vector<64xf32>
    %20 = vector.multi_reduction <maximumf>, %19, %cst_6 [1] : vector<64x64xf32> to vector<64xf32>
    %21 = vector.shape_cast %20 : vector<64xf32> to vector<64x1xf32>
    %22 = vector.broadcast %21 : vector<64x1xf32> to vector<64x64xf32>
    %23 = arith.subf %19, %22 : vector<64x64xf32>
    %24 = math.exp %23 : vector<64x64xf32>
    %cst_7 = arith.constant dense<0.000000e+00> : vector<64xf32>
    %25 = vector.multi_reduction <add>, %24, %cst_7 [1] : vector<64x64xf32> to vector<64xf32>
    %26 = vector.shape_cast %25 : vector<64xf32> to vector<64x1xf32>
    %27 = tpu.reciprocal %26 {approx = true} : vector<64x1xf32> -> vector<64x1xf32>
    %28 = vector.broadcast %27 : vector<64x1xf32> to vector<64x64xf32>
    %29 = arith.mulf %24, %28 : vector<64x64xf32>
    %30 = arith.truncf %29 : vector<64x64xf32> to vector<64x64xbf16>
    %cst_8 = arith.constant dense<0.000000e+00> : vector<64x64xf32>
    %31 = tpu.matmul %30, %16, %cst_8 {dimension_numbers = #tpu.dot_dimension_numbers<[1], [0], [0], [1], [0, 0, 1, 1], [], []>} : vector<64x64xbf16>, vector<64x64xbf16>, vector<64x64xf32> -> vector<64x64xf32>
    %32 = vector.extract_strided_slice %5 {offsets = [0, 64], sizes = [64, 64], strides = [1, 1]} : vector<64x384xf32> to vector<64x64xf32>
    %33 = arith.truncf %32 : vector<64x64xf32> to vector<64x64xbf16>
    %34 = vector.extract_strided_slice %6 {offsets = [0, 64], sizes = [64, 64], strides = [1, 1]} : vector<64x384xf32> to vector<64x64xf32>
    %35 = arith.truncf %34 : vector<64x64xf32> to vector<64x64xbf16>
    %36 = vector.extract_strided_slice %7 {offsets = [0, 64], sizes = [64, 64], strides = [1, 1]} : vector<64x384xf32> to vector<64x64xf32>
    %37 = arith.truncf %36 : vector<64x64xf32> to vector<64x64xbf16>
    "tpu.trace_start"() <{level = 10 : i32, message = "td,sd->ts"}> : () -> ()
    %cst_9 = arith.constant dense<0.000000e+00> : vector<64x64xf32>
    %38 = tpu.matmul %33, %35, %cst_9 {dimension_numbers = #tpu.dot_dimension_numbers<[1], [1], [0], [0], [0, 0, 1, 0], [], []>} : vector<64x64xbf16>, vector<64x64xbf16>, vector<64x64xf32> -> vector<64x64xf32>
    %cst_10 = arith.constant -1.000000e+30 : f32
    "tpu.trace_stop"() : () -> ()
    %39 = vector.broadcast %cst_10 : f32 to vector<64x64xf32>
    %40 = arith.select %10, %38, %39 : vector<64x64xi1>, vector<64x64xf32>
    %cst_11 = arith.constant dense<0xFF800000> : vector<64xf32>
    %41 = vector.multi_reduction <maximumf>, %40, %cst_11 [1] : vector<64x64xf32> to vector<64xf32>
    %42 = vector.shape_cast %41 : vector<64xf32> to vector<64x1xf32>
    %43 = vector.broadcast %42 : vector<64x1xf32> to vector<64x64xf32>
    %44 = arith.subf %40, %43 : vector<64x64xf32>
    %45 = math.exp %44 : vector<64x64xf32>
    %cst_12 = arith.constant dense<0.000000e+00> : vector<64xf32>
    %46 = vector.multi_reduction <add>, %45, %cst_12 [1] : vector<64x64xf32> to vector<64xf32>
    %47 = vector.shape_cast %46 : vector<64xf32> to vector<64x1xf32>
    %48 = tpu.reciprocal %47 {approx = true} : vector<64x1xf32> -> vector<64x1xf32>
    %49 = vector.broadcast %48 : vector<64x1xf32> to vector<64x64xf32>
    %50 = arith.mulf %45, %49 : vector<64x64xf32>
    %51 = arith.truncf %50 : vector<64x64xf32> to vector<64x64xbf16>
    %cst_13 = arith.constant dense<0.000000e+00> : vector<64x64xf32>
    %52 = tpu.matmul %51, %37, %cst_13 {dimension_numbers = #tpu.dot_dimension_numbers<[1], [0], [0], [1], [0, 0, 1, 1], [], []>} : vector<64x64xbf16>, vector<64x64xbf16>, vector<64x64xf32> -> vector<64x64xf32>
    %53 = vector.extract_strided_slice %5 {offsets = [0, 128], sizes = [64, 64], strides = [1, 1]} : vector<64x384xf32> to vector<64x64xf32>
    %54 = arith.truncf %53 : vector<64x64xf32> to vector<64x64xbf16>
    %55 = vector.extract_strided_slice %6 {offsets = [0, 128], sizes = [64, 64], strides = [1, 1]} : vector<64x384xf32> to vector<64x64xf32>
    %56 = arith.truncf %55 : vector<64x64xf32> to vector<64x64xbf16>
    %57 = vector.extract_strided_slice %7 {offsets = [0, 128], sizes = [64, 64], strides = [1, 1]} : vector<64x384xf32> to vector<64x64xf32>
    %58 = arith.truncf %57 : vector<64x64xf32> to vector<64x64xbf16>
    "tpu.trace_start"() <{level = 10 : i32, message = "td,sd->ts"}> : () -> ()
    %cst_14 = arith.constant dense<0.000000e+00> : vector<64x64xf32>
    %59 = tpu.matmul %54, %56, %cst_14 {dimension_numbers = #tpu.dot_dimension_numbers<[1], [1], [0], [0], [0, 0, 1, 0], [], []>} : vector<64x64xbf16>, vector<64x64xbf16>, vector<64x64xf32> -> vector<64x64xf32>
    %cst_15 = arith.constant -1.000000e+30 : f32
    "tpu.trace_stop"() : () -> ()
    %60 = vector.broadcast %cst_15 : f32 to vector<64x64xf32>
    %61 = arith.select %10, %59, %60 : vector<64x64xi1>, vector<64x64xf32>
    %cst_16 = arith.constant dense<0xFF800000> : vector<64xf32>
    %62 = vector.multi_reduction <maximumf>, %61, %cst_16 [1] : vector<64x64xf32> to vector<64xf32>
    %63 = vector.shape_cast %62 : vector<64xf32> to vector<64x1xf32>
    %64 = vector.broadcast %63 : vector<64x1xf32> to vector<64x64xf32>
    %65 = arith.subf %61, %64 : vector<64x64xf32>
    %66 = math.exp %65 : vector<64x64xf32>
    %cst_17 = arith.constant dense<0.000000e+00> : vector<64xf32>
    %67 = vector.multi_reduction <add>, %66, %cst_17 [1] : vector<64x64xf32> to vector<64xf32>
    %68 = vector.shape_cast %67 : vector<64xf32> to vector<64x1xf32>
    %69 = tpu.reciprocal %68 {approx = true} : vector<64x1xf32> -> vector<64x1xf32>
    %70 = vector.broadcast %69 : vector<64x1xf32> to vector<64x64xf32>
    %71 = arith.mulf %66, %70 : vector<64x64xf32>
    %72 = arith.truncf %71 : vector<64x64xf32> to vector<64x64xbf16>
    %cst_18 = arith.constant dense<0.000000e+00> : vector<64x64xf32>
    %73 = tpu.matmul %72, %58, %cst_18 {dimension_numbers = #tpu.dot_dimension_numbers<[1], [0], [0], [1], [0, 0, 1, 1], [], []>} : vector<64x64xbf16>, vector<64x64xbf16>, vector<64x64xf32> -> vector<64x64xf32>
    %74 = vector.extract_strided_slice %5 {offsets = [0, 192], sizes = [64, 64], strides = [1, 1]} : vector<64x384xf32> to vector<64x64xf32>
    %75 = arith.truncf %74 : vector<64x64xf32> to vector<64x64xbf16>
    %76 = vector.extract_strided_slice %6 {offsets = [0, 192], sizes = [64, 64], strides = [1, 1]} : vector<64x384xf32> to vector<64x64xf32>
    %77 = arith.truncf %76 : vector<64x64xf32> to vector<64x64xbf16>
    %78 = vector.extract_strided_slice %7 {offsets = [0, 192], sizes = [64, 64], strides = [1, 1]} : vector<64x384xf32> to vector<64x64xf32>
    %79 = arith.truncf %78 : vector<64x64xf32> to vector<64x64xbf16>
    "tpu.trace_start"() <{level = 10 : i32, message = "td,sd->ts"}> : () -> ()
    %cst_19 = arith.constant dense<0.000000e+00> : vector<64x64xf32>
    %80 = tpu.matmul %75, %77, %cst_19 {dimension_numbers = #tpu.dot_dimension_numbers<[1], [1], [0], [0], [0, 0, 1, 0], [], []>} : vector<64x64xbf16>, vector<64x64xbf16>, vector<64x64xf32> -> vector<64x64xf32>
    %cst_20 = arith.constant -1.000000e+30 : f32
    "tpu.trace_stop"() : () -> ()
    %81 = vector.broadcast %cst_20 : f32 to vector<64x64xf32>
    %82 = arith.select %10, %80, %81 : vector<64x64xi1>, vector<64x64xf32>
    %cst_21 = arith.constant dense<0xFF800000> : vector<64xf32>
    %83 = vector.multi_reduction <maximumf>, %82, %cst_21 [1] : vector<64x64xf32> to vector<64xf32>
    %84 = vector.shape_cast %83 : vector<64xf32> to vector<64x1xf32>
    %85 = vector.broadcast %84 : vector<64x1xf32> to vector<64x64xf32>
    %86 = arith.subf %82, %85 : vector<64x64xf32>
    %87 = math.exp %86 : vector<64x64xf32>
    %cst_22 = arith.constant dense<0.000000e+00> : vector<64xf32>
    %88 = vector.multi_reduction <add>, %87, %cst_22 [1] : vector<64x64xf32> to vector<64xf32>
    %89 = vector.shape_cast %88 : vector<64xf32> to vector<64x1xf32>
    %90 = tpu.reciprocal %89 {approx = true} : vector<64x1xf32> -> vector<64x1xf32>
    %91 = vector.broadcast %90 : vector<64x1xf32> to vector<64x64xf32>
    %92 = arith.mulf %87, %91 : vector<64x64xf32>
    %93 = arith.truncf %92 : vector<64x64xf32> to vector<64x64xbf16>
    %cst_23 = arith.constant dense<0.000000e+00> : vector<64x64xf32>
    %94 = tpu.matmul %93, %79, %cst_23 {dimension_numbers = #tpu.dot_dimension_numbers<[1], [0], [0], [1], [0, 0, 1, 1], [], []>} : vector<64x64xbf16>, vector<64x64xbf16>, vector<64x64xf32> -> vector<64x64xf32>
    %95 = vector.extract_strided_slice %5 {offsets = [0, 256], sizes = [64, 64], strides = [1, 1]} : vector<64x384xf32> to vector<64x64xf32>
    %96 = arith.truncf %95 : vector<64x64xf32> to vector<64x64xbf16>
    %97 = vector.extract_strided_slice %6 {offsets = [0, 256], sizes = [64, 64], strides = [1, 1]} : vector<64x384xf32> to vector<64x64xf32>
    %98 = arith.truncf %97 : vector<64x64xf32> to vector<64x64xbf16>
    %99 = vector.extract_strided_slice %7 {offsets = [0, 256], sizes = [64, 64], strides = [1, 1]} : vector<64x384xf32> to vector<64x64xf32>
    %100 = arith.truncf %99 : vector<64x64xf32> to vector<64x64xbf16>
    "tpu.trace_start"() <{level = 10 : i32, message = "td,sd->ts"}> : () -> ()
    %cst_24 = arith.constant dense<0.000000e+00> : vector<64x64xf32>
    %101 = tpu.matmul %96, %98, %cst_24 {dimension_numbers = #tpu.dot_dimension_numbers<[1], [1], [0], [0], [0, 0, 1, 0], [], []>} : vector<64x64xbf16>, vector<64x64xbf16>, vector<64x64xf32> -> vector<64x64xf32>
    %cst_25 = arith.constant -1.000000e+30 : f32
    "tpu.trace_stop"() : () -> ()
    %102 = vector.broadcast %cst_25 : f32 to vector<64x64xf32>
    %103 = arith.select %10, %101, %102 : vector<64x64xi1>, vector<64x64xf32>
    %cst_26 = arith.constant dense<0xFF800000> : vector<64xf32>
    %104 = vector.multi_reduction <maximumf>, %103, %cst_26 [1] : vector<64x64xf32> to vector<64xf32>
    %105 = vector.shape_cast %104 : vector<64xf32> to vector<64x1xf32>
    %106 = vector.broadcast %105 : vector<64x1xf32> to vector<64x64xf32>
    %107 = arith.subf %103, %106 : vector<64x64xf32>
    %108 = math.exp %107 : vector<64x64xf32>
    %cst_27 = arith.constant dense<0.000000e+00> : vector<64xf32>
    %109 = vector.multi_reduction <add>, %108, %cst_27 [1] : vector<64x64xf32> to vector<64xf32>
    %110 = vector.shape_cast %109 : vector<64xf32> to vector<64x1xf32>
    %111 = tpu.reciprocal %110 {approx = true} : vector<64x1xf32> -> vector<64x1xf32>
    %112 = vector.broadcast %111 : vector<64x1xf32> to vector<64x64xf32>
    %113 = arith.mulf %108, %112 : vector<64x64xf32>
    %114 = arith.truncf %113 : vector<64x64xf32> to vector<64x64xbf16>
    %cst_28 = arith.constant dense<0.000000e+00> : vector<64x64xf32>
    %115 = tpu.matmul %114, %100, %cst_28 {dimension_numbers = #tpu.dot_dimension_numbers<[1], [0], [0], [1], [0, 0, 1, 1], [], []>} : vector<64x64xbf16>, vector<64x64xbf16>, vector<64x64xf32> -> vector<64x64xf32>
    %116 = vector.extract_strided_slice %5 {offsets = [0, 320], sizes = [64, 64], strides = [1, 1]} : vector<64x384xf32> to vector<64x64xf32>
    %117 = arith.truncf %116 : vector<64x64xf32> to vector<64x64xbf16>
    %118 = vector.extract_strided_slice %6 {offsets = [0, 320], sizes = [64, 64], strides = [1, 1]} : vector<64x384xf32> to vector<64x64xf32>
    %119 = arith.truncf %118 : vector<64x64xf32> to vector<64x64xbf16>
    %120 = vector.extract_strided_slice %7 {offsets = [0, 320], sizes = [64, 64], strides = [1, 1]} : vector<64x384xf32> to vector<64x64xf32>
    %121 = arith.truncf %120 : vector<64x64xf32> to vector<64x64xbf16>
    "tpu.trace_start"() <{level = 10 : i32, message = "td,sd->ts"}> : () -> ()
    %cst_29 = arith.constant dense<0.000000e+00> : vector<64x64xf32>
    %122 = tpu.matmul %117, %119, %cst_29 {dimension_numbers = #tpu.dot_dimension_numbers<[1], [1], [0], [0], [0, 0, 1, 0], [], []>} : vector<64x64xbf16>, vector<64x64xbf16>, vector<64x64xf32> -> vector<64x64xf32>
    %cst_30 = arith.constant -1.000000e+30 : f32
    "tpu.trace_stop"() : () -> ()
    %123 = vector.broadcast %cst_30 : f32 to vector<64x64xf32>
    %124 = arith.select %10, %122, %123 : vector<64x64xi1>, vector<64x64xf32>
    %cst_31 = arith.constant dense<0xFF800000> : vector<64xf32>
    %125 = vector.multi_reduction <maximumf>, %124, %cst_31 [1] : vector<64x64xf32> to vector<64xf32>
    %126 = vector.shape_cast %125 : vector<64xf32> to vector<64x1xf32>
    %127 = vector.broadcast %126 : vector<64x1xf32> to vector<64x64xf32>
    %128 = arith.subf %124, %127 : vector<64x64xf32>
    %129 = math.exp %128 : vector<64x64xf32>
    %cst_32 = arith.constant dense<0.000000e+00> : vector<64xf32>
    %130 = vector.multi_reduction <add>, %129, %cst_32 [1] : vector<64x64xf32> to vector<64xf32>
    %131 = vector.shape_cast %130 : vector<64xf32> to vector<64x1xf32>
    %132 = tpu.reciprocal %131 {approx = true} : vector<64x1xf32> -> vector<64x1xf32>
    %133 = vector.broadcast %132 : vector<64x1xf32> to vector<64x64xf32>
    %134 = arith.mulf %129, %133 : vector<64x64xf32>
    %135 = arith.truncf %134 : vector<64x64xf32> to vector<64x64xbf16>
    %cst_33 = arith.constant dense<0.000000e+00> : vector<64x64xf32>
    %136 = tpu.matmul %135, %121, %cst_33 {dimension_numbers = #tpu.dot_dimension_numbers<[1], [0], [0], [1], [0, 0, 1, 1], [], []>} : vector<64x64xbf16>, vector<64x64xbf16>, vector<64x64xf32> -> vector<64x64xf32>
    %137 = tpu.concatenate %31, %52, %73, %94, %115, %136 in 1 : vector<64x64xf32>, vector<64x64xf32>, vector<64x64xf32>, vector<64x64xf32>, vector<64x64xf32>, vector<64x64xf32> -> vector<64x384xf32>
    %138 = arith.truncf %137 : vector<64x384xf32> to vector<64x384xbf16>
    %c0_34 = arith.constant 0 : index
    %c0_35 = arith.constant 0 : index
    %139 = vector.load %arg3[%c0_34, %c0_35] : memref<384x384xbf16, #tpu.memory_space<vmem>>, vector<384x384xbf16>
    %cst_36 = arith.constant dense<0.000000e+00> : vector<64x384xf32>
    %140 = tpu.matmul %138, %139, %cst_36 {dimension_numbers = #tpu.dot_dimension_numbers<[1], [0], [0], [1], [0, 0, 1, 1], [], []>} : vector<64x384xbf16>, vector<384x384xbf16>, vector<64x384xf32> -> vector<64x384xf32>
    %c0_37 = arith.constant 0 : index
    %c0_38 = arith.constant 0 : index
    %141 = vector.load %arg4[%c0_37, %c0_38] : memref<1x384xf32, #tpu.memory_space<vmem>>, vector<1x384xf32>
    %142 = vector.broadcast %141 : vector<1x384xf32> to vector<64x384xf32>
    %143 = arith.addf %140, %142 : vector<64x384xf32>
    %144 = vector.shape_cast %143 : vector<64x384xf32> to vector<1x64x384xf32>
    %c0_39 = arith.constant 0 : index
    %c0_40 = arith.constant 0 : index
    %c0_41 = arith.constant 0 : index
    %145 = vector.load %arg5[%c0_39, %c0_40, %c0_41] : memref<1x64x384xf32, #tpu.memory_space<vmem>>, vector<1x64x384xf32>
    tpu.vector_store %arg5[%c0_39, %c0_40, %c0_41], %144 {strides = array<i32>} : memref<1x64x384xf32, #tpu.memory_space<vmem>>, vector<1x64x384xf32>,
    return
  }
  func.func @transform_0(%arg0: i32) -> (i32, i32, i32) {
    %c0_i32 = arith.constant 0 : i32
    %c0_i32_0 = arith.constant 0 : i32
    %c0_i32_1 = arith.constant 0 : i32
    return %arg0, %c0_i32, %c0_i32_0 : i32, i32, i32
  }
  func.func @transform_1(%arg0: i32) -> (i32, i32) {
    %c0_i32 = arith.constant 0 : i32
    %c0_i32_0 = arith.constant 0 : i32
    %c0_i32_1 = arith.constant 0 : i32
    return %c0_i32, %c0_i32_0 : i32, i32
  }
  func.func @transform_2(%arg0: i32) -> (i32, i32) {
    %c0_i32 = arith.constant 0 : i32
    %c0_i32_0 = arith.constant 0 : i32
    %c0_i32_1 = arith.constant 0 : i32
    return %c0_i32, %c0_i32_0 : i32, i32
  }
  func.func @transform_3(%arg0: i32) -> (i32, i32) {
    %c0_i32 = arith.constant 0 : i32
    %c0_i32_0 = arith.constant 0 : i32
    %c0_i32_1 = arith.constant 0 : i32
    return %c0_i32, %c0_i32_0 : i32, i32
  }
  func.func @transform_4(%arg0: i32) -> (i32, i32, i32) {
    %c0_i32 = arith.constant 0 : i32
    %c0_i32_0 = arith.constant 0 : i32
    %c0_i32_1 = arith.constant 0 : i32
    return %arg0, %c0_i32, %c0_i32_0 : i32, i32, i32
  }
}

</mosaic_0001>

<llo_original>
// kernel: multi_head_attention.1
$region0: #{multi_head_attention.1}
  #allocation0 [shape = 'u32[]', space=smem, size = 0x4, offset = 0x4, fixed_abs, tag = 'smem constant byte address 0x4 - core index']
  #allocation1 [shape = 'u32[144,128]{1,0:T(1,128)}', space=vmem, size = 0x12000, scoped, tag = 'internal scratch']
  %s0 = inlined_call_operand.vmem [shape: f32[2,64,384], index: 0, kind: input, shape index: {}]
  %s1 = inlined_call_operand.vmem [shape: bf16[384,1152], index: 1, kind: input, shape index: {}]
  %s2 = inlined_call_operand.vmem [shape: bf16[384,384], index: 2, kind: input, shape index: {}]
  %s3 = inlined_call_operand.vmem [shape: f32[1,384], index: 3, kind: input, shape index: {}]
  %s4 = inlined_call_operand.hbm [shape: f32[2,64,384], index: 4, kind: output, shape index: {}]
  %s5 = sld [smem:[#allocation0]]
  $region49: #{multi_head_attention.1} parent=0
    _
  %s7 = ssub.s32 1, %s5
  %s8 = scalar_select 0, %s7, %s5
  $region1: #{multi_head_attention.1} parent=0
    #allocation2 [shape = 'u8[196608]{0}', space=vmem, size = 0x30000, scoped, tag = 'output window, operand 0']
    #allocation3 [shape = 's32[2]{0}', space=sflag, size = 0x8, scoped, tag = 'scoped memory for multi_head_attention.1']
    %9 = vsyncpa [#allocation3], 0
    %s10 = scalar_lea.sflag [#allocation3], 1
    %11 = vsyncpa %s10, 0
    loop: start=0, step=1, limit=4
    $region2: #{multi_head_attention.1} parent=1 // loop_pre_header
      _
    $region3: #{multi_head_attention.1} parent=1 // loop_header
      %s13 = sphi 0, %s17
      %p14 = scmp.ge.s32.totalorder %s13, 4
      %s23 = sphi 0, %s25
      %s26 = sphi 0, %s23
      %s27 = sphi 0, %s26
      %s43 = sphi 0, %s27
      %s47 = sphi 0, %s47
      %s49 = sphi 0, %s47
      %s50 = sphi 0, %s49
      %s64 = sphi 0, %s50
      %s68 = sphi 0, %s68
      %s70 = sphi 0, %s68
      %s71 = sphi 0, %s70
      %s85 = sphi 0, %s71
      %s89 = sphi 0, %s89
      %s91 = sphi 0, %s89
      %s92 = sphi 0, %s91
      %s106 = sphi 0, %s92
      %s112 = sphi 0, %s114
      %s115 = sphi 0, %s112
      %s116 = sphi 0, %s115
      %s132 = sphi 0, %s116
    $region4: #{multi_head_attention.1} parent=1 // loop_header_branch
      %16 = sbr.rel (%p14) target = $region8
    $region5: #{multi_head_attention.1} parent=1 // loop_body
      %s18 = ssub.s32 %s13, 1
      %s19 = ssub.s32 %s13, 2
      %s20 = sadd.s32 %s13, 1
      %s21 = ssub.s32 %s13, %s20
      %p22 = scmp.eq.s32.totalorder %s21, 0
      %s24 = sadd.s32 %s23, 1
      %s25 = scalar_select %p22, %s23, %s24
      %p28 = pneg %p22
      %p29 = scmp.eq.s32.totalorder %s13, 1
      %p30 = por %p28, %p29
      %p31 = scmp.ne.s32.totalorder %s23, %s26
      %p32 = scmp.eq.s32.totalorder %s13, 0
      %p33 = por %p31, %p32
      %p34 = scmp.ne.s32.totalorder %s23, %s26
      %p35 = scmp.eq.s32.totalorder %s18, 1
      %p36 = por %p34, %p35
      %p37 = scmp.ne.s32.totalorder %s26, %s27
      %p38 = scmp.eq.s32.totalorder %s18, 0
      %p39 = por %p37, %p38
      %p40 = scmp.ne.s32.totalorder %s26, %s27
      %p41 = scmp.eq.s32.totalorder %s19, 1
      %p42 = por %p40, %p41
      %p44 = scmp.ne.s32.totalorder %s27, %s43
      %p45 = scmp.eq.s32.totalorder %s19, 0
      %p46 = por %p44, %p45
      %s48 = sadd.s32 %s47, 1
      %p51 = scmp.eq.s32.totalorder %s13, 1
      %p52 = scmp.ne.s32.totalorder %s47, %s49
      %p53 = scmp.eq.s32.totalorder %s13, 0
      %p54 = por %p52, %p53
      %p55 = scmp.ne.s32.totalorder %s47, %s49
      %p56 = scmp.eq.s32.totalorder %s18, 1
      %p57 = por %p55, %p56
      %p58 = scmp.ne.s32.totalorder %s49, %s50
      %p59 = scmp.eq.s32.totalorder %s18, 0
      %p60 = por %p58, %p59
      %p61 = scmp.ne.s32.totalorder %s49, %s50
      %p62 = scmp.eq.s32.totalorder %s19, 1
      %p63 = por %p61, %p62
      %p65 = scmp.ne.s32.totalorder %s50, %s64
      %p66 = scmp.eq.s32.totalorder %s19, 0
      %p67 = por %p65, %p66
      %s69 = sadd.s32 %s68, 1
      %p72 = scmp.eq.s32.totalorder %s13, 1
      %p73 = scmp.ne.s32.totalorder %s68, %s70
      %p74 = scmp.eq.s32.totalorder %s13, 0
      %p75 = por %p73, %p74
      %p76 = scmp.ne.s32.totalorder %s68, %s70
      %p77 = scmp.eq.s32.totalorder %s18, 1
      %p78 = por %p76, %p77
      %p79 = scmp.ne.s32.totalorder %s70, %s71
      %p80 = scmp.eq.s32.totalorder %s18, 0
      %p81 = por %p79, %p80
      %p82 = scmp.ne.s32.totalorder %s70, %s71
      %p83 = scmp.eq.s32.totalorder %s19, 1
      %p84 = por %p82, %p83
      %p86 = scmp.ne.s32.totalorder %s71, %s85
      %p87 = scmp.eq.s32.totalorder %s19, 0
      %p88 = por %p86, %p87
      %s90 = sadd.s32 %s89, 1
      %p93 = scmp.eq.s32.totalorder %s13, 1
      %p94 = scmp.ne.s32.totalorder %s89, %s91
      %p95 = scmp.eq.s32.totalorder %s13, 0
      %p96 = por %p94, %p95
      %p97 = scmp.ne.s32.totalorder %s89, %s91
      %p98 = scmp.eq.s32.totalorder %s18, 1
      %p99 = por %p97, %p98
      %p100 = scmp.ne.s32.totalorder %s91, %s92
      %p101 = scmp.eq.s32.totalorder %s18, 0
      %p102 = por %p100, %p101
      %p103 = scmp.ne.s32.totalorder %s91, %s92
      %p104 = scmp.eq.s32.totalorder %s19, 1
      %p105 = por %p103, %p104
      %p107 = scmp.ne.s32.totalorder %s92, %s106
      %p108 = scmp.eq.s32.totalorder %s19, 0
      %p109 = por %p107, %p108
      %s110 = ssub.s32 %s13, %s20
      %p111 = scmp.eq.s32.totalorder %s110, 0
      %s113 = sadd.s32 %s112, 1
      %s114 = scalar_select %p111, %s112, %s113
      %p117 = pneg %p111
      %p118 = scmp.eq.s32.totalorder %s13, 1
      %p119 = por %p117, %p118
      %p120 = scmp.ne.s32.totalorder %s112, %s115
      %p121 = scmp.eq.s32.totalorder %s13, 0
      %p122 = por %p120, %p121
      %p123 = scmp.ne.s32.totalorder %s112, %s115
      %p124 = scmp.eq.s32.totalorder %s18, 1
      %p125 = por %p123, %p124
      %p126 = scmp.ne.s32.totalorder %s115, %s116
      %p127 = scmp.eq.s32.totalorder %s18, 0
      %p128 = por %p126, %p127
      %p129 = scmp.ne.s32.totalorder %s115, %s116
      %p130 = scmp.eq.s32.totalorder %s19, 1
      %p131 = por %p129, %p130
      %p133 = scmp.ne.s32.totalorder %s116, %s132
      %p134 = scmp.eq.s32.totalorder %s19, 0
      %p135 = por %p133, %p134
      %p136 = scmp.le.s32.totalorder 1, %s13
      %p137 = scmp.lt.s32.totalorder %s13, 3
      %p138 = pnand %p136, %p137
      %p139 = pneg %p138
      // Predicated region
      $region9: #{multi_head_attention.1} parent=5 // pred_check
        _
      $region10: #{multi_head_attention.1} parent=5 // pred_check_branch
        %141 = sbr.rel (%p138) target = $region12
      $region11: #{multi_head_attention.1} parent=5 // pred_region
        %s142 = ssub.s32 %s13, 1
        // Predicated region
        $region13: #{multi_head_attention.1} parent=11 // pred_check
          %p143 = pneg %p60
        $region14: #{multi_head_attention.1} parent=11 // pred_check_branch
          %145 = sbr.rel (%p143) target = $region16
        $region15: #{multi_head_attention.1} parent=11 // pred_region
          _
        $region16: #{multi_head_attention.1} parent=11 // pred_fallthru
          _
        // Predicated region
        $region17: #{multi_head_attention.1} parent=11 // pred_check
          %p146 = pneg %p81
        $region18: #{multi_head_attention.1} parent=11 // pred_check_branch
          %148 = sbr.rel (%p146) target = $region20
        $region19: #{multi_head_attention.1} parent=11 // pred_region
          _
        $region20: #{multi_head_attention.1} parent=11 // pred_fallthru
          _
        // Predicated region
        $region21: #{multi_head_attention.1} parent=11 // pred_check
          %p149 = pneg %p102
        $region22: #{multi_head_attention.1} parent=11 // pred_check_branch
          %151 = sbr.rel (%p149) target = $region24
        $region23: #{multi_head_attention.1} parent=11 // pred_region
          _
        $region24: #{multi_head_attention.1} parent=11 // pred_fallthru
          _
      $region12: #{multi_head_attention.1} parent=5 // pred_fallthru
        _
      %p152 = scmp.lt.s32.totalorder %s13, 2
      // Predicated region
      $region25: #{multi_head_attention.1} parent=5 // pred_check
        %p153 = pneg %p152
      $region26: #{multi_head_attention.1} parent=5 // pred_check_branch
        %155 = sbr.rel (%p153) target = $region28
      $region27: #{multi_head_attention.1} parent=5 // pred_region
        // Predicated region
        $region29: #{multi_head_attention.1} parent=27 // pred_check
          %p156 = pneg %p33
        $region30: #{multi_head_attention.1} parent=27 // pred_check_branch
          %158 = sbr.rel (%p156) target = $region32
        $region31: #{multi_head_attention.1} parent=27 // pred_region
          %p159 = scmp.lt.s32.totalorder %s13, 1
          %s160 = scalar_select %p159, %s13, 1
          %s161 = smul.addr %s160, 24
          %s162 = smul.addr %s161, 8
          %s163 = scalar_lea.vmem %s0, %s162
        $region32: #{multi_head_attention.1} parent=27 // pred_fallthru
          _
      $region28: #{multi_head_attention.1} parent=5 // pred_fallthru
        _
      %p164 = scmp.le.s32.totalorder 1, %s13
      %p165 = scmp.lt.s32.totalorder %s13, 3
      %p166 = pnand %p164, %p165
      %p167 = pneg %p166
      // Predicated region
      $region33: #{multi_head_attention.1} parent=5 // pred_check
        _
      $region34: #{multi_head_attention.1} parent=5 // pred_check_branch
        %169 = sbr.rel (%p166) target = $region36
      $region35: #{multi_head_attention.1} parent=5 // pred_region
        %s170 = ssub.s32 %s13, 1
        %p171 = scmp.lt.s32.totalorder %s18, 1
        %s172 = scalar_select %p171, %s18, 1
        %s173 = smul.addr %s172, 24
        %s174 = smul.addr %s173, 8
        %s175 = scalar_lea.vmem %s0, %s174
        %p176 = pneg %p39
        %p177 = pneg %p36
        %p178 = pneg %p60
        %p179 = pneg %p57
        %p180 = pneg %p81
        %p181 = pneg %p78
        %p182 = pneg %p102
        %p183 = pneg %p99
        %p184 = pneg %p128
        %p185 = pneg %p125
        %s186 = sand.u32 %s115, 1
        %s187 = scalar_lea.sflag [#allocation3], %s186
        %s188 = sand.u32 %s115, 1
        %s189 = smul.addr %s188, 192
        %s190 = scalar_lea.vmem [#allocation2], %s189
        %p191 = scmp.lt.s32.totalorder %s18, 1
        %s192 = scalar_select %p191, %s18, 1
        %s193 = smul.addr %s192, 24
        %s194 = smul.addr %s193, 8
        %s195 = scalar_lea.vmem %s0, %s194
        %v197 = vld [vmem:[%s195] sm:$0xff]
        %v198 = vld [vmem:[%s195 + $0x8] sm:$0xff]
        %v199 = vld [vmem:[%s195 + $0x10] sm:$0xff]
        %v200 = vld [vmem:[%s195 + $0x18] sm:$0xff]
        %v201 = vld [vmem:[%s195 + $0x20] sm:$0xff]
        %v202 = vld [vmem:[%s195 + $0x28] sm:$0xff]
        %v203 = vld [vmem:[%s195 + $0x30] sm:$0xff]
        %v204 = vld [vmem:[%s195 + $0x38] sm:$0xff]
        %v205 = vld [vmem:[%s195 + $0x40] sm:$0xff]
        %v206 = vld [vmem:[%s195 + $0x48] sm:$0xff]
        %v207 = vld [vmem:[%s195 + $0x50] sm:$0xff]
        %v208 = vld [vmem:[%s195 + $0x58] sm:$0xff]
        %v209 = vld [vmem:[%s195 + $0x60] sm:$0xff]
        %v210 = vld [vmem:[%s195 + $0x68] sm:$0xff]
        %v211 = vld [vmem:[%s195 + $0x70] sm:$0xff]
        %v212 = vld [vmem:[%s195 + $0x78] sm:$0xff]
        %v213 = vld [vmem:[%s195 + $0x80] sm:$0xff]
        %v214 = vld [vmem:[%s195 + $0x88] sm:$0xff]
        %v215 = vld [vmem:[%s195 + $0x90] sm:$0xff]
        %v216 = vld [vmem:[%s195 + $0x98] sm:$0xff]
        %v217 = vld [vmem:[%s195 + $0xa0] sm:$0xff]
        %v218 = vld [vmem:[%s195 + $0xa8] sm:$0xff]
        %v219 = vld [vmem:[%s195 + $0xb0] sm:$0xff]
        %v220 = vld [vmem:[%s195 + $0xb8] sm:$0xff]
        %v221 = vpack.c.bf16 %v200, %v197
        %v222 = vpack.c.bf16 %v201, %v198
        %v223 = vpack.c.bf16 %v202, %v199
        %v224 = vpack.c.bf16 %v206, %v203
        %v225 = vpack.c.bf16 %v207, %v204
        %v226 = vpack.c.bf16 %v208, %v205
        %v227 = vpack.c.bf16 %v212, %v209
        %v228 = vpack.c.bf16 %v213, %v210
        %v229 = vpack.c.bf16 %v214, %v211
        %v230 = vpack.c.bf16 %v218, %v215
        %v231 = vpack.c.bf16 %v219, %v216
        %v232 = vpack.c.bf16 %v220, %v217
        %v233 = vld [vmem:[%s1] sm:$0xff]
        %v234 = vld [vmem:[%s1 + $0x8] sm:$0xff]
        %v235 = vld [vmem:[%s1 + $0x10] sm:$0xff]
        %v236 = vld [vmem:[%s1 + $0x18] sm:$0xff]
        %v237 = vld [vmem:[%s1 + $0x20] sm:$0xf]
        %v238 = vld [vmem:[%s1 + $0x24] sm:$0xff]
        %v239 = vld [vmem:[%s1 + $0x2c] sm:$0xff]
        %v240 = vld [vmem:[%s1 + $0x34] sm:$0xff]
        %v241 = vld [vmem:[%s1 + $0x3c] sm:$0xff]
        %v242 = vld [vmem:[%s1 + $0x44] sm:$0xf]
        %v243 = vld [vmem:[%s1 + $0x48] sm:$0xff]
        %v244 = vld [vmem:[%s1 + $0x50] sm:$0xff]
        %v245 = vld [vmem:[%s1 + $0x58] sm:$0xff]
        %v246 = vld [vmem:[%s1 + $0x60] sm:$0xff]
        %v247 = vld [vmem:[%s1 + $0x68] sm:$0xf]
        %v248 = vld [vmem:[%s1 + $0x6c] sm:$0xff]
        %v249 = vld [vmem:[%s1 + $0x74] sm:$0xff]
        %v250 = vld [vmem:[%s1 + $0x7c] sm:$0xff]
        %v251 = vld [vmem:[%s1 + $0x84] sm:$0xff]
        %v252 = vld [vmem:[%s1 + $0x8c] sm:$0xf]
        %v253 = vld [vmem:[%s1 + $0x90] sm:$0xff]
        %v254 = vld [vmem:[%s1 + $0x98] sm:$0xff]
        %v255 = vld [vmem:[%s1 + $0xa0] sm:$0xff]
        %v256 = vld [vmem:[%s1 + $0xa8] sm:$0xff]
        %v257 = vld [vmem:[%s1 + $0xb0] sm:$0xf]
        %v258 = vld [vmem:[%s1 + $0xb4] sm:$0xff]
        %v259 = vld [vmem:[%s1 + $0xbc] sm:$0xff]
        %v260 = vld [vmem:[%s1 + $0xc4] sm:$0xff]
        %v261 = vld [vmem:[%s1 + $0xcc] sm:$0xff]
        %v262 = vld [vmem:[%s1 + $0xd4] sm:$0xf]
        %v263 = vld [vmem:[%s1 + $0xd8] sm:$0xff]
        %v264 = vld [vmem:[%s1 + $0xe0] sm:$0xff]
        %v265 = vld [vmem:[%s1 + $0xe8] sm:$0xff]
        %v266 = vld [vmem:[%s1 + $0xf0] sm:$0xff]
        %v267 = vld [vmem:[%s1 + $0xf8] sm:$0xf]
        %v268 = vld [vmem:[%s1 + $0xfc] sm:$0xff]
        %v269 = vld [vmem:[%s1 + $0x104] sm:$0xff]
        %v270 = vld [vmem:[%s1 + $0x10c] sm:$0xff]
        %v271 = vld [vmem:[%s1 + $0x114] sm:$0xff]
        %v272 = vld [vmem:[%s1 + $0x11c] sm:$0xf]
        %v273 = vld [vmem:[%s1 + $0x120] sm:$0xff]
        %v274 = vld [vmem:[%s1 + $0x128] sm:$0xff]
        %v275 = vld [vmem:[%s1 + $0x130] sm:$0xff]
        %v276 = vld [vmem:[%s1 + $0x138] sm:$0xff]
        %v277 = vld [vmem:[%s1 + $0x140] sm:$0xf]
        %v278 = vld [vmem:[%s1 + $0x144] sm:$0xff]
        %v279 = vld [vmem:[%s1 + $0x14c] sm:$0xff]
        %v280 = vld [vmem:[%s1 + $0x154] sm:$0xff]
        %v281 = vld [vmem:[%s1 + $0x15c] sm:$0xff]
        %v282 = vld [vmem:[%s1 + $0x164] sm:$0xf]
        %v283 = vld [vmem:[%s1 + $0x168] sm:$0xff]
        %v284 = vld [vmem:[%s1 + $0x170] sm:$0xff]
        %v285 = vld [vmem:[%s1 + $0x178] sm:$0xff]
        %v286 = vld [vmem:[%s1 + $0x180] sm:$0xff]
        %v287 = vld [vmem:[%s1 + $0x188] sm:$0xf]
        %v288 = vld [vmem:[%s1 + $0x18c] sm:$0xff]
        %v289 = vld [vmem:[%s1 + $0x194] sm:$0xff]
        %v290 = vld [vmem:[%s1 + $0x19c] sm:$0xff]
        %v291 = vld [vmem:[%s1 + $0x1a4] sm:$0xff]
        %v292 = vld [vmem:[%s1 + $0x1ac] sm:$0xf]
        %v293 = vld [vmem:[%s1 + $0x1b0] sm:$0xff]
        %v294 = vld [vmem:[%s1 + $0x1b8] sm:$0xff]
        %v295 = vld [vmem:[%s1 + $0x1c0] sm:$0xff]
        %v296 = vld [vmem:[%s1 + $0x1c8] sm:$0xff]
        %v297 = vld [vmem:[%s1 + $0x1d0] sm:$0xf]
        %v298 = vld [vmem:[%s1 + $0x1d4] sm:$0xff]
        %v299 = vld [vmem:[%s1 + $0x1dc] sm:$0xff]
        %v300 = vld [vmem:[%s1 + $0x1e4] sm:$0xff]
        %v301 = vld [vmem:[%s1 + $0x1ec] sm:$0xff]
        %v302 = vld [vmem:[%s1 + $0x1f4] sm:$0xf]
        %v303 = vld [vmem:[%s1 + $0x1f8] sm:$0xff]
        %v304 = vld [vmem:[%s1 + $0x200] sm:$0xff]
        %v305 = vld [vmem:[%s1 + $0x208] sm:$0xff]
        %v306 = vld [vmem:[%s1 + $0x210] sm:$0xff]
        %v307 = vld [vmem:[%s1 + $0x218] sm:$0xf]
        %v308 = vld [vmem:[%s1 + $0x21c] sm:$0xff]
        %v309 = vld [vmem:[%s1 + $0x224] sm:$0xff]
        %v310 = vld [vmem:[%s1 + $0x22c] sm:$0xff]
        %v311 = vld [vmem:[%s1 + $0x234] sm:$0xff]
        %v312 = vld [vmem:[%s1 + $0x23c] sm:$0xf]
        %v313 = vld [vmem:[%s1 + $0x240] sm:$0xff]
        %v314 = vld [vmem:[%s1 + $0x248] sm:$0xff]
        %v315 = vld [vmem:[%s1 + $0x250] sm:$0xff]
        %v316 = vld [vmem:[%s1 + $0x258] sm:$0xff]
        %v317 = vld [vmem:[%s1 + $0x260] sm:$0xf]
        %v318 = vld [vmem:[%s1 + $0x264] sm:$0xff]
        %v319 = vld [vmem:[%s1 + $0x26c] sm:$0xff]
        %v320 = vld [vmem:[%s1 + $0x274] sm:$0xff]
        %v321 = vld [vmem:[%s1 + $0x27c] sm:$0xff]
        %v322 = vld [vmem:[%s1 + $0x284] sm:$0xf]
        %v323 = vld [vmem:[%s1 + $0x288] sm:$0xff]
        %v324 = vld [vmem:[%s1 + $0x290] sm:$0xff]
        %v325 = vld [vmem:[%s1 + $0x298] sm:$0xff]
        %v326 = vld [vmem:[%s1 + $0x2a0] sm:$0xff]
        %v327 = vld [vmem:[%s1 + $0x2a8] sm:$0xf]
        %v328 = vld [vmem:[%s1 + $0x2ac] sm:$0xff]
        %v329 = vld [vmem:[%s1 + $0x2b4] sm:$0xff]
        %v330 = vld [vmem:[%s1 + $0x2bc] sm:$0xff]
        %v331 = vld [vmem:[%s1 + $0x2c4] sm:$0xff]
        %v332 = vld [vmem:[%s1 + $0x2cc] sm:$0xf]
        %v333 = vld [vmem:[%s1 + $0x2d0] sm:$0xff]
        %v334 = vld [vmem:[%s1 + $0x2d8] sm:$0xff]
        %v335 = vld [vmem:[%s1 + $0x2e0] sm:$0xff]
        %v336 = vld [vmem:[%s1 + $0x2e8] sm:$0xff]
        %v337 = vld [vmem:[%s1 + $0x2f0] sm:$0xf]
        %v338 = vld [vmem:[%s1 + $0x2f4] sm:$0xff]
        %v339 = vld [vmem:[%s1 + $0x2fc] sm:$0xff]
        %v340 = vld [vmem:[%s1 + $0x304] sm:$0xff]
        %v341 = vld [vmem:[%s1 + $0x30c] sm:$0xff]
        %v342 = vld [vmem:[%s1 + $0x314] sm:$0xf]
        %v343 = vld [vmem:[%s1 + $0x318] sm:$0xff]
        %v344 = vld [vmem:[%s1 + $0x320] sm:$0xff]
        %v345 = vld [vmem:[%s1 + $0x328] sm:$0xff]
        %v346 = vld [vmem:[%s1 + $0x330] sm:$0xff]
        %v347 = vld [vmem:[%s1 + $0x338] sm:$0xf]
        %v348 = vld [vmem:[%s1 + $0x33c] sm:$0xff]
        %v349 = vld [vmem:[%s1 + $0x344] sm:$0xff]
        %v350 = vld [vmem:[%s1 + $0x34c] sm:$0xff]
        %v351 = vld [vmem:[%s1 + $0x354] sm:$0xff]
        %v352 = vld [vmem:[%s1 + $0x35c] sm:$0xf]
        %v353 = vld [vmem:[%s1 + $0x360] sm:$0xff]
        %v354 = vld [vmem:[%s1 + $0x368] sm:$0xff]
        %v355 = vld [vmem:[%s1 + $0x370] sm:$0xff]
        %v356 = vld [vmem:[%s1 + $0x378] sm:$0xff]
        %v357 = vld [vmem:[%s1 + $0x380] sm:$0xf]
        %v358 = vld [vmem:[%s1 + $0x384] sm:$0xff]
        %v359 = vld [vmem:[%s1 + $0x38c] sm:$0xff]
        %v360 = vld [vmem:[%s1 + $0x394] sm:$0xff]
        %v361 = vld [vmem:[%s1 + $0x39c] sm:$0xff]
        %v362 = vld [vmem:[%s1 + $0x3a4] sm:$0xf]
        %v363 = vld [vmem:[%s1 + $0x3a8] sm:$0xff]
        %v364 = vld [vmem:[%s1 + $0x3b0] sm:$0xff]
        %v365 = vld [vmem:[%s1 + $0x3b8] sm:$0xff]
        %v366 = vld [vmem:[%s1 + $0x3c0] sm:$0xff]
        %v367 = vld [vmem:[%s1 + $0x3c8] sm:$0xf]
        %v368 = vld [vmem:[%s1 + $0x3cc] sm:$0xff]
        %v369 = vld [vmem:[%s1 + $0x3d4] sm:$0xff]
        %v370 = vld [vmem:[%s1 + $0x3dc] sm:$0xff]
        %v371 = vld [vmem:[%s1 + $0x3e4] sm:$0xff]
        %v372 = vld [vmem:[%s1 + $0x3ec] sm:$0xf]
        %v373 = vld [vmem:[%s1 + $0x3f0] sm:$0xff]
        %v374 = vld [vmem:[%s1 + $0x3f8] sm:$0xff]
        %v375 = vld [vmem:[%s1 + $0x400] sm:$0xff]
        %v376 = vld [vmem:[%s1 + $0x408] sm:$0xff]
        %v377 = vld [vmem:[%s1 + $0x410] sm:$0xf]
        %v378 = vld [vmem:[%s1 + $0x414] sm:$0xff]
        %v379 = vld [vmem:[%s1 + $0x41c] sm:$0xff]
        %v380 = vld [vmem:[%s1 + $0x424] sm:$0xff]
        %v381 = vld [vmem:[%s1 + $0x42c] sm:$0xff]
        %v382 = vld [vmem:[%s1 + $0x434] sm:$0xf]
        %v383 = vld [vmem:[%s1 + $0x438] sm:$0xff]
        %v384 = vld [vmem:[%s1 + $0x440] sm:$0xff]
        %v385 = vld [vmem:[%s1 + $0x448] sm:$0xff]
        %v386 = vld [vmem:[%s1 + $0x450] sm:$0xff]
        %v387 = vld [vmem:[%s1 + $0x458] sm:$0xf]
        %v388 = vld [vmem:[%s1 + $0x45c] sm:$0xff]
        %v389 = vld [vmem:[%s1 + $0x464] sm:$0xff]
        %v390 = vld [vmem:[%s1 + $0x46c] sm:$0xff]
        %v391 = vld [vmem:[%s1 + $0x474] sm:$0xff]
        %v392 = vld [vmem:[%s1 + $0x47c] sm:$0xf]
        %v393 = vld [vmem:[%s1 + $0x480] sm:$0xff]
        %v394 = vld [vmem:[%s1 + $0x488] sm:$0xff]
        %v395 = vld [vmem:[%s1 + $0x490] sm:$0xff]
        %v396 = vld [vmem:[%s1 + $0x498] sm:$0xff]
        %v397 = vld [vmem:[%s1 + $0x4a0] sm:$0xf]
        %v398 = vld [vmem:[%s1 + $0x4a4] sm:$0xff]
        %v399 = vld [vmem:[%s1 + $0x4ac] sm:$0xff]
        %v400 = vld [vmem:[%s1 + $0x4b4] sm:$0xff]
        %v401 = vld [vmem:[%s1 + $0x4bc] sm:$0xff]
        %v402 = vld [vmem:[%s1 + $0x4c4] sm:$0xf]
        %v403 = vld [vmem:[%s1 + $0x4c8] sm:$0xff]
        %v404 = vld [vmem:[%s1 + $0x4d0] sm:$0xff]
        %v405 = vld [vmem:[%s1 + $0x4d8] sm:$0xff]
        %v406 = vld [vmem:[%s1 + $0x4e0] sm:$0xff]
        %v407 = vld [vmem:[%s1 + $0x4e8] sm:$0xf]
        %v408 = vld [vmem:[%s1 + $0x4ec] sm:$0xff]
        %v409 = vld [vmem:[%s1 + $0x4f4] sm:$0xff]
        %v410 = vld [vmem:[%s1 + $0x4fc] sm:$0xff]
        %v411 = vld [vmem:[%s1 + $0x504] sm:$0xff]
        %v412 = vld [vmem:[%s1 + $0x50c] sm:$0xf]
        %v413 = vld [vmem:[%s1 + $0x510] sm:$0xff]
        %v414 = vld [vmem:[%s1 + $0x518] sm:$0xff]
        %v415 = vld [vmem:[%s1 + $0x520] sm:$0xff]
        %v416 = vld [vmem:[%s1 + $0x528] sm:$0xff]
        %v417 = vld [vmem:[%s1 + $0x530] sm:$0xf]
        %v418 = vld [vmem:[%s1 + $0x534] sm:$0xff]
        %v419 = vld [vmem:[%s1 + $0x53c] sm:$0xff]
        %v420 = vld [vmem:[%s1 + $0x544] sm:$0xff]
        %v421 = vld [vmem:[%s1 + $0x54c] sm:$0xff]
        %v422 = vld [vmem:[%s1 + $0x554] sm:$0xf]
        %v423 = vld [vmem:[%s1 + $0x558] sm:$0xff]
        %v424 = vld [vmem:[%s1 + $0x560] sm:$0xff]
        %v425 = vld [vmem:[%s1 + $0x568] sm:$0xff]
        %v426 = vld [vmem:[%s1 + $0x570] sm:$0xff]
        %v427 = vld [vmem:[%s1 + $0x578] sm:$0xf]
        %v428 = vld [vmem:[%s1 + $0x57c] sm:$0xff]
        %v429 = vld [vmem:[%s1 + $0x584] sm:$0xff]
        %v430 = vld [vmem:[%s1 + $0x58c] sm:$0xff]
        %v431 = vld [vmem:[%s1 + $0x594] sm:$0xff]
        %v432 = vld [vmem:[%s1 + $0x59c] sm:$0xf]
        %v433 = vld [vmem:[%s1 + $0x5a0] sm:$0xff]
        %v434 = vld [vmem:[%s1 + $0x5a8] sm:$0xff]
        %v435 = vld [vmem:[%s1 + $0x5b0] sm:$0xff]
        %v436 = vld [vmem:[%s1 + $0x5b8] sm:$0xff]
        %v437 = vld [vmem:[%s1 + $0x5c0] sm:$0xf]
        %v438 = vld [vmem:[%s1 + $0x5c4] sm:$0xff]
        %v439 = vld [vmem:[%s1 + $0x5cc] sm:$0xff]
        %v440 = vld [vmem:[%s1 + $0x5d4] sm:$0xff]
        %v441 = vld [vmem:[%s1 + $0x5dc] sm:$0xff]
        %v442 = vld [vmem:[%s1 + $0x5e4] sm:$0xf]
        %v443 = vld [vmem:[%s1 + $0x5e8] sm:$0xff]
        %v444 = vld [vmem:[%s1 + $0x5f0] sm:$0xff]
        %v445 = vld [vmem:[%s1 + $0x5f8] sm:$0xff]
        %v446 = vld [vmem:[%s1 + $0x600] sm:$0xff]
        %v447 = vld [vmem:[%s1 + $0x608] sm:$0xf]
        %v448 = vld [vmem:[%s1 + $0x60c] sm:$0xff]
        %v449 = vld [vmem:[%s1 + $0x614] sm:$0xff]
        %v450 = vld [vmem:[%s1 + $0x61c] sm:$0xff]
        %v451 = vld [vmem:[%s1 + $0x624] sm:$0xff]
        %v452 = vld [vmem:[%s1 + $0x62c] sm:$0xf]
        %v453 = vld [vmem:[%s1 + $0x630] sm:$0xff]
        %v454 = vld [vmem:[%s1 + $0x638] sm:$0xff]
        %v455 = vld [vmem:[%s1 + $0x640] sm:$0xff]
        %v456 = vld [vmem:[%s1 + $0x648] sm:$0xff]
        %v457 = vld [vmem:[%s1 + $0x650] sm:$0xf]
        %v458 = vld [vmem:[%s1 + $0x654] sm:$0xff]
        %v459 = vld [vmem:[%s1 + $0x65c] sm:$0xff]
        %v460 = vld [vmem:[%s1 + $0x664] sm:$0xff]
        %v461 = vld [vmem:[%s1 + $0x66c] sm:$0xff]
        %v462 = vld [vmem:[%s1 + $0x674] sm:$0xf]
        %v463 = vld [vmem:[%s1 + $0x678] sm:$0xff]
        %v464 = vld [vmem:[%s1 + $0x680] sm:$0xff]
        %v465 = vld [vmem:[%s1 + $0x688] sm:$0xff]
        %v466 = vld [vmem:[%s1 + $0x690] sm:$0xff]
        %v467 = vld [vmem:[%s1 + $0x698] sm:$0xf]
        %v468 = vld [vmem:[%s1 + $0x69c] sm:$0xff]
        %v469 = vld [vmem:[%s1 + $0x6a4] sm:$0xff]
        %v470 = vld [vmem:[%s1 + $0x6ac] sm:$0xff]
        %v471 = vld [vmem:[%s1 + $0x6b4] sm:$0xff]
        %v472 = vld [vmem:[%s1 + $0x6bc] sm:$0xf]
        %v713 = vunpack.c.l.b16 %v233
        %v714 = vunpack.c.h.b16 %v233
        %v715 = vunpack.c.l.b16 %v234
        %v716 = vunpack.c.h.b16 %v234
        %v717 = vunpack.c.l.b16 %v235
        %v718 = vunpack.c.h.b16 %v235
        %v719 = vunpack.c.l.b16 %v236
        %v720 = vunpack.c.h.b16 %v236
        %v721 = vunpack.c.l.b16 %v237
        %v722 = vunpack.c.l.b16 %v238
        %v723 = vunpack.c.h.b16 %v238
        %v724 = vunpack.c.l.b16 %v239
        %v725 = vunpack.c.h.b16 %v239
        %v726 = vunpack.c.l.b16 %v240
        %v727 = vunpack.c.h.b16 %v240
        %v728 = vunpack.c.l.b16 %v241
        %v729 = vunpack.c.h.b16 %v241
        %v730 = vunpack.c.l.b16 %v242
        %v731 = vunpack.c.l.b16 %v243
        %v732 = vunpack.c.h.b16 %v243
        %v733 = vunpack.c.l.b16 %v244
        %v734 = vunpack.c.h.b16 %v244
        %v735 = vunpack.c.l.b16 %v245
        %v736 = vunpack.c.h.b16 %v245
        %v737 = vunpack.c.l.b16 %v246
        %v738 = vunpack.c.h.b16 %v246
        %v739 = vunpack.c.l.b16 %v247
        %v740 = vunpack.c.l.b16 %v248
        %v741 = vunpack.c.h.b16 %v248
        %v742 = vunpack.c.l.b16 %v249
        %v743 = vunpack.c.h.b16 %v249
        %v744 = vunpack.c.l.b16 %v250
        %v745 = vunpack.c.h.b16 %v250
        %v746 = vunpack.c.l.b16 %v251
        %v747 = vunpack.c.h.b16 %v251
        %v748 = vunpack.c.l.b16 %v252
        %v749 = vunpack.c.l.b16 %v253
        %v750 = vunpack.c.h.b16 %v253
        %v751 = vunpack.c.l.b16 %v254
        %v752 = vunpack.c.h.b16 %v254
        %v753 = vunpack.c.l.b16 %v255
        %v754 = vunpack.c.h.b16 %v255
        %v755 = vunpack.c.l.b16 %v256
        %v756 = vunpack.c.h.b16 %v256
        %v757 = vunpack.c.l.b16 %v257
        %v758 = vunpack.c.l.b16 %v258
        %v759 = vunpack.c.h.b16 %v258
        %v760 = vunpack.c.l.b16 %v259
        %v761 = vunpack.c.h.b16 %v259
        %v762 = vunpack.c.l.b16 %v260
        %v763 = vunpack.c.h.b16 %v260
        %v764 = vunpack.c.l.b16 %v261
        %v765 = vunpack.c.h.b16 %v261
        %v766 = vunpack.c.l.b16 %v262
        %v767 = vunpack.c.l.b16 %v263
        %v768 = vunpack.c.h.b16 %v263
        %v769 = vunpack.c.l.b16 %v264
        %v770 = vunpack.c.h.b16 %v264
        %v771 = vunpack.c.l.b16 %v265
        %v772 = vunpack.c.h.b16 %v265
        %v773 = vunpack.c.l.b16 %v266
        %v774 = vunpack.c.h.b16 %v266
        %v775 = vunpack.c.l.b16 %v267
        %v776 = vunpack.c.l.b16 %v268
        %v777 = vunpack.c.h.b16 %v268
        %v778 = vunpack.c.l.b16 %v269
        %v779 = vunpack.c.h.b16 %v269
        %v780 = vunpack.c.l.b16 %v270
        %v781 = vunpack.c.h.b16 %v270
        %v782 = vunpack.c.l.b16 %v271
        %v783 = vunpack.c.h.b16 %v271
        %v784 = vunpack.c.l.b16 %v272
        %v785 = vunpack.c.l.b16 %v273
        %v786 = vunpack.c.h.b16 %v273
        %v787 = vunpack.c.l.b16 %v274
        %v788 = vunpack.c.h.b16 %v274
        %v789 = vunpack.c.l.b16 %v275
        %v790 = vunpack.c.h.b16 %v275
        %v791 = vunpack.c.l.b16 %v276
        %v792 = vunpack.c.h.b16 %v276
        %v793 = vunpack.c.l.b16 %v277
        %v794 = vunpack.c.l.b16 %v278
        %v795 = vunpack.c.h.b16 %v278
        %v796 = vunpack.c.l.b16 %v279
        %v797 = vunpack.c.h.b16 %v279
        %v798 = vunpack.c.l.b16 %v280
        %v799 = vunpack.c.h.b16 %v280
        %v800 = vunpack.c.l.b16 %v281
        %v801 = vunpack.c.h.b16 %v281
        %v802 = vunpack.c.l.b16 %v282
        %v803 = vunpack.c.l.b16 %v283
        %v804 = vunpack.c.h.b16 %v283
        %v805 = vunpack.c.l.b16 %v284
        %v806 = vunpack.c.h.b16 %v284
        %v807 = vunpack.c.l.b16 %v285
        %v808 = vunpack.c.h.b16 %v285
        %v809 = vunpack.c.l.b16 %v286
        %v810 = vunpack.c.h.b16 %v286
        %v811 = vunpack.c.l.b16 %v287
        %v812 = vunpack.c.l.b16 %v288
        %v813 = vunpack.c.h.b16 %v288
        %v814 = vunpack.c.l.b16 %v289
        %v815 = vunpack.c.h.b16 %v289
        %v816 = vunpack.c.l.b16 %v290
        %v817 = vunpack.c.h.b16 %v290
        %v818 = vunpack.c.l.b16 %v291
        %v819 = vunpack.c.h.b16 %v291
        %v820 = vunpack.c.l.b16 %v292
        %v821 = vunpack.c.l.b16 %v293
        %v822 = vunpack.c.h.b16 %v293
        %v823 = vunpack.c.l.b16 %v294
        %v824 = vunpack.c.h.b16 %v294
        %v825 = vunpack.c.l.b16 %v295
        %v826 = vunpack.c.h.b16 %v295
        %v827 = vunpack.c.l.b16 %v296
        %v828 = vunpack.c.h.b16 %v296
        %v829 = vunpack.c.l.b16 %v297
        %v830 = vunpack.c.l.b16 %v298
        %v831 = vunpack.c.h.b16 %v298
        %v832 = vunpack.c.l.b16 %v299
        %v833 = vunpack.c.h.b16 %v299
        %v834 = vunpack.c.l.b16 %v300
        %v835 = vunpack.c.h.b16 %v300
        %v836 = vunpack.c.l.b16 %v301
        %v837 = vunpack.c.h.b16 %v301
        %v838 = vunpack.c.l.b16 %v302
        %v839 = vunpack.c.l.b16 %v303
        %v840 = vunpack.c.h.b16 %v303
        %v841 = vunpack.c.l.b16 %v304
        %v842 = vunpack.c.h.b16 %v304
        %v843 = vunpack.c.l.b16 %v305
        %v844 = vunpack.c.h.b16 %v305
        %v845 = vunpack.c.l.b16 %v306
        %v846 = vunpack.c.h.b16 %v306
        %v847 = vunpack.c.l.b16 %v307
        %v848 = vunpack.c.l.b16 %v308
        %v849 = vunpack.c.h.b16 %v308
        %v850 = vunpack.c.l.b16 %v309
        %v851 = vunpack.c.h.b16 %v309
        %v852 = vunpack.c.l.b16 %v310
        %v853 = vunpack.c.h.b16 %v310
        %v854 = vunpack.c.l.b16 %v311
        %v855 = vunpack.c.h.b16 %v311
        %v856 = vunpack.c.l.b16 %v312
        %v857 = vunpack.c.l.b16 %v313
        %v858 = vunpack.c.h.b16 %v313
        %v859 = vunpack.c.l.b16 %v314
        %v860 = vunpack.c.h.b16 %v314
        %v861 = vunpack.c.l.b16 %v315
        %v862 = vunpack.c.h.b16 %v315
        %v863 = vunpack.c.l.b16 %v316
        %v864 = vunpack.c.h.b16 %v316
        %v865 = vunpack.c.l.b16 %v317
        %v866 = vunpack.c.l.b16 %v318
        %v867 = vunpack.c.h.b16 %v318
        %v868 = vunpack.c.l.b16 %v319
        %v869 = vunpack.c.h.b16 %v319
        %v870 = vunpack.c.l.b16 %v320
        %v871 = vunpack.c.h.b16 %v320
        %v872 = vunpack.c.l.b16 %v321
        %v873 = vunpack.c.h.b16 %v321
        %v874 = vunpack.c.l.b16 %v322
        %v875 = vunpack.c.l.b16 %v323
        %v876 = vunpack.c.h.b16 %v323
        %v877 = vunpack.c.l.b16 %v324
        %v878 = vunpack.c.h.b16 %v324
        %v879 = vunpack.c.l.b16 %v325
        %v880 = vunpack.c.h.b16 %v325
        %v881 = vunpack.c.l.b16 %v326
        %v882 = vunpack.c.h.b16 %v326
        %v883 = vunpack.c.l.b16 %v327
        %v884 = vunpack.c.l.b16 %v328
        %v885 = vunpack.c.h.b16 %v328
        %v886 = vunpack.c.l.b16 %v329
        %v887 = vunpack.c.h.b16 %v329
        %v888 = vunpack.c.l.b16 %v330
        %v889 = vunpack.c.h.b16 %v330
        %v890 = vunpack.c.l.b16 %v331
        %v891 = vunpack.c.h.b16 %v331
        %v892 = vunpack.c.l.b16 %v332
        %v893 = vunpack.c.l.b16 %v333
        %v894 = vunpack.c.h.b16 %v333
        %v895 = vunpack.c.l.b16 %v334
        %v896 = vunpack.c.h.b16 %v334
        %v897 = vunpack.c.l.b16 %v335
        %v898 = vunpack.c.h.b16 %v335
        %v899 = vunpack.c.l.b16 %v336
        %v900 = vunpack.c.h.b16 %v336
        %v901 = vunpack.c.l.b16 %v337
        %v902 = vunpack.c.l.b16 %v338
        %v903 = vunpack.c.h.b16 %v338
        %v904 = vunpack.c.l.b16 %v339
        %v905 = vunpack.c.h.b16 %v339
        %v906 = vunpack.c.l.b16 %v340
        %v907 = vunpack.c.h.b16 %v340
        %v908 = vunpack.c.l.b16 %v341
        %v909 = vunpack.c.h.b16 %v341
        %v910 = vunpack.c.l.b16 %v342
        %v911 = vunpack.c.l.b16 %v343
        %v912 = vunpack.c.h.b16 %v343
        %v913 = vunpack.c.l.b16 %v344
        %v914 = vunpack.c.h.b16 %v344
        %v915 = vunpack.c.l.b16 %v345
        %v916 = vunpack.c.h.b16 %v345
        %v917 = vunpack.c.l.b16 %v346
        %v918 = vunpack.c.h.b16 %v346
        %v919 = vunpack.c.l.b16 %v347
        %v920 = vunpack.c.l.b16 %v348
        %v921 = vunpack.c.h.b16 %v348
        %v922 = vunpack.c.l.b16 %v349
        %v923 = vunpack.c.h.b16 %v349
        %v924 = vunpack.c.l.b16 %v350
        %v925 = vunpack.c.h.b16 %v350
        %v926 = vunpack.c.l.b16 %v351
        %v927 = vunpack.c.h.b16 %v351
        %v928 = vunpack.c.l.b16 %v352
        %v929 = vunpack.c.l.b16 %v353
        %v930 = vunpack.c.h.b16 %v353
        %v931 = vunpack.c.l.b16 %v354
        %v932 = vunpack.c.h.b16 %v354
        %v933 = vunpack.c.l.b16 %v355
        %v934 = vunpack.c.h.b16 %v355
        %v935 = vunpack.c.l.b16 %v356
        %v936 = vunpack.c.h.b16 %v356
        %v937 = vunpack.c.l.b16 %v357
        %v938 = vunpack.c.l.b16 %v358
        %v939 = vunpack.c.h.b16 %v358
        %v940 = vunpack.c.l.b16 %v359
        %v941 = vunpack.c.h.b16 %v359
        %v942 = vunpack.c.l.b16 %v360
        %v943 = vunpack.c.h.b16 %v360
        %v944 = vunpack.c.l.b16 %v361
        %v945 = vunpack.c.h.b16 %v361
        %v946 = vunpack.c.l.b16 %v362
        %v947 = vunpack.c.l.b16 %v363
        %v948 = vunpack.c.h.b16 %v363
        %v949 = vunpack.c.l.b16 %v364
        %v950 = vunpack.c.h.b16 %v364
        %v951 = vunpack.c.l.b16 %v365
        %v952 = vunpack.c.h.b16 %v365
        %v953 = vunpack.c.l.b16 %v366
        %v954 = vunpack.c.h.b16 %v366
        %v955 = vunpack.c.l.b16 %v367
        %v956 = vunpack.c.l.b16 %v368
        %v957 = vunpack.c.h.b16 %v368
        %v958 = vunpack.c.l.b16 %v369
        %v959 = vunpack.c.h.b16 %v369
        %v960 = vunpack.c.l.b16 %v370
        %v961 = vunpack.c.h.b16 %v370
        %v962 = vunpack.c.l.b16 %v371
        %v963 = vunpack.c.h.b16 %v371
        %v964 = vunpack.c.l.b16 %v372
        %v965 = vunpack.c.l.b16 %v373
        %v966 = vunpack.c.h.b16 %v373
        %v967 = vunpack.c.l.b16 %v374
        %v968 = vunpack.c.h.b16 %v374
        %v969 = vunpack.c.l.b16 %v375
        %v970 = vunpack.c.h.b16 %v375
        %v971 = vunpack.c.l.b16 %v376
        %v972 = vunpack.c.h.b16 %v376
        %v973 = vunpack.c.l.b16 %v377
        %v974 = vunpack.c.l.b16 %v378
        %v975 = vunpack.c.h.b16 %v378
        %v976 = vunpack.c.l.b16 %v379
        %v977 = vunpack.c.h.b16 %v379
        %v978 = vunpack.c.l.b16 %v380
        %v979 = vunpack.c.h.b16 %v380
        %v980 = vunpack.c.l.b16 %v381
        %v981 = vunpack.c.h.b16 %v381
        %v982 = vunpack.c.l.b16 %v382
        %v983 = vunpack.c.l.b16 %v383
        %v984 = vunpack.c.h.b16 %v383
        %v985 = vunpack.c.l.b16 %v384
        %v986 = vunpack.c.h.b16 %v384
        %v987 = vunpack.c.l.b16 %v385
        %v988 = vunpack.c.h.b16 %v385
        %v989 = vunpack.c.l.b16 %v386
        %v990 = vunpack.c.h.b16 %v386
        %v991 = vunpack.c.l.b16 %v387
        %v992 = vunpack.c.l.b16 %v388
        %v993 = vunpack.c.h.b16 %v388
        %v994 = vunpack.c.l.b16 %v389
        %v995 = vunpack.c.h.b16 %v389
        %v996 = vunpack.c.l.b16 %v390
        %v997 = vunpack.c.h.b16 %v390
        %v998 = vunpack.c.l.b16 %v391
        %v999 = vunpack.c.h.b16 %v391
        %v1000 = vunpack.c.l.b16 %v392
        %v1001 = vunpack.c.l.b16 %v393
        %v1002 = vunpack.c.h.b16 %v393
        %v1003 = vunpack.c.l.b16 %v394
        %v1004 = vunpack.c.h.b16 %v394
        %v1005 = vunpack.c.l.b16 %v395
        %v1006 = vunpack.c.h.b16 %v395
        %v1007 = vunpack.c.l.b16 %v396
        %v1008 = vunpack.c.h.b16 %v396
        %v1009 = vunpack.c.l.b16 %v397
        %v1010 = vunpack.c.l.b16 %v398
        %v1011 = vunpack.c.h.b16 %v398
        %v1012 = vunpack.c.l.b16 %v399
        %v1013 = vunpack.c.h.b16 %v399
        %v1014 = vunpack.c.l.b16 %v400
        %v1015 = vunpack.c.h.b16 %v400
        %v1016 = vunpack.c.l.b16 %v401
        %v1017 = vunpack.c.h.b16 %v401
        %v1018 = vunpack.c.l.b16 %v402
        %v1019 = vunpack.c.l.b16 %v403
        %v1020 = vunpack.c.h.b16 %v403
        %v1021 = vunpack.c.l.b16 %v404
        %v1022 = vunpack.c.h.b16 %v404
        %v1023 = vunpack.c.l.b16 %v405
        %v1024 = vunpack.c.h.b16 %v405
        %v1025 = vunpack.c.l.b16 %v406
        %v1026 = vunpack.c.h.b16 %v406
        %v1027 = vunpack.c.l.b16 %v407
        %v1028 = vunpack.c.l.b16 %v408
        %v1029 = vunpack.c.h.b16 %v408
        %v1030 = vunpack.c.l.b16 %v409
        %v1031 = vunpack.c.h.b16 %v409
        %v1032 = vunpack.c.l.b16 %v410
        %v1033 = vunpack.c.h.b16 %v410
        %v1034 = vunpack.c.l.b16 %v411
        %v1035 = vunpack.c.h.b16 %v411
        %v1036 = vunpack.c.l.b16 %v412
        %v1037 = vunpack.c.l.b16 %v413
        %v1038 = vunpack.c.h.b16 %v413
        %v1039 = vunpack.c.l.b16 %v414
        %v1040 = vunpack.c.h.b16 %v414
        %v1041 = vunpack.c.l.b16 %v415
        %v1042 = vunpack.c.h.b16 %v415
        %v1043 = vunpack.c.l.b16 %v416
        %v1044 = vunpack.c.h.b16 %v416
        %v1045 = vunpack.c.l.b16 %v417
        %v1046 = vunpack.c.l.b16 %v418
        %v1047 = vunpack.c.h.b16 %v418
        %v1048 = vunpack.c.l.b16 %v419
        %v1049 = vunpack.c.h.b16 %v419
        %v1050 = vunpack.c.l.b16 %v420
        %v1051 = vunpack.c.h.b16 %v420
        %v1052 = vunpack.c.l.b16 %v421
        %v1053 = vunpack.c.h.b16 %v421
        %v1054 = vunpack.c.l.b16 %v422
        %v1055 = vunpack.c.l.b16 %v423
        %v1056 = vunpack.c.h.b16 %v423
        %v1057 = vunpack.c.l.b16 %v424
        %v1058 = vunpack.c.h.b16 %v424
        %v1059 = vunpack.c.l.b16 %v425
        %v1060 = vunpack.c.h.b16 %v425
        %v1061 = vunpack.c.l.b16 %v426
        %v1062 = vunpack.c.h.b16 %v426
        %v1063 = vunpack.c.l.b16 %v427
        %v1064 = vunpack.c.l.b16 %v428
        %v1065 = vunpack.c.h.b16 %v428
        %v1066 = vunpack.c.l.b16 %v429
        %v1067 = vunpack.c.h.b16 %v429
        %v1068 = vunpack.c.l.b16 %v430
        %v1069 = vunpack.c.h.b16 %v430
        %v1070 = vunpack.c.l.b16 %v431
        %v1071 = vunpack.c.h.b16 %v431
        %v1072 = vunpack.c.l.b16 %v432
        %v1073 = vunpack.c.l.b16 %v433
        %v1074 = vunpack.c.h.b16 %v433
        %v1075 = vunpack.c.l.b16 %v434
        %v1076 = vunpack.c.h.b16 %v434
        %v1077 = vunpack.c.l.b16 %v435
        %v1078 = vunpack.c.h.b16 %v435
        %v1079 = vunpack.c.l.b16 %v436
        %v1080 = vunpack.c.h.b16 %v436
        %v1081 = vunpack.c.l.b16 %v437
        %v1082 = vunpack.c.l.b16 %v438
        %v1083 = vunpack.c.h.b16 %v438
        %v1084 = vunpack.c.l.b16 %v439
        %v1085 = vunpack.c.h.b16 %v439
        %v1086 = vunpack.c.l.b16 %v440
        %v1087 = vunpack.c.h.b16 %v440
        %v1088 = vunpack.c.l.b16 %v441
        %v1089 = vunpack.c.h.b16 %v441
        %v1090 = vunpack.c.l.b16 %v442
        %v1091 = vunpack.c.l.b16 %v443
        %v1092 = vunpack.c.h.b16 %v443
        %v1093 = vunpack.c.l.b16 %v444
        %v1094 = vunpack.c.h.b16 %v444
        %v1095 = vunpack.c.l.b16 %v445
        %v1096 = vunpack.c.h.b16 %v445
        %v1097 = vunpack.c.l.b16 %v446
        %v1098 = vunpack.c.h.b16 %v446
        %v1099 = vunpack.c.l.b16 %v447
        %v1100 = vunpack.c.l.b16 %v448
        %v1101 = vunpack.c.h.b16 %v448
        %v1102 = vunpack.c.l.b16 %v449
        %v1103 = vunpack.c.h.b16 %v449
        %v1104 = vunpack.c.l.b16 %v450
        %v1105 = vunpack.c.h.b16 %v450
        %v1106 = vunpack.c.l.b16 %v451
        %v1107 = vunpack.c.h.b16 %v451
        %v1108 = vunpack.c.l.b16 %v452
        %v1109 = vunpack.c.l.b16 %v453
        %v1110 = vunpack.c.h.b16 %v453
        %v1111 = vunpack.c.l.b16 %v454
        %v1112 = vunpack.c.h.b16 %v454
        %v1113 = vunpack.c.l.b16 %v455
        %v1114 = vunpack.c.h.b16 %v455
        %v1115 = vunpack.c.l.b16 %v456
        %v1116 = vunpack.c.h.b16 %v456
        %v1117 = vunpack.c.l.b16 %v457
        %v1118 = vunpack.c.l.b16 %v458
        %v1119 = vunpack.c.h.b16 %v458
        %v1120 = vunpack.c.l.b16 %v459
        %v1121 = vunpack.c.h.b16 %v459
        %v1122 = vunpack.c.l.b16 %v460
        %v1123 = vunpack.c.h.b16 %v460
        %v1124 = vunpack.c.l.b16 %v461
        %v1125 = vunpack.c.h.b16 %v461
        %v1126 = vunpack.c.l.b16 %v462
        %v1127 = vunpack.c.l.b16 %v463
        %v1128 = vunpack.c.h.b16 %v463
        %v1129 = vunpack.c.l.b16 %v464
        %v1130 = vunpack.c.h.b16 %v464
        %v1131 = vunpack.c.l.b16 %v465
        %v1132 = vunpack.c.h.b16 %v465
        %v1133 = vunpack.c.l.b16 %v466
        %v1134 = vunpack.c.h.b16 %v466
        %v1135 = vunpack.c.l.b16 %v467
        %v1136 = vunpack.c.l.b16 %v468
        %v1137 = vunpack.c.h.b16 %v468
        %v1138 = vunpack.c.l.b16 %v469
        %v1139 = vunpack.c.h.b16 %v469
        %v1140 = vunpack.c.l.b16 %v470
        %v1141 = vunpack.c.h.b16 %v470
        %v1142 = vunpack.c.l.b16 %v471
        %v1143 = vunpack.c.h.b16 %v471
        %v1144 = vunpack.c.l.b16 %v472
        %v1145 = vpack.c.b16 %v722, %v713
        %v1146 = vpack.c.b16 %v723, %v714
        %v1147 = vpack.c.b16 %v724, %v715
        %v1148 = vpack.c.b16 %v725, %v716
        %v1149 = vpack.c.b16 %v726, %v717
        %v1150 = vpack.c.b16 %v727, %v718
        %v1151 = vpack.c.b16 %v728, %v719
        %v1152 = vpack.c.b16 %v729, %v720
        %v1153 = vpack.c.b16 %v730, %v721
        %v1154 = vpack.c.b16 %v740, %v731
        %v1155 = vpack.c.b16 %v741, %v732
        %v1156 = vpack.c.b16 %v742, %v733
        %v1157 = vpack.c.b16 %v743, %v734
        %v1158 = vpack.c.b16 %v744, %v735
        %v1159 = vpack.c.b16 %v745, %v736
        %v1160 = vpack.c.b16 %v746, %v737
        %v1161 = vpack.c.b16 %v747, %v738
        %v1162 = vpack.c.b16 %v748, %v739
        %v1163 = vpack.c.b16 %v758, %v749
        %v1164 = vpack.c.b16 %v759, %v750
        %v1165 = vpack.c.b16 %v760, %v751
        %v1166 = vpack.c.b16 %v761, %v752
        %v1167 = vpack.c.b16 %v762, %v753
        %v1168 = vpack.c.b16 %v763, %v754
        %v1169 = vpack.c.b16 %v764, %v755
        %v1170 = vpack.c.b16 %v765, %v756
        %v1171 = vpack.c.b16 %v766, %v757
        %v1172 = vpack.c.b16 %v776, %v767
        %v1173 = vpack.c.b16 %v777, %v768
        %v1174 = vpack.c.b16 %v778, %v769
        %v1175 = vpack.c.b16 %v779, %v770
        %v1176 = vpack.c.b16 %v780, %v771
        %v1177 = vpack.c.b16 %v781, %v772
        %v1178 = vpack.c.b16 %v782, %v773
        %v1179 = vpack.c.b16 %v783, %v774
        %v1180 = vpack.c.b16 %v784, %v775
        %v1181 = vpack.c.b16 %v794, %v785
        %v1182 = vpack.c.b16 %v795, %v786
        %v1183 = vpack.c.b16 %v796, %v787
        %v1184 = vpack.c.b16 %v797, %v788
        %v1185 = vpack.c.b16 %v798, %v789
        %v1186 = vpack.c.b16 %v799, %v790
        %v1187 = vpack.c.b16 %v800, %v791
        %v1188 = vpack.c.b16 %v801, %v792
        %v1189 = vpack.c.b16 %v802, %v793
        %v1190 = vpack.c.b16 %v812, %v803
        %v1191 = vpack.c.b16 %v813, %v804
        %v1192 = vpack.c.b16 %v814, %v805
        %v1193 = vpack.c.b16 %v815, %v806
        %v1194 = vpack.c.b16 %v816, %v807
        %v1195 = vpack.c.b16 %v817, %v808
        %v1196 = vpack.c.b16 %v818, %v809
        %v1197 = vpack.c.b16 %v819, %v810
        %v1198 = vpack.c.b16 %v820, %v811
        %v1199 = vpack.c.b16 %v830, %v821
        %v1200 = vpack.c.b16 %v831, %v822
        %v1201 = vpack.c.b16 %v832, %v823
        %v1202 = vpack.c.b16 %v833, %v824
        %v1203 = vpack.c.b16 %v834, %v825
        %v1204 = vpack.c.b16 %v835, %v826
        %v1205 = vpack.c.b16 %v836, %v827
        %v1206 = vpack.c.b16 %v837, %v828
        %v1207 = vpack.c.b16 %v838, %v829
        %v1208 = vpack.c.b16 %v848, %v839
        %v1209 = vpack.c.b16 %v849, %v840
        %v1210 = vpack.c.b16 %v850, %v841
        %v1211 = vpack.c.b16 %v851, %v842
        %v1212 = vpack.c.b16 %v852, %v843
        %v1213 = vpack.c.b16 %v853, %v844
        %v1214 = vpack.c.b16 %v854, %v845
        %v1215 = vpack.c.b16 %v855, %v846
        %v1216 = vpack.c.b16 %v856, %v847
        %v1217 = vpack.c.b16 %v866, %v857
        %v1218 = vpack.c.b16 %v867, %v858
        %v1219 = vpack.c.b16 %v868, %v859
        %v1220 = vpack.c.b16 %v869, %v860
        %v1221 = vpack.c.b16 %v870, %v861
        %v1222 = vpack.c.b16 %v871, %v862
        %v1223 = vpack.c.b16 %v872, %v863
        %v1224 = vpack.c.b16 %v873, %v864
        %v1225 = vpack.c.b16 %v874, %v865
        %v1226 = vpack.c.b16 %v884, %v875
        %v1227 = vpack.c.b16 %v885, %v876
        %v1228 = vpack.c.b16 %v886, %v877
        %v1229 = vpack.c.b16 %v887, %v878
        %v1230 = vpack.c.b16 %v888, %v879
        %v1231 = vpack.c.b16 %v889, %v880
        %v1232 = vpack.c.b16 %v890, %v881
        %v1233 = vpack.c.b16 %v891, %v882
        %v1234 = vpack.c.b16 %v892, %v883
        %v1235 = vpack.c.b16 %v902, %v893
        %v1236 = vpack.c.b16 %v903, %v894
        %v1237 = vpack.c.b16 %v904, %v895
        %v1238 = vpack.c.b16 %v905, %v896
        %v1239 = vpack.c.b16 %v906, %v897
        %v1240 = vpack.c.b16 %v907, %v898
        %v1241 = vpack.c.b16 %v908, %v899
        %v1242 = vpack.c.b16 %v909, %v900
        %v1243 = vpack.c.b16 %v910, %v901
        %v1244 = vpack.c.b16 %v920, %v911
        %v1245 = vpack.c.b16 %v921, %v912
        %v1246 = vpack.c.b16 %v922, %v913
        %v1247 = vpack.c.b16 %v923, %v914
        %v1248 = vpack.c.b16 %v924, %v915
        %v1249 = vpack.c.b16 %v925, %v916
        %v1250 = vpack.c.b16 %v926, %v917
        %v1251 = vpack.c.b16 %v927, %v918
        %v1252 = vpack.c.b16 %v928, %v919
        %v1253 = vpack.c.b16 %v938, %v929
        %v1254 = vpack.c.b16 %v939, %v930
        %v1255 = vpack.c.b16 %v940, %v931
        %v1256 = vpack.c.b16 %v941, %v932
        %v1257 = vpack.c.b16 %v942, %v933
        %v1258 = vpack.c.b16 %v943, %v934
        %v1259 = vpack.c.b16 %v944, %v935
        %v1260 = vpack.c.b16 %v945, %v936
        %v1261 = vpack.c.b16 %v946, %v937
        %v1262 = vpack.c.b16 %v956, %v947
        %v1263 = vpack.c.b16 %v957, %v948
        %v1264 = vpack.c.b16 %v958, %v949
        %v1265 = vpack.c.b16 %v959, %v950
        %v1266 = vpack.c.b16 %v960, %v951
        %v1267 = vpack.c.b16 %v961, %v952
        %v1268 = vpack.c.b16 %v962, %v953
        %v1269 = vpack.c.b16 %v963, %v954
        %v1270 = vpack.c.b16 %v964, %v955
        %v1271 = vpack.c.b16 %v974, %v965
        %v1272 = vpack.c.b16 %v975, %v966
        %v1273 = vpack.c.b16 %v976, %v967
        %v1274 = vpack.c.b16 %v977, %v968
        %v1275 = vpack.c.b16 %v978, %v969
        %v1276 = vpack.c.b16 %v979, %v970
        %v1277 = vpack.c.b16 %v980, %v971
        %v1278 = vpack.c.b16 %v981, %v972
        %v1279 = vpack.c.b16 %v982, %v973
        %v1280 = vpack.c.b16 %v992, %v983
        %v1281 = vpack.c.b16 %v993, %v984
        %v1282 = vpack.c.b16 %v994, %v985
        %v1283 = vpack.c.b16 %v995, %v986
        %v1284 = vpack.c.b16 %v996, %v987
        %v1285 = vpack.c.b16 %v997, %v988
        %v1286 = vpack.c.b16 %v998, %v989
        %v1287 = vpack.c.b16 %v999, %v990
        %v1288 = vpack.c.b16 %v1000, %v991
        %v1289 = vpack.c.b16 %v1010, %v1001
        %v1290 = vpack.c.b16 %v1011, %v1002
        %v1291 = vpack.c.b16 %v1012, %v1003
        %v1292 = vpack.c.b16 %v1013, %v1004
        %v1293 = vpack.c.b16 %v1014, %v1005
        %v1294 = vpack.c.b16 %v1015, %v1006
        %v1295 = vpack.c.b16 %v1016, %v1007
        %v1296 = vpack.c.b16 %v1017, %v1008
        %v1297 = vpack.c.b16 %v1018, %v1009
        %v1298 = vpack.c.b16 %v1028, %v1019
        %v1299 = vpack.c.b16 %v1029, %v1020
        %v1300 = vpack.c.b16 %v1030, %v1021
        %v1301 = vpack.c.b16 %v1031, %v1022
        %v1302 = vpack.c.b16 %v1032, %v1023
        %v1303 = vpack.c.b16 %v1033, %v1024
        %v1304 = vpack.c.b16 %v1034, %v1025
        %v1305 = vpack.c.b16 %v1035, %v1026
        %v1306 = vpack.c.b16 %v1036, %v1027
        %v1307 = vpack.c.b16 %v1046, %v1037
        %v1308 = vpack.c.b16 %v1047, %v1038
        %v1309 = vpack.c.b16 %v1048, %v1039
        %v1310 = vpack.c.b16 %v1049, %v1040
        %v1311 = vpack.c.b16 %v1050, %v1041
        %v1312 = vpack.c.b16 %v1051, %v1042
        %v1313 = vpack.c.b16 %v1052, %v1043
        %v1314 = vpack.c.b16 %v1053, %v1044
        %v1315 = vpack.c.b16 %v1054, %v1045
        %v1316 = vpack.c.b16 %v1064, %v1055
        %v1317 = vpack.c.b16 %v1065, %v1056
        %v1318 = vpack.c.b16 %v1066, %v1057
        %v1319 = vpack.c.b16 %v1067, %v1058
        %v1320 = vpack.c.b16 %v1068, %v1059
        %v1321 = vpack.c.b16 %v1069, %v1060
        %v1322 = vpack.c.b16 %v1070, %v1061
        %v1323 = vpack.c.b16 %v1071, %v1062
        %v1324 = vpack.c.b16 %v1072, %v1063
        %v1325 = vpack.c.b16 %v1082, %v1073
        %v1326 = vpack.c.b16 %v1083, %v1074
        %v1327 = vpack.c.b16 %v1084, %v1075
        %v1328 = vpack.c.b16 %v1085, %v1076
        %v1329 = vpack.c.b16 %v1086, %v1077
        %v1330 = vpack.c.b16 %v1087, %v1078
        %v1331 = vpack.c.b16 %v1088, %v1079
        %v1332 = vpack.c.b16 %v1089, %v1080
        %v1333 = vpack.c.b16 %v1090, %v1081
        %v1334 = vpack.c.b16 %v1100, %v1091
        %v1335 = vpack.c.b16 %v1101, %v1092
        %v1336 = vpack.c.b16 %v1102, %v1093
        %v1337 = vpack.c.b16 %v1103, %v1094
        %v1338 = vpack.c.b16 %v1104, %v1095
        %v1339 = vpack.c.b16 %v1105, %v1096
        %v1340 = vpack.c.b16 %v1106, %v1097
        %v1341 = vpack.c.b16 %v1107, %v1098
        %v1342 = vpack.c.b16 %v1108, %v1099
        %v1343 = vpack.c.b16 %v1118, %v1109
        %v1344 = vpack.c.b16 %v1119, %v1110
        %v1345 = vpack.c.b16 %v1120, %v1111
        %v1346 = vpack.c.b16 %v1121, %v1112
        %v1347 = vpack.c.b16 %v1122, %v1113
        %v1348 = vpack.c.b16 %v1123, %v1114
        %v1349 = vpack.c.b16 %v1124, %v1115
        %v1350 = vpack.c.b16 %v1125, %v1116
        %v1351 = vpack.c.b16 %v1126, %v1117
        %v1352 = vpack.c.b16 %v1136, %v1127
        %v1353 = vpack.c.b16 %v1137, %v1128
        %v1354 = vpack.c.b16 %v1138, %v1129
        %v1355 = vpack.c.b16 %v1139, %v1130
        %v1356 = vpack.c.b16 %v1140, %v1131
        %v1357 = vpack.c.b16 %v1141, %v1132
        %v1358 = vpack.c.b16 %v1142, %v1133
        %v1359 = vpack.c.b16 %v1143, %v1134
        %v1360 = vpack.c.b16 %v1144, %v1135
        %1577 = vmatprep.subr.bf16.mxu0 %v1209
        %1578 = vmatpush1.bf16.msra.mxu0 %v1208
        %1579 = vmatprep.subr.bf16.mxu0 %v1200
        %1580 = vmatpush1.bf16.msra.mxu0 %v1199
        %1581 = vmatprep.subr.bf16.mxu0 %v1191
        %1582 = vmatpush1.bf16.msra.mxu0 %v1190
        %1583 = vmatprep.subr.bf16.mxu0 %v1182
        %1584 = vmatpush1.bf16.msra.mxu0 %v1181
        %1585 = vmatprep.subr.bf16.mxu0 %v1173
        %1586 = vmatpush1.bf16.msra.mxu0 %v1172
        %1587 = vmatprep.subr.bf16.mxu0 %v1164
        %1588 = vmatpush1.bf16.msra.mxu0 %v1163
        %1589 = vmatprep.subr.bf16.mxu0 %v1155
        %1590 = vmatpush1.bf16.msra.mxu0 %v1154
        %1591 = vmatprep.subr.bf16.mxu0 %v1146
        %1592 = vmatpush1.bf16.msra.mxu0 %v1145
        %1593 = vmatprep.subr.bf16.mxu0 %v1281
        %1594 = vmatpush2.bf16.msra.mxu0 %v1280
        %1595 = vmatprep.subr.bf16.mxu0 %v1272
        %1596 = vmatpush2.bf16.msra.mxu0 %v1271
        %1597 = vmatprep.subr.bf16.mxu0 %v1263
        %1598 = vmatpush2.bf16.msra.mxu0 %v1262
        %1599 = vmatprep.subr.bf16.mxu0 %v1254
        %1600 = vmatpush2.bf16.msra.mxu0 %v1253
        %1601 = vmatprep.subr.bf16.mxu0 %v1245
        %1602 = vmatpush2.bf16.msra.mxu0 %v1244
        %1603 = vmatprep.subr.bf16.mxu0 %v1236
        %1604 = vmatpush2.bf16.msra.mxu0 %v1235
        %1605 = vmatprep.subr.bf16.mxu0 %v1227
        %1606 = vmatpush2.bf16.msra.mxu0 %v1226
        %1607 = vmatprep.subr.bf16.mxu0 %v1218
        %1608 = vmatpush2.bf16.msra.mxu0 %v1217
        %1609 = vmatprep.mubr.bf16.mxu0 %v222
        %1610 = vmatmul.mubr.bf16.gmra.mxu0 %v221
        %v1611 = vpop.f32.mrf.mxu0
        %v1612 = vadd.f32 0.0, %v1611
        %v1613 = vpop.f32.mrf.mxu0
        %v1614 = vadd.f32 0.0, %v1613
        %v1615 = vpop.f32.mrf.mxu0
        %v1616 = vadd.f32 0.0, %v1615
        %v1617 = vpop.f32.mrf.mxu0
        %v1618 = vadd.f32 0.0, %v1617
        %1619 = vmatprep.mubr.bf16.mxu0 %v225
        %1620 = vmatmul.mubr.bf16.gmra.mxu0 %v224
        %v1621 = vpop.f32.mrf.mxu0
        %v1622 = vadd.f32 0.0, %v1621
        %v1623 = vpop.f32.mrf.mxu0
        %v1624 = vadd.f32 0.0, %v1623
        %v1625 = vpop.f32.mrf.mxu0
        %v1626 = vadd.f32 0.0, %v1625
        %v1627 = vpop.f32.mrf.mxu0
        %v1628 = vadd.f32 0.0, %v1627
        %1629 = vmatprep.mubr.bf16.mxu0 %v228
        %1630 = vmatmul.mubr.bf16.gmra.mxu0 %v227
        %v1631 = vpop.f32.mrf.mxu0
        %v1632 = vadd.f32 0.0, %v1631
        %v1633 = vpop.f32.mrf.mxu0
        %v1634 = vadd.f32 0.0, %v1633
        %v1635 = vpop.f32.mrf.mxu0
        %v1636 = vadd.f32 0.0, %v1635
        %v1637 = vpop.f32.mrf.mxu0
        %v1638 = vadd.f32 0.0, %v1637
        %1639 = vmatprep.mubr.bf16.mxu0 %v231
        %1640 = vmatmul.mubr.bf16.gmra.mxu0 %v230
        %v1641 = vpop.f32.mrf.mxu0
        %v1642 = vadd.f32 0.0, %v1641
        %v1643 = vpop.f32.mrf.mxu0
        %v1644 = vadd.f32 0.0, %v1643
        %v1645 = vpop.f32.mrf.mxu0
        %v1646 = vadd.f32 0.0, %v1645
        %v1647 = vpop.f32.mrf.mxu0
        %v1648 = vadd.f32 0.0, %v1647
        %1649 = vdwg.mxu0
        %1650 = vmatprep.subr.bf16.mxu0 %v1353
        %1651 = vmatpush1.bf16.msra.mxu0 %v1352
        %1652 = vmatprep.subr.bf16.mxu0 %v1344
        %1653 = vmatpush1.bf16.msra.mxu0 %v1343
        %1654 = vmatprep.subr.bf16.mxu0 %v1335
        %1655 = vmatpush1.bf16.msra.mxu0 %v1334
        %1656 = vmatprep.subr.bf16.mxu0 %v1326
        %1657 = vmatpush1.bf16.msra.mxu0 %v1325
        %1658 = vmatprep.subr.bf16.mxu0 %v1317
        %1659 = vmatpush1.bf16.msra.mxu0 %v1316
        %1660 = vmatprep.subr.bf16.mxu0 %v1308
        %1661 = vmatpush1.bf16.msra.mxu0 %v1307
        %1662 = vmatprep.subr.bf16.mxu0 %v1299
        %1663 = vmatpush1.bf16.msra.mxu0 %v1298
        %1664 = vmatprep.subr.bf16.mxu0 %v1290
        %1665 = vmatpush1.bf16.msra.mxu0 %v1289
        %1666 = vmatprep.subr.bf16.mxu0 0
        %1667 = vmatpush2.bf16.msra.mxu0 0
        %1668 = vmatprep.subr.bf16.mxu0 0
        %1669 = vmatpush2.bf16.msra.mxu0 0
        %1670 = vmatprep.subr.bf16.mxu0 0
        %1671 = vmatpush2.bf16.msra.mxu0 0
        %1672 = vmatprep.subr.bf16.mxu0 0
        %1673 = vmatpush2.bf16.msra.mxu0 0
        %1674 = vmatprep.subr.bf16.mxu0 0
        %1675 = vmatpush2.bf16.msra.mxu0 0
        %1676 = vmatprep.subr.bf16.mxu0 0
        %1677 = vmatpush2.bf16.msra.mxu0 0
        %1678 = vmatprep.subr.bf16.mxu0 0
        %1679 = vmatpush2.bf16.msra.mxu0 0
        %1680 = vmatprep.subr.bf16.mxu0 0
        %1681 = vmatpush2.bf16.msra.mxu0 0
        %1682 = vmatprep.mubr.bf16.mxu0 0
        %1683 = vmatmul.mubr.bf16.gmra.mxu0 %v223
        %v1684 = vpop.f32.mrf.mxu0
        %v1685 = vadd.f32 %v1612, %v1684
        %v1686 = vpop.f32.mrf.mxu0
        %v1687 = vadd.f32 %v1614, %v1686
        %v1688 = vpop.f32.mrf.mxu0
        %v1689 = vadd.f32 %v1616, %v1688
        %v1690 = vpop.f32.mrf.mxu0
        %v1691 = vadd.f32 %v1618, %v1690
        %1692 = vmatprep.mubr.bf16.mxu0 0
        %1693 = vmatmul.mubr.bf16.gmra.mxu0 %v226
        %v1694 = vpop.f32.mrf.mxu0
        %v1695 = vadd.f32 %v1622, %v1694
        %v1696 = vpop.f32.mrf.mxu0
        %v1697 = vadd.f32 %v1624, %v1696
        %v1698 = vpop.f32.mrf.mxu0
        %v1699 = vadd.f32 %v1626, %v1698
        %v1700 = vpop.f32.mrf.mxu0
        %v1701 = vadd.f32 %v1628, %v1700
        %1702 = vmatprep.mubr.bf16.mxu0 0
        %1703 = vmatmul.mubr.bf16.gmra.mxu0 %v229
        %v1704 = vpop.f32.mrf.mxu0
        %v1705 = vadd.f32 %v1632, %v1704
        %v1706 = vpop.f32.mrf.mxu0
        %v1707 = vadd.f32 %v1634, %v1706
        %v1708 = vpop.f32.mrf.mxu0
        %v1709 = vadd.f32 %v1636, %v1708
        %v1710 = vpop.f32.mrf.mxu0
        %v1711 = vadd.f32 %v1638, %v1710
        %1712 = vmatprep.mubr.bf16.mxu0 0
        %1713 = vmatmul.mubr.bf16.gmra.mxu0 %v232
        %v1714 = vpop.f32.mrf.mxu0
        %v1715 = vadd.f32 %v1642, %v1714
        %v1716 = vpop.f32.mrf.mxu0
        %v1717 = vadd.f32 %v1644, %v1716
        %v1718 = vpop.f32.mrf.mxu0
        %v1719 = vadd.f32 %v1646, %v1718
        %v1720 = vpop.f32.mrf.mxu0
        %v1721 = vadd.f32 %v1648, %v1720
        %1722 = vdwg.mxu0
        %1723 = vmatprep.subr.bf16.mxu0 %v1211
        %1724 = vmatpush1.bf16.msra.mxu0 %v1210
        %1725 = vmatprep.subr.bf16.mxu0 %v1202
        %1726 = vmatpush1.bf16.msra.mxu0 %v1201
        %1727 = vmatprep.subr.bf16.mxu0 %v1193
        %1728 = vmatpush1.bf16.msra.mxu0 %v1192
        %1729 = vmatprep.subr.bf16.mxu0 %v1184
        %1730 = vmatpush1.bf16.msra.mxu0 %v1183
        %1731 = vmatprep.subr.bf16.mxu0 %v1175
        %1732 = vmatpush1.bf16.msra.mxu0 %v1174
        %1733 = vmatprep.subr.bf16.mxu0 %v1166
        %1734 = vmatpush1.bf16.msra.mxu0 %v1165
        %1735 = vmatprep.subr.bf16.mxu0 %v1157
        %1736 = vmatpush1.bf16.msra.mxu0 %v1156
        %1737 = vmatprep.subr.bf16.mxu0 %v1148
        %1738 = vmatpush1.bf16.msra.mxu0 %v1147
        %1739 = vmatprep.subr.bf16.mxu0 %v1283
        %1740 = vmatpush2.bf16.msra.mxu0 %v1282
        %1741 = vmatprep.subr.bf16.mxu0 %v1274
        %1742 = vmatpush2.bf16.msra.mxu0 %v1273
        %1743 = vmatprep.subr.bf16.mxu0 %v1265
        %1744 = vmatpush2.bf16.msra.mxu0 %v1264
        %1745 = vmatprep.subr.bf16.mxu0 %v1256
        %1746 = vmatpush2.bf16.msra.mxu0 %v1255
        %1747 = vmatprep.subr.bf16.mxu0 %v1247
        %1748 = vmatpush2.bf16.msra.mxu0 %v1246
        %1749 = vmatprep.subr.bf16.mxu0 %v1238
        %1750 = vmatpush2.bf16.msra.mxu0 %v1237
        %1751 = vmatprep.subr.bf16.mxu0 %v1229
        %1752 = vmatpush2.bf16.msra.mxu0 %v1228
        %1753 = vmatprep.subr.bf16.mxu0 %v1220
        %1754 = vmatpush2.bf16.msra.mxu0 %v1219
        %1755 = vmatprep.mubr.bf16.mxu0 %v222
        %1756 = vmatmul.mubr.bf16.gmra.mxu0 %v221
        %v1757 = vpop.f32.mrf.mxu0
        %v1758 = vadd.f32 0.0, %v1757
        %v1759 = vpop.f32.mrf.mxu0
        %v1760 = vadd.f32 0.0, %v1759
        %v1761 = vpop.f32.mrf.mxu0
        %v1762 = vadd.f32 0.0, %v1761
        %v1763 = vpop.f32.mrf.mxu0
        %v1764 = vadd.f32 0.0, %v1763
        %1765 = vmatprep.mubr.bf16.mxu0 %v225
        %1766 = vmatmul.mubr.bf16.gmra.mxu0 %v224
        %v1767 = vpop.f32.mrf.mxu0
        %v1768 = vadd.f32 0.0, %v1767
        %v1769 = vpop.f32.mrf.mxu0
        %v1770 = vadd.f32 0.0, %v1769
        %v1771 = vpop.f32.mrf.mxu0
        %v1772 = vadd.f32 0.0, %v1771
        %v1773 = vpop.f32.mrf.mxu0
        %v1774 = vadd.f32 0.0, %v1773
        %1775 = vmatprep.mubr.bf16.mxu0 %v228
        %1776 = vmatmul.mubr.bf16.gmra.mxu0 %v227
        %v1777 = vpop.f32.mrf.mxu0
        %v1778 = vadd.f32 0.0, %v1777
        %v1779 = vpop.f32.mrf.mxu0
        %v1780 = vadd.f32 0.0, %v1779
        %v1781 = vpop.f32.mrf.mxu0
        %v1782 = vadd.f32 0.0, %v1781
        %v1783 = vpop.f32.mrf.mxu0
        %v1784 = vadd.f32 0.0, %v1783
        %1785 = vmatprep.mubr.bf16.mxu0 %v231
        %1786 = vmatmul.mubr.bf16.gmra.mxu0 %v230
        %v1787 = vpop.f32.mrf.mxu0
        %v1788 = vadd.f32 0.0, %v1787
        %v1789 = vpop.f32.mrf.mxu0
        %v1790 = vadd.f32 0.0, %v1789
        %v1791 = vpop.f32.mrf.mxu0
        %v1792 = vadd.f32 0.0, %v1791
        %v1793 = vpop.f32.mrf.mxu0
        %v1794 = vadd.f32 0.0, %v1793
        %1795 = vdwg.mxu0
        %1796 = vmatprep.subr.bf16.mxu0 %v1355
        %1797 = vmatpush1.bf16.msra.mxu0 %v1354
        %1798 = vmatprep.subr.bf16.mxu0 %v1346
        %1799 = vmatpush1.bf16.msra.mxu0 %v1345
        %1800 = vmatprep.subr.bf16.mxu0 %v1337
        %1801 = vmatpush1.bf16.msra.mxu0 %v1336
        %1802 = vmatprep.subr.bf16.mxu0 %v1328
        %1803 = vmatpush1.bf16.msra.mxu0 %v1327
        %1804 = vmatprep.subr.bf16.mxu0 %v1319
        %1805 = vmatpush1.bf16.msra.mxu0 %v1318
        %1806 = vmatprep.subr.bf16.mxu0 %v1310
        %1807 = vmatpush1.bf16.msra.mxu0 %v1309
        %1808 = vmatprep.subr.bf16.mxu0 %v1301
        %1809 = vmatpush1.bf16.msra.mxu0 %v1300
        %1810 = vmatprep.subr.bf16.mxu0 %v1292
        %1811 = vmatpush1.bf16.msra.mxu0 %v1291
        %1812 = vmatprep.subr.bf16.mxu0 0
        %1813 = vmatpush2.bf16.msra.mxu0 0
        %1814 = vmatprep.subr.bf16.mxu0 0
        %1815 = vmatpush2.bf16.msra.mxu0 0
        %1816 = vmatprep.subr.bf16.mxu0 0
        %1817 = vmatpush2.bf16.msra.mxu0 0
        %1818 = vmatprep.subr.bf16.mxu0 0
        %1819 = vmatpush2.bf16.msra.mxu0 0
        %1820 = vmatprep.subr.bf16.mxu0 0
        %1821 = vmatpush2.bf16.msra.mxu0 0
        %1822 = vmatprep.subr.bf16.mxu0 0
        %1823 = vmatpush2.bf16.msra.mxu0 0
        %1824 = vmatprep.subr.bf16.mxu0 0
        %1825 = vmatpush2.bf16.msra.mxu0 0
        %1826 = vmatprep.subr.bf16.mxu0 0
        %1827 = vmatpush2.bf16.msra.mxu0 0
        %1828 = vmatprep.mubr.bf16.mxu0 0
        %1829 = vmatmul.mubr.bf16.gmra.mxu0 %v223
        %v1830 = vpop.f32.mrf.mxu0
        %v1831 = vadd.f32 %v1758, %v1830
        %v1832 = vpop.f32.mrf.mxu0
        %v1833 = vadd.f32 %v1760, %v1832
        %v1834 = vpop.f32.mrf.mxu0
        %v1835 = vadd.f32 %v1762, %v1834
        %v1836 = vpop.f32.mrf.mxu0
        %v1837 = vadd.f32 %v1764, %v1836
        %1838 = vmatprep.mubr.bf16.mxu0 0
        %1839 = vmatmul.mubr.bf16.gmra.mxu0 %v226
        %v1840 = vpop.f32.mrf.mxu0
        %v1841 = vadd.f32 %v1768, %v1840
        %v1842 = vpop.f32.mrf.mxu0
        %v1843 = vadd.f32 %v1770, %v1842
        %v1844 = vpop.f32.mrf.mxu0
        %v1845 = vadd.f32 %v1772, %v1844
        %v1846 = vpop.f32.mrf.mxu0
        %v1847 = vadd.f32 %v1774, %v1846
        %1848 = vmatprep.mubr.bf16.mxu0 0
        %1849 = vmatmul.mubr.bf16.gmra.mxu0 %v229
        %v1850 = vpop.f32.mrf.mxu0
        %v1851 = vadd.f32 %v1778, %v1850
        %v1852 = vpop.f32.mrf.mxu0
        %v1853 = vadd.f32 %v1780, %v1852
        %v1854 = vpop.f32.mrf.mxu0
        %v1855 = vadd.f32 %v1782, %v1854
        %v1856 = vpop.f32.mrf.mxu0
        %v1857 = vadd.f32 %v1784, %v1856
        %1858 = vmatprep.mubr.bf16.mxu0 0
        %1859 = vmatmul.mubr.bf16.gmra.mxu0 %v232
        %v1860 = vpop.f32.mrf.mxu0
        %v1861 = vadd.f32 %v1788, %v1860
        %v1862 = vpop.f32.mrf.mxu0
        %v1863 = vadd.f32 %v1790, %v1862
        %v1864 = vpop.f32.mrf.mxu0
        %v1865 = vadd.f32 %v1792, %v1864
        %v1866 = vpop.f32.mrf.mxu0
        %v1867 = vadd.f32 %v1794, %v1866
        %1868 = vdwg.mxu0
        %1869 = vmatprep.subr.bf16.mxu0 %v1213
        %1870 = vmatpush1.bf16.msra.mxu0 %v1212
        %1871 = vmatprep.subr.bf16.mxu0 %v1204
        %1872 = vmatpush1.bf16.msra.mxu0 %v1203
        %1873 = vmatprep.subr.bf16.mxu0 %v1195
        %1874 = vmatpush1.bf16.msra.mxu0 %v1194
        %1875 = vmatprep.subr.bf16.mxu0 %v1186
        %1876 = vmatpush1.bf16.msra.mxu0 %v1185
        %1877 = vmatprep.subr.bf16.mxu0 %v1177
        %1878 = vmatpush1.bf16.msra.mxu0 %v1176
        %1879 = vmatprep.subr.bf16.mxu0 %v1168
        %1880 = vmatpush1.bf16.msra.mxu0 %v1167
        %1881 = vmatprep.subr.bf16.mxu0 %v1159
        %1882 = vmatpush1.bf16.msra.mxu0 %v1158
        %1883 = vmatprep.subr.bf16.mxu0 %v1150
        %1884 = vmatpush1.bf16.msra.mxu0 %v1149
        %1885 = vmatprep.subr.bf16.mxu0 %v1285
        %1886 = vmatpush2.bf16.msra.mxu0 %v1284
        %1887 = vmatprep.subr.bf16.mxu0 %v1276
        %1888 = vmatpush2.bf16.msra.mxu0 %v1275
        %1889 = vmatprep.subr.bf16.mxu0 %v1267
        %1890 = vmatpush2.bf16.msra.mxu0 %v1266
        %1891 = vmatprep.subr.bf16.mxu0 %v1258
        %1892 = vmatpush2.bf16.msra.mxu0 %v1257
        %1893 = vmatprep.subr.bf16.mxu0 %v1249
        %1894 = vmatpush2.bf16.msra.mxu0 %v1248
        %1895 = vmatprep.subr.bf16.mxu0 %v1240
        %1896 = vmatpush2.bf16.msra.mxu0 %v1239
        %1897 = vmatprep.subr.bf16.mxu0 %v1231
        %1898 = vmatpush2.bf16.msra.mxu0 %v1230
        %1899 = vmatprep.subr.bf16.mxu0 %v1222
        %1900 = vmatpush2.bf16.msra.mxu0 %v1221
        %1901 = vmatprep.mubr.bf16.mxu0 %v222
        %1902 = vmatmul.mubr.bf16.gmra.mxu0 %v221
        %v1903 = vpop.f32.mrf.mxu0
        %v1904 = vadd.f32 0.0, %v1903
        %v1905 = vpop.f32.mrf.mxu0
        %v1906 = vadd.f32 0.0, %v1905
        %v1907 = vpop.f32.mrf.mxu0
        %v1908 = vadd.f32 0.0, %v1907
        %v1909 = vpop.f32.mrf.mxu0
        %v1910 = vadd.f32 0.0, %v1909
        %1911 = vmatprep.mubr.bf16.mxu0 %v225
        %1912 = vmatmul.mubr.bf16.gmra.mxu0 %v224
        %v1913 = vpop.f32.mrf.mxu0
        %v1914 = vadd.f32 0.0, %v1913
        %v1915 = vpop.f32.mrf.mxu0
        %v1916 = vadd.f32 0.0, %v1915
        %v1917 = vpop.f32.mrf.mxu0
        %v1918 = vadd.f32 0.0, %v1917
        %v1919 = vpop.f32.mrf.mxu0
        %v1920 = vadd.f32 0.0, %v1919
        %1921 = vmatprep.mubr.bf16.mxu0 %v228
        %1922 = vmatmul.mubr.bf16.gmra.mxu0 %v227
        %v1923 = vpop.f32.mrf.mxu0
        %v1924 = vadd.f32 0.0, %v1923
        %v1925 = vpop.f32.mrf.mxu0
        %v1926 = vadd.f32 0.0, %v1925
        %v1927 = vpop.f32.mrf.mxu0
        %v1928 = vadd.f32 0.0, %v1927
        %v1929 = vpop.f32.mrf.mxu0
        %v1930 = vadd.f32 0.0, %v1929
        %1931 = vmatprep.mubr.bf16.mxu0 %v231
        %1932 = vmatmul.mubr.bf16.gmra.mxu0 %v230
        %v1933 = vpop.f32.mrf.mxu0
        %v1934 = vadd.f32 0.0, %v1933
        %v1935 = vpop.f32.mrf.mxu0
        %v1936 = vadd.f32 0.0, %v1935
        %v1937 = vpop.f32.mrf.mxu0
        %v1938 = vadd.f32 0.0, %v1937
        %v1939 = vpop.f32.mrf.mxu0
        %v1940 = vadd.f32 0.0, %v1939
        %1941 = vdwg.mxu0
        %1942 = vmatprep.subr.bf16.mxu0 %v1357
        %1943 = vmatpush1.bf16.msra.mxu0 %v1356
        %1944 = vmatprep.subr.bf16.mxu0 %v1348
        %1945 = vmatpush1.bf16.msra.mxu0 %v1347
        %1946 = vmatprep.subr.bf16.mxu0 %v1339
        %1947 = vmatpush1.bf16.msra.mxu0 %v1338
        %1948 = vmatprep.subr.bf16.mxu0 %v1330
        %1949 = vmatpush1.bf16.msra.mxu0 %v1329
        %1950 = vmatprep.subr.bf16.mxu0 %v1321
        %1951 = vmatpush1.bf16.msra.mxu0 %v1320
        %1952 = vmatprep.subr.bf16.mxu0 %v1312
        %1953 = vmatpush1.bf16.msra.mxu0 %v1311
        %1954 = vmatprep.subr.bf16.mxu0 %v1303
        %1955 = vmatpush1.bf16.msra.mxu0 %v1302
        %1956 = vmatprep.subr.bf16.mxu0 %v1294
        %1957 = vmatpush1.bf16.msra.mxu0 %v1293
        %1958 = vmatprep.subr.bf16.mxu0 0
        %1959 = vmatpush2.bf16.msra.mxu0 0
        %1960 = vmatprep.subr.bf16.mxu0 0
        %1961 = vmatpush2.bf16.msra.mxu0 0
        %1962 = vmatprep.subr.bf16.mxu0 0
        %1963 = vmatpush2.bf16.msra.mxu0 0
        %1964 = vmatprep.subr.bf16.mxu0 0
        %1965 = vmatpush2.bf16.msra.mxu0 0
        %1966 = vmatprep.subr.bf16.mxu0 0
        %1967 = vmatpush2.bf16.msra.mxu0 0
        %1968 = vmatprep.subr.bf16.mxu0 0
        %1969 = vmatpush2.bf16.msra.mxu0 0
        %1970 = vmatprep.subr.bf16.mxu0 0
        %1971 = vmatpush2.bf16.msra.mxu0 0
        %1972 = vmatprep.subr.bf16.mxu0 0
        %1973 = vmatpush2.bf16.msra.mxu0 0
        %1974 = vmatprep.mubr.bf16.mxu0 0
        %1975 = vmatmul.mubr.bf16.gmra.mxu0 %v223
        %v1976 = vpop.f32.mrf.mxu0
        %v1977 = vadd.f32 %v1904, %v1976
        %v1978 = vpop.f32.mrf.mxu0
        %v1979 = vadd.f32 %v1906, %v1978
        %v1980 = vpop.f32.mrf.mxu0
        %v1981 = vadd.f32 %v1908, %v1980
        %v1982 = vpop.f32.mrf.mxu0
        %v1983 = vadd.f32 %v1910, %v1982
        %1984 = vmatprep.mubr.bf16.mxu0 0
        %1985 = vmatmul.mubr.bf16.gmra.mxu0 %v226
        %v1986 = vpop.f32.mrf.mxu0
        %v1987 = vadd.f32 %v1914, %v1986
        %v1988 = vpop.f32.mrf.mxu0
        %v1989 = vadd.f32 %v1916, %v1988
        %v1990 = vpop.f32.mrf.mxu0
        %v1991 = vadd.f32 %v1918, %v1990
        %v1992 = vpop.f32.mrf.mxu0
        %v1993 = vadd.f32 %v1920, %v1992
        %1994 = vmatprep.mubr.bf16.mxu0 0
        %1995 = vmatmul.mubr.bf16.gmra.mxu0 %v229
        %v1996 = vpop.f32.mrf.mxu0
        %v1997 = vadd.f32 %v1924, %v1996
        %v1998 = vpop.f32.mrf.mxu0
        %v1999 = vadd.f32 %v1926, %v1998
        %v2000 = vpop.f32.mrf.mxu0
        %v2001 = vadd.f32 %v1928, %v2000
        %v2002 = vpop.f32.mrf.mxu0
        %v2003 = vadd.f32 %v1930, %v2002
        %2004 = vmatprep.mubr.bf16.mxu0 0
        %2005 = vmatmul.mubr.bf16.gmra.mxu0 %v232
        %v2006 = vpop.f32.mrf.mxu0
        %v2007 = vadd.f32 %v1934, %v2006
        %v2008 = vpop.f32.mrf.mxu0
        %v2009 = vadd.f32 %v1936, %v2008
        %v2010 = vpop.f32.mrf.mxu0
        %v2011 = vadd.f32 %v1938, %v2010
        %v2012 = vpop.f32.mrf.mxu0
        %v2013 = vadd.f32 %v1940, %v2012
        %2014 = vdwg.mxu0
        %2015 = vmatprep.subr.bf16.mxu0 %v1215
        %2016 = vmatpush1.bf16.msra.mxu0 %v1214
        %2017 = vmatprep.subr.bf16.mxu0 %v1206
        %2018 = vmatpush1.bf16.msra.mxu0 %v1205
        %2019 = vmatprep.subr.bf16.mxu0 %v1197
        %2020 = vmatpush1.bf16.msra.mxu0 %v1196
        %2021 = vmatprep.subr.bf16.mxu0 %v1188
        %2022 = vmatpush1.bf16.msra.mxu0 %v1187
        %2023 = vmatprep.subr.bf16.mxu0 %v1179
        %2024 = vmatpush1.bf16.msra.mxu0 %v1178
        %2025 = vmatprep.subr.bf16.mxu0 %v1170
        %2026 = vmatpush1.bf16.msra.mxu0 %v1169
        %2027 = vmatprep.subr.bf16.mxu0 %v1161
        %2028 = vmatpush1.bf16.msra.mxu0 %v1160
        %2029 = vmatprep.subr.bf16.mxu0 %v1152
        %2030 = vmatpush1.bf16.msra.mxu0 %v1151
        %2031 = vmatprep.subr.bf16.mxu0 %v1287
        %2032 = vmatpush2.bf16.msra.mxu0 %v1286
        %2033 = vmatprep.subr.bf16.mxu0 %v1278
        %2034 = vmatpush2.bf16.msra.mxu0 %v1277
        %2035 = vmatprep.subr.bf16.mxu0 %v1269
        %2036 = vmatpush2.bf16.msra.mxu0 %v1268
        %2037 = vmatprep.subr.bf16.mxu0 %v1260
        %2038 = vmatpush2.bf16.msra.mxu0 %v1259
        %2039 = vmatprep.subr.bf16.mxu0 %v1251
        %2040 = vmatpush2.bf16.msra.mxu0 %v1250
        %2041 = vmatprep.subr.bf16.mxu0 %v1242
        %2042 = vmatpush2.bf16.msra.mxu0 %v1241
        %2043 = vmatprep.subr.bf16.mxu0 %v1233
        %2044 = vmatpush2.bf16.msra.mxu0 %v1232
        %2045 = vmatprep.subr.bf16.mxu0 %v1224
        %2046 = vmatpush2.bf16.msra.mxu0 %v1223
        %2047 = vmatprep.mubr.bf16.mxu0 %v222
        %2048 = vmatmul.mubr.bf16.gmra.mxu0 %v221
        %v2049 = vpop.f32.mrf.mxu0
        %v2050 = vadd.f32 0.0, %v2049
        %v2051 = vpop.f32.mrf.mxu0
        %v2052 = vadd.f32 0.0, %v2051
        %v2053 = vpop.f32.mrf.mxu0
        %v2054 = vadd.f32 0.0, %v2053
        %v2055 = vpop.f32.mrf.mxu0
        %v2056 = vadd.f32 0.0, %v2055
        %2057 = vmatprep.mubr.bf16.mxu0 %v225
        %2058 = vmatmul.mubr.bf16.gmra.mxu0 %v224
        %v2059 = vpop.f32.mrf.mxu0
        %v2060 = vadd.f32 0.0, %v2059
        %v2061 = vpop.f32.mrf.mxu0
        %v2062 = vadd.f32 0.0, %v2061
        %v2063 = vpop.f32.mrf.mxu0
        %v2064 = vadd.f32 0.0, %v2063
        %v2065 = vpop.f32.mrf.mxu0
        %v2066 = vadd.f32 0.0, %v2065
        %2067 = vmatprep.mubr.bf16.mxu0 %v228
        %2068 = vmatmul.mubr.bf16.gmra.mxu0 %v227
        %v2069 = vpop.f32.mrf.mxu0
        %v2070 = vadd.f32 0.0, %v2069
        %v2071 = vpop.f32.mrf.mxu0
        %v2072 = vadd.f32 0.0, %v2071
        %v2073 = vpop.f32.mrf.mxu0
        %v2074 = vadd.f32 0.0, %v2073
        %v2075 = vpop.f32.mrf.mxu0
        %v2076 = vadd.f32 0.0, %v2075
        %2077 = vmatprep.mubr.bf16.mxu0 %v231
        %2078 = vmatmul.mubr.bf16.gmra.mxu0 %v230
        %v2079 = vpop.f32.mrf.mxu0
        %v2080 = vadd.f32 0.0, %v2079
        %v2081 = vpop.f32.mrf.mxu0
        %v2082 = vadd.f32 0.0, %v2081
        %v2083 = vpop.f32.mrf.mxu0
        %v2084 = vadd.f32 0.0, %v2083
        %v2085 = vpop.f32.mrf.mxu0
        %v2086 = vadd.f32 0.0, %v2085
        %2087 = vdwg.mxu0
        %2088 = vmatprep.subr.bf16.mxu0 %v1359
        %2089 = vmatpush1.bf16.msra.mxu0 %v1358
        %2090 = vmatprep.subr.bf16.mxu0 %v1350
        %2091 = vmatpush1.bf16.msra.mxu0 %v1349
        %2092 = vmatprep.subr.bf16.mxu0 %v1341
        %2093 = vmatpush1.bf16.msra.mxu0 %v1340
        %2094 = vmatprep.subr.bf16.mxu0 %v1332
        %2095 = vmatpush1.bf16.msra.mxu0 %v1331
        %2096 = vmatprep.subr.bf16.mxu0 %v1323
        %2097 = vmatpush1.bf16.msra.mxu0 %v1322
        %2098 = vmatprep.subr.bf16.mxu0 %v1314
        %2099 = vmatpush1.bf16.msra.mxu0 %v1313
        %2100 = vmatprep.subr.bf16.mxu0 %v1305
        %2101 = vmatpush1.bf16.msra.mxu0 %v1304
        %2102 = vmatprep.subr.bf16.mxu0 %v1296
        %2103 = vmatpush1.bf16.msra.mxu0 %v1295
        %2104 = vmatprep.subr.bf16.mxu0 0
        %2105 = vmatpush2.bf16.msra.mxu0 0
        %2106 = vmatprep.subr.bf16.mxu0 0
        %2107 = vmatpush2.bf16.msra.mxu0 0
        %2108 = vmatprep.subr.bf16.mxu0 0
        %2109 = vmatpush2.bf16.msra.mxu0 0
        %2110 = vmatprep.subr.bf16.mxu0 0
        %2111 = vmatpush2.bf16.msra.mxu0 0
        %2112 = vmatprep.subr.bf16.mxu0 0
        %2113 = vmatpush2.bf16.msra.mxu0 0
        %2114 = vmatprep.subr.bf16.mxu0 0
        %2115 = vmatpush2.bf16.msra.mxu0 0
        %2116 = vmatprep.subr.bf16.mxu0 0
        %2117 = vmatpush2.bf16.msra.mxu0 0
        %2118 = vmatprep.subr.bf16.mxu0 0
        %2119 = vmatpush2.bf16.msra.mxu0 0
        %2120 = vmatprep.mubr.bf16.mxu0 0
        %2121 = vmatmul.mubr.bf16.gmra.mxu0 %v223
        %v2122 = vpop.f32.mrf.mxu0
        %v2123 = vadd.f32 %v2050, %v2122
        %v2124 = vpop.f32.mrf.mxu0
        %v2125 = vadd.f32 %v2052, %v2124
        %v2126 = vpop.f32.mrf.mxu0
        %v2127 = vadd.f32 %v2054, %v2126
        %v2128 = vpop.f32.mrf.mxu0
        %v2129 = vadd.f32 %v2056, %v2128
        %2130 = vmatprep.mubr.bf16.mxu0 0
        %2131 = vmatmul.mubr.bf16.gmra.mxu0 %v226
        %v2132 = vpop.f32.mrf.mxu0
        %v2133 = vadd.f32 %v2060, %v2132
        %v2134 = vpop.f32.mrf.mxu0
        %v2135 = vadd.f32 %v2062, %v2134
        %v2136 = vpop.f32.mrf.mxu0
        %v2137 = vadd.f32 %v2064, %v2136
        %v2138 = vpop.f32.mrf.mxu0
        %v2139 = vadd.f32 %v2066, %v2138
        %2140 = vmatprep.mubr.bf16.mxu0 0
        %2141 = vmatmul.mubr.bf16.gmra.mxu0 %v229
        %v2142 = vpop.f32.mrf.mxu0
        %v2143 = vadd.f32 %v2070, %v2142
        %v2144 = vpop.f32.mrf.mxu0
        %v2145 = vadd.f32 %v2072, %v2144
        %v2146 = vpop.f32.mrf.mxu0
        %v2147 = vadd.f32 %v2074, %v2146
        %v2148 = vpop.f32.mrf.mxu0
        %v2149 = vadd.f32 %v2076, %v2148
        %2150 = vmatprep.mubr.bf16.mxu0 0
        %2151 = vmatmul.mubr.bf16.gmra.mxu0 %v232
        %v2152 = vpop.f32.mrf.mxu0
        %v2153 = vadd.f32 %v2080, %v2152
        %v2154 = vpop.f32.mrf.mxu0
        %v2155 = vadd.f32 %v2082, %v2154
        %v2156 = vpop.f32.mrf.mxu0
        %v2157 = vadd.f32 %v2084, %v2156
        %v2158 = vpop.f32.mrf.mxu0
        %v2159 = vadd.f32 %v2086, %v2158
        %2160 = vdwg.mxu0
        %2161 = vmatprep.subr.bf16.mxu0 0
        %2162 = vmatpush1.bf16.msra.mxu0 %v1216
        %2163 = vmatprep.subr.bf16.mxu0 0
        %2164 = vmatpush1.bf16.msra.mxu0 %v1207
        %2165 = vmatprep.subr.bf16.mxu0 0
        %2166 = vmatpush1.bf16.msra.mxu0 %v1198
        %2167 = vmatprep.subr.bf16.mxu0 0
        %2168 = vmatpush1.bf16.msra.mxu0 %v1189
        %2169 = vmatprep.subr.bf16.mxu0 0
        %2170 = vmatpush1.bf16.msra.mxu0 %v1180
        %2171 = vmatprep.subr.bf16.mxu0 0
        %2172 = vmatpush1.bf16.msra.mxu0 %v1171
        %2173 = vmatprep.subr.bf16.mxu0 0
        %2174 = vmatpush1.bf16.msra.mxu0 %v1162
        %2175 = vmatprep.subr.bf16.mxu0 0
        %2176 = vmatpush1.bf16.msra.mxu0 %v1153
        %2177 = vmatprep.subr.bf16.mxu0 0
        %2178 = vmatpush2.bf16.msra.mxu0 %v1288
        %2179 = vmatprep.subr.bf16.mxu0 0
        %2180 = vmatpush2.bf16.msra.mxu0 %v1279
        %2181 = vmatprep.subr.bf16.mxu0 0
        %2182 = vmatpush2.bf16.msra.mxu0 %v1270
        %2183 = vmatprep.subr.bf16.mxu0 0
        %2184 = vmatpush2.bf16.msra.mxu0 %v1261
        %2185 = vmatprep.subr.bf16.mxu0 0
        %2186 = vmatpush2.bf16.msra.mxu0 %v1252
        %2187 = vmatprep.subr.bf16.mxu0 0
        %2188 = vmatpush2.bf16.msra.mxu0 %v1243
        %2189 = vmatprep.subr.bf16.mxu0 0
        %2190 = vmatpush2.bf16.msra.mxu0 %v1234
        %2191 = vmatprep.subr.bf16.mxu0 0
        %2192 = vmatpush2.bf16.msra.mxu0 %v1225
        %2193 = vmatprep.mubr.bf16.mxu0 %v222
        %2194 = vmatmul.mubr.bf16.gmra.mxu0 %v221
        %v2195 = vpop.f32.mrf.mxu0
        %v2196 = vadd.f32 0.0, %v2195
        %v2197 = vpop.f32.mrf.mxu0
        %v2198 = vpop.f32.mrf.mxu0
        %v2199 = vadd.f32 0.0, %v2198
        %v2200 = vpop.f32.mrf.mxu0
        %2201 = vmatprep.mubr.bf16.mxu0 %v225
        %2202 = vmatmul.mubr.bf16.gmra.mxu0 %v224
        %v2203 = vpop.f32.mrf.mxu0
        %v2204 = vadd.f32 0.0, %v2203
        %v2205 = vpop.f32.mrf.mxu0
        %v2206 = vpop.f32.mrf.mxu0
        %v2207 = vadd.f32 0.0, %v2206
        %v2208 = vpop.f32.mrf.mxu0
        %2209 = vmatprep.mubr.bf16.mxu0 %v228
        %2210 = vmatmul.mubr.bf16.gmra.mxu0 %v227
        %v2211 = vpop.f32.mrf.mxu0
        %v2212 = vadd.f32 0.0, %v2211
        %v2213 = vpop.f32.mrf.mxu0
        %v2214 = vpop.f32.mrf.mxu0
        %v2215 = vadd.f32 0.0, %v2214
        %v2216 = vpop.f32.mrf.mxu0
        %2217 = vmatprep.mubr.bf16.mxu0 %v231
        %2218 = vmatmul.mubr.bf16.gmra.mxu0 %v230
        %v2219 = vpop.f32.mrf.mxu0
        %v2220 = vadd.f32 0.0, %v2219
        %v2221 = vpop.f32.mrf.mxu0
        %v2222 = vpop.f32.mrf.mxu0
        %v2223 = vadd.f32 0.0, %v2222
        %v2224 = vpop.f32.mrf.mxu0
        %2225 = vdwg.mxu0
        %2226 = vmatprep.subr.bf16.mxu0 0
        %2227 = vmatpush1.bf16.msra.mxu0 %v1360
        %2228 = vmatprep.subr.bf16.mxu0 0
        %2229 = vmatpush1.bf16.msra.mxu0 %v1351
        %2230 = vmatprep.subr.bf16.mxu0 0
        %2231 = vmatpush1.bf16.msra.mxu0 %v1342
        %2232 = vmatprep.subr.bf16.mxu0 0
        %2233 = vmatpush1.bf16.msra.mxu0 %v1333
        %2234 = vmatprep.subr.bf16.mxu0 0
        %2235 = vmatpush1.bf16.msra.mxu0 %v1324
        %2236 = vmatprep.subr.bf16.mxu0 0
        %2237 = vmatpush1.bf16.msra.mxu0 %v1315
        %2238 = vmatprep.subr.bf16.mxu0 0
        %2239 = vmatpush1.bf16.msra.mxu0 %v1306
        %2240 = vmatprep.subr.bf16.mxu0 0
        %2241 = vmatpush1.bf16.msra.mxu0 %v1297
        %2242 = vmatprep.subr.bf16.mxu0 0
        %2243 = vmatpush2.bf16.msra.mxu0 0
        %2244 = vmatprep.subr.bf16.mxu0 0
        %2245 = vmatpush2.bf16.msra.mxu0 0
        %2246 = vmatprep.subr.bf16.mxu0 0
        %2247 = vmatpush2.bf16.msra.mxu0 0
        %2248 = vmatprep.subr.bf16.mxu0 0
        %2249 = vmatpush2.bf16.msra.mxu0 0
        %2250 = vmatprep.subr.bf16.mxu0 0
        %2251 = vmatpush2.bf16.msra.mxu0 0
        %2252 = vmatprep.subr.bf16.mxu0 0
        %2253 = vmatpush2.bf16.msra.mxu0 0
        %2254 = vmatprep.subr.bf16.mxu0 0
        %2255 = vmatpush2.bf16.msra.mxu0 0
        %2256 = vmatprep.subr.bf16.mxu0 0
        %2257 = vmatpush2.bf16.msra.mxu0 0
        %2258 = vmatprep.mubr.bf16.mxu0 0
        %2259 = vmatmul.mubr.bf16.gmra.mxu0 %v223
        %v2260 = vpop.f32.mrf.mxu0
        %v2261 = vadd.f32 %v2196, %v2260
        %v2262 = vpop.f32.mrf.mxu0
        %v2263 = vpop.f32.mrf.mxu0
        %v2264 = vadd.f32 %v2199, %v2263
        %v2265 = vpop.f32.mrf.mxu0
        %2266 = vmatprep.mubr.bf16.mxu0 0
        %2267 = vmatmul.mubr.bf16.gmra.mxu0 %v226
        %v2268 = vpop.f32.mrf.mxu0
        %v2269 = vadd.f32 %v2204, %v2268
        %v2270 = vpop.f32.mrf.mxu0
        %v2271 = vpop.f32.mrf.mxu0
        %v2272 = vadd.f32 %v2207, %v2271
        %v2273 = vpop.f32.mrf.mxu0
        %2274 = vmatprep.mubr.bf16.mxu0 0
        %2275 = vmatmul.mubr.bf16.gmra.mxu0 %v229
        %v2276 = vpop.f32.mrf.mxu0
        %v2277 = vadd.f32 %v2212, %v2276
        %v2278 = vpop.f32.mrf.mxu0
        %v2279 = vpop.f32.mrf.mxu0
        %v2280 = vadd.f32 %v2215, %v2279
        %v2281 = vpop.f32.mrf.mxu0
        %2282 = vmatprep.mubr.bf16.mxu0 0
        %2283 = vmatmul.mubr.bf16.gmra.mxu0 %v232
        %v2284 = vpop.f32.mrf.mxu0
        %v2285 = vadd.f32 %v2220, %v2284
        %v2286 = vpop.f32.mrf.mxu0
        %v2287 = vpop.f32.mrf.mxu0
        %v2288 = vadd.f32 %v2223, %v2287
        %v2289 = vpop.f32.mrf.mxu0
        %2290 = vdwg.mxu0
        %v2291 = vlaneseq
        %v2292 = vshrl.u32 %v2291, 7
        %v2293 = vadd.s32 %v2292, 8
        %v2294 = vadd.s32 %v2292, 16
        %v2295 = vadd.s32 %v2292, 24
        %v2296 = vadd.s32 %v2292, 32
        %v2297 = vadd.s32 %v2292, 40
        %v2298 = vadd.s32 %v2292, 48
        %v2299 = vadd.s32 %v2292, 56
        %v2300 = vlaneseq
        %v2301 = vand.u32 %v2300, 127
        %vm2302 = vcmp.le.s32.totalorder %v2301, %v2292
        %vm2303 = vcmp.le.s32.totalorder %v2301, %v2293
        %vm2304 = vcmp.le.s32.totalorder %v2301, %v2294
        %vm2305 = vcmp.le.s32.totalorder %v2301, %v2295
        %vm2306 = vcmp.le.s32.totalorder %v2301, %v2296
        %vm2307 = vcmp.le.s32.totalorder %v2301, %v2297
        %vm2308 = vcmp.le.s32.totalorder %v2301, %v2298
        %vm2309 = vcmp.le.s32.totalorder %v2301, %v2299
        %v2310 = vpack.c.bf16 %v1689, %v1685
        %v2311 = vpack.c.bf16 %v1699, %v1695
        %v2312 = vpack.c.bf16 %v1709, %v1705
        %v2313 = vpack.c.bf16 %v1719, %v1715
        %v2314 = vpack.c.bf16 %v1837, %v1833
        %v2315 = vpack.c.bf16 %v1847, %v1843
        %v2316 = vpack.c.bf16 %v1857, %v1853
        %v2317 = vpack.c.bf16 %v1867, %v1863
        %v2318 = vpack.c.bf16 %v2127, %v2123
        %v2319 = vpack.c.bf16 %v2137, %v2133
        %v2320 = vpack.c.bf16 %v2147, %v2143
        %v2321 = vpack.c.bf16 %v2157, %v2153
        %vm2322 = vcmask 523264
        %v2324 = vsel %vm2322, %v2310, 0
        %v2327 = vsel %vm2322, %v2311, 0
        %v2330 = vsel %vm2322, %v2312, 0
        %v2333 = vsel %vm2322, %v2313, 0
        %v2336 = vsel %vm2322, %v2314, 0
        %v2339 = vsel %vm2322, %v2315, 0
        %v2342 = vsel %vm2322, %v2316, 0
        %v2345 = vsel %vm2322, %v2317, 0
        %2347 = vmatprep.subr.bf16.mxu0 0
        %2348 = vmatpush1.bf16.xpose.msra.mxu0 0
        %2349 = vmatprep.subr.bf16.mxu0 0
        %2350 = vmatpush1.bf16.xpose.msra.mxu0 0
        %2351 = vmatprep.subr.bf16.mxu0 0
        %2352 = vmatpush1.bf16.xpose.msra.mxu0 0
        %2353 = vmatprep.subr.bf16.mxu0 0
        %2354 = vmatpush1.bf16.xpose.msra.mxu0 0
        %2355 = vmatprep.subr.bf16.mxu0 0
        %2356 = vmatpush1.bf16.xpose.msra.mxu0 %v2345
        %2357 = vmatprep.subr.bf16.mxu0 0
        %2358 = vmatpush1.bf16.xpose.msra.mxu0 %v2342
        %2359 = vmatprep.subr.bf16.mxu0 0
        %2360 = vmatpush1.bf16.xpose.msra.mxu0 %v2339
        %2361 = vmatprep.subr.bf16.mxu0 0
        %2362 = vmatpush1.bf16.xpose.msra.mxu0 %v2336
        %2363 = vmatprep.subr.bf16.mxu0 0
        %2364 = vmatpush2.bf16.xpose.msra.mxu0 0
        %2365 = vmatprep.subr.bf16.mxu0 0
        %2366 = vmatpush2.bf16.xpose.msra.mxu0 0
        %2367 = vmatprep.subr.bf16.mxu0 0
        %2368 = vmatpush2.bf16.xpose.msra.mxu0 0
        %2369 = vmatprep.subr.bf16.mxu0 0
        %2370 = vmatpush2.bf16.xpose.msra.mxu0 0
        %2371 = vmatprep.subr.bf16.mxu0 0
        %2372 = vmatpush2.bf16.xpose.msra.mxu0 0
        %2373 = vmatprep.subr.bf16.mxu0 0
        %2374 = vmatpush2.bf16.xpose.msra.mxu0 0
        %2375 = vmatprep.subr.bf16.mxu0 0
        %2376 = vmatpush2.bf16.xpose.msra.mxu0 0
        %2377 = vmatprep.subr.bf16.mxu0 0
        %2378 = vmatpush2.bf16.xpose.msra.mxu0 0
        %2379 = vmatprep.mubr.bf16.mxu0 0
        %2380 = vmatmul.mubr.bf16.gmra.mxu0 %v2324
        %v2381 = vpop.f32.mrf.mxu0
        %v2382 = vadd.f32 0.0, %v2381
        %v2383 = vpop.f32.mrf.mxu0
        %v2384 = vpop.f32.mrf.mxu0
        %v2385 = vadd.f32 0.0, %v2384
        %v2386 = vpop.f32.mrf.mxu0
        %2387 = vmatprep.mubr.bf16.mxu0 0
        %2388 = vmatmul.mubr.bf16.gmra.mxu0 %v2327
        %v2389 = vpop.f32.mrf.mxu0
        %v2390 = vadd.f32 0.0, %v2389
        %v2391 = vpop.f32.mrf.mxu0
        %v2392 = vpop.f32.mrf.mxu0
        %v2393 = vadd.f32 0.0, %v2392
        %v2394 = vpop.f32.mrf.mxu0
        %2395 = vmatprep.mubr.bf16.mxu0 0
        %2396 = vmatmul.mubr.bf16.gmra.mxu0 %v2330
        %v2397 = vpop.f32.mrf.mxu0
        %v2398 = vadd.f32 0.0, %v2397
        %v2399 = vpop.f32.mrf.mxu0
        %v2400 = vpop.f32.mrf.mxu0
        %v2401 = vadd.f32 0.0, %v2400
        %v2402 = vpop.f32.mrf.mxu0
        %2403 = vmatprep.mubr.bf16.mxu0 0
        %2404 = vmatmul.mubr.bf16.gmra.mxu0 %v2333
        %v2405 = vpop.f32.mrf.mxu0
        %v2406 = vadd.f32 0.0, %v2405
        %v2407 = vpop.f32.mrf.mxu0
        %v2408 = vpop.f32.mrf.mxu0
        %v2409 = vadd.f32 0.0, %v2408
        %v2410 = vpop.f32.mrf.mxu0
        %2411 = vdwg.mxu0
        %v2412 = vsel %vm2302, %v2382, -1e+30
        %v2413 = vsel %vm2303, %v2385, -1e+30
        %v2414 = vsel %vm2304, %v2390, -1e+30
        %v2415 = vsel %vm2305, %v2393, -1e+30
        %v2416 = vsel %vm2306, %v2398, -1e+30
        %v2417 = vsel %vm2307, %v2401, -1e+30
        %v2418 = vsel %vm2308, %v2406, -1e+30
        %v2419 = vsel %vm2309, %v2409, -1e+30
        %v2420 = vsel %vm2322, %v2412, -inf
        %2421 = vmax.xlane.f32.xlu0 %v2420
        %v2422 = vpop.xlane.xlu0 %2421
        %v2423 = vsel %vm2322, %v2413, -inf
        %2424 = vmax.xlane.f32.xlu0 %v2423
        %v2425 = vpop.xlane.xlu0 %2424
        %v2426 = vsel %vm2322, %v2414, -inf
        %2427 = vmax.xlane.f32.xlu0 %v2426
        %v2428 = vpop.xlane.xlu0 %2427
        %v2429 = vsel %vm2322, %v2415, -inf
        %2430 = vmax.xlane.f32.xlu0 %v2429
        %v2431 = vpop.xlane.xlu0 %2430
        %v2432 = vsel %vm2322, %v2416, -inf
        %2433 = vmax.xlane.f32.xlu0 %v2432
        %v2434 = vpop.xlane.xlu0 %2433
        %v2435 = vsel %vm2322, %v2417, -inf
        %2436 = vmax.xlane.f32.xlu0 %v2435
        %v2437 = vpop.xlane.xlu0 %2436
        %v2438 = vsel %vm2322, %v2418, -inf
        %2439 = vmax.xlane.f32.xlu0 %v2438
        %v2440 = vpop.xlane.xlu0 %2439
        %v2441 = vsel %vm2322, %v2419, -inf
        %2442 = vmax.xlane.f32.xlu0 %v2441
        %v2443 = vpop.xlane.xlu0 %2442
        %v2444 = vsub.f32 %v2412, %v2422
        %v2445 = vsub.f32 %v2413, %v2425
        %v2446 = vsub.f32 %v2414, %v2428
        %v2447 = vsub.f32 %v2415, %v2431
        %v2448 = vsub.f32 %v2416, %v2434
        %v2449 = vsub.f32 %v2417, %v2437
        %v2450 = vsub.f32 %v2418, %v2440
        %v2451 = vsub.f32 %v2419, %v2443
        %v2452 = vmul.f32 %v2444, 1.442695
        %v2453 = vpow.pop %v2452
        %v2454 = vmul.f32 %v2445, 1.442695
        %v2455 = vpow.pop %v2454
        %v2456 = vmul.f32 %v2446, 1.442695
        %v2457 = vpow.pop %v2456
        %v2458 = vmul.f32 %v2447, 1.442695
        %v2459 = vpow.pop %v2458
        %v2460 = vmul.f32 %v2448, 1.442695
        %v2461 = vpow.pop %v2460
        %v2462 = vmul.f32 %v2449, 1.442695
        %v2463 = vpow.pop %v2462
        %v2464 = vmul.f32 %v2450, 1.442695
        %v2465 = vpow.pop %v2464
        %v2466 = vmul.f32 %v2451, 1.442695
        %v2467 = vpow.pop %v2466
        %v2468 = vsel %vm2322, %v2453, 0.0
        %2469 = vadd.xlane.f32.xlu0 %v2468
        %v2470 = vpop.xlane.xlu0 %2469
        %v2471 = vsel %vm2322, %v2455, 0.0
        %2472 = vadd.xlane.f32.xlu0 %v2471
        %v2473 = vpop.xlane.xlu0 %2472
        %v2474 = vsel %vm2322, %v2457, 0.0
        %2475 = vadd.xlane.f32.xlu0 %v2474
        %v2476 = vpop.xlane.xlu0 %2475
        %v2477 = vsel %vm2322, %v2459, 0.0
        %2478 = vadd.xlane.f32.xlu0 %v2477
        %v2479 = vpop.xlane.xlu0 %2478
        %v2480 = vsel %vm2322, %v2461, 0.0
        %2481 = vadd.xlane.f32.xlu0 %v2480
        %v2482 = vpop.xlane.xlu0 %2481
        %v2483 = vsel %vm2322, %v2463, 0.0
        %2484 = vadd.xlane.f32.xlu0 %v2483
        %v2485 = vpop.xlane.xlu0 %2484
        %v2486 = vsel %vm2322, %v2465, 0.0
        %2487 = vadd.xlane.f32.xlu0 %v2486
        %v2488 = vpop.xlane.xlu0 %2487
        %v2489 = vsel %vm2322, %v2467, 0.0
        %2490 = vadd.xlane.f32.xlu0 %v2489
        %v2491 = vpop.xlane.xlu0 %2490
        %v2492 = vrcp.pop %v2470
        %v2493 = vrcp.pop %v2473
        %v2494 = vrcp.pop %v2476
        %v2495 = vrcp.pop %v2479
        %v2496 = vrcp.pop %v2482
        %v2497 = vrcp.pop %v2485
        %v2498 = vrcp.pop %v2488
        %v2499 = vrcp.pop %v2491
        %v2500 = vmul.f32 %v2453, %v2492
        %v2501 = vmul.f32 %v2455, %v2493
        %v2502 = vmul.f32 %v2457, %v2494
        %v2503 = vmul.f32 %v2459, %v2495
        %v2504 = vmul.f32 %v2461, %v2496
        %v2505 = vmul.f32 %v2463, %v2497
        %v2506 = vmul.f32 %v2465, %v2498
        %v2507 = vmul.f32 %v2467, %v2499
        %v2508 = vpack.c.bf16 %v2501, %v2500
        %v2509 = vpack.c.bf16 %v2503, %v2502
        %v2510 = vpack.c.bf16 %v2505, %v2504
        %v2511 = vpack.c.bf16 %v2507, %v2506
        %v2513 = vsel %vm2322, %v2508, 0
        %v2516 = vsel %vm2322, %v2509, 0
        %v2519 = vsel %vm2322, %v2510, 0
        %v2522 = vsel %vm2322, %v2511, 0
        %2524 = vmatprep.subr.bf16.mxu0 0
        %2525 = vmatpush1.bf16.msra.mxu0 0
        %2526 = vmatprep.subr.bf16.mxu0 0
        %2527 = vmatpush1.bf16.msra.mxu0 0
        %2528 = vmatprep.subr.bf16.mxu0 0
        %2529 = vmatpush1.bf16.msra.mxu0 0
        %2530 = vmatprep.subr.bf16.mxu0 0
        %2531 = vmatpush1.bf16.msra.mxu0 0
        %2532 = vmatprep.subr.bf16.mxu0 0
        %2533 = vmatpush1.bf16.msra.mxu0 %v2321
        %2534 = vmatprep.subr.bf16.mxu0 0
        %2535 = vmatpush1.bf16.msra.mxu0 %v2320
        %2536 = vmatprep.subr.bf16.mxu0 0
        %2537 = vmatpush1.bf16.msra.mxu0 %v2319
        %2538 = vmatprep.subr.bf16.mxu0 0
        %2539 = vmatpush1.bf16.msra.mxu0 %v2318
        %2540 = vmatprep.subr.bf16.mxu0 0
        %2541 = vmatpush2.bf16.msra.mxu0 0
        %2542 = vmatprep.subr.bf16.mxu0 0
        %2543 = vmatpush2.bf16.msra.mxu0 0
        %2544 = vmatprep.subr.bf16.mxu0 0
        %2545 = vmatpush2.bf16.msra.mxu0 0
        %2546 = vmatprep.subr.bf16.mxu0 0
        %2547 = vmatpush2.bf16.msra.mxu0 0
        %2548 = vmatprep.subr.bf16.mxu0 0
        %2549 = vmatpush2.bf16.msra.mxu0 0
        %2550 = vmatprep.subr.bf16.mxu0 0
        %2551 = vmatpush2.bf16.msra.mxu0 0
        %2552 = vmatprep.subr.bf16.mxu0 0
        %2553 = vmatpush2.bf16.msra.mxu0 0
        %2554 = vmatprep.subr.bf16.mxu0 0
        %2555 = vmatpush2.bf16.msra.mxu0 0
        %2556 = vmatprep.mubr.bf16.mxu0 0
        %2557 = vmatmul.mubr.bf16.gmra.mxu0 %v2513
        %v2558 = vpop.f32.mrf.mxu0
        %v2559 = vadd.f32 0.0, %v2558
        %v2560 = vpop.f32.mrf.mxu0
        %v2561 = vpop.f32.mrf.mxu0
        %v2562 = vadd.f32 0.0, %v2561
        %v2563 = vpop.f32.mrf.mxu0
        %2564 = vmatprep.mubr.bf16.mxu0 0
        %2565 = vmatmul.mubr.bf16.gmra.mxu0 %v2516
        %v2566 = vpop.f32.mrf.mxu0
        %v2567 = vadd.f32 0.0, %v2566
        %v2568 = vpop.f32.mrf.mxu0
        %v2569 = vpop.f32.mrf.mxu0
        %v2570 = vadd.f32 0.0, %v2569
        %v2571 = vpop.f32.mrf.mxu0
        %2572 = vmatprep.mubr.bf16.mxu0 0
        %2573 = vmatmul.mubr.bf16.gmra.mxu0 %v2519
        %v2574 = vpop.f32.mrf.mxu0
        %v2575 = vadd.f32 0.0, %v2574
        %v2576 = vpop.f32.mrf.mxu0
        %v2577 = vpop.f32.mrf.mxu0
        %v2578 = vadd.f32 0.0, %v2577
        %v2579 = vpop.f32.mrf.mxu0
        %2580 = vmatprep.mubr.bf16.mxu0 0
        %2581 = vmatmul.mubr.bf16.gmra.mxu0 %v2522
        %v2582 = vpop.f32.mrf.mxu0
        %v2583 = vadd.f32 0.0, %v2582
        %v2584 = vpop.f32.mrf.mxu0
        %v2585 = vpop.f32.mrf.mxu0
        %v2586 = vadd.f32 0.0, %v2585
        %v2587 = vpop.f32.mrf.mxu0
        %2588 = vdwg.mxu0
        %2593 = vrot.lane.b32.xlu0 %v2310, 64
        %v2594 = vpop.permute.xlu0 %2593
        %2595 = vrot.lane.b32.xlu0 %v2311, 64
        %v2596 = vpop.permute.xlu0 %2595
        %2597 = vrot.lane.b32.xlu0 %v2312, 64
        %v2598 = vpop.permute.xlu0 %2597
        %2599 = vrot.lane.b32.xlu0 %v2313, 64
        %v2600 = vpop.permute.xlu0 %2599
        %2605 = vrot.lane.b32.xlu0 %v2314, 64
        %v2606 = vpop.permute.xlu0 %2605
        %2607 = vrot.lane.b32.xlu0 %v2315, 64
        %v2608 = vpop.permute.xlu0 %2607
        %2609 = vrot.lane.b32.xlu0 %v2316, 64
        %v2610 = vpop.permute.xlu0 %2609
        %2611 = vrot.lane.b32.xlu0 %v2317, 64
        %v2612 = vpop.permute.xlu0 %2611
        %v2614 = vsel %vm2322, %v2594, 0
        %v2617 = vsel %vm2322, %v2596, 0
        %v2620 = vsel %vm2322, %v2598, 0
        %v2623 = vsel %vm2322, %v2600, 0
        %v2626 = vsel %vm2322, %v2606, 0
        %v2629 = vsel %vm2322, %v2608, 0
        %v2632 = vsel %vm2322, %v2610, 0
        %v2635 = vsel %vm2322, %v2612, 0
        %2637 = vmatprep.subr.bf16.mxu0 0
        %2638 = vmatpush1.bf16.xpose.msra.mxu0 0
        %2639 = vmatprep.subr.bf16.mxu0 0
        %2640 = vmatpush1.bf16.xpose.msra.mxu0 0
        %2641 = vmatprep.subr.bf16.mxu0 0
        %2642 = vmatpush1.bf16.xpose.msra.mxu0 0
        %2643 = vmatprep.subr.bf16.mxu0 0
        %2644 = vmatpush1.bf16.xpose.msra.mxu0 0
        %2645 = vmatprep.subr.bf16.mxu0 0
        %2646 = vmatpush1.bf16.xpose.msra.mxu0 %v2635
        %2647 = vmatprep.subr.bf16.mxu0 0
        %2648 = vmatpush1.bf16.xpose.msra.mxu0 %v2632
        %2649 = vmatprep.subr.bf16.mxu0 0
        %2650 = vmatpush1.bf16.xpose.msra.mxu0 %v2629
        %2651 = vmatprep.subr.bf16.mxu0 0
        %2652 = vmatpush1.bf16.xpose.msra.mxu0 %v2626
        %2653 = vmatprep.subr.bf16.mxu0 0
        %2654 = vmatpush2.bf16.xpose.msra.mxu0 0
        %2655 = vmatprep.subr.bf16.mxu0 0
        %2656 = vmatpush2.bf16.xpose.msra.mxu0 0
        %2657 = vmatprep.subr.bf16.mxu0 0
        %2658 = vmatpush2.bf16.xpose.msra.mxu0 0
        %2659 = vmatprep.subr.bf16.mxu0 0
        %2660 = vmatpush2.bf16.xpose.msra.mxu0 0
        %2661 = vmatprep.subr.bf16.mxu0 0
        %2662 = vmatpush2.bf16.xpose.msra.mxu0 0
        %2663 = vmatprep.subr.bf16.mxu0 0
        %2664 = vmatpush2.bf16.xpose.msra.mxu0 0
        %2665 = vmatprep.subr.bf16.mxu0 0
        %2666 = vmatpush2.bf16.xpose.msra.mxu0 0
        %2667 = vmatprep.subr.bf16.mxu0 0
        %2668 = vmatpush2.bf16.xpose.msra.mxu0 0
        %2669 = vmatprep.mubr.bf16.mxu0 0
        %2670 = vmatmul.mubr.bf16.gmra.mxu0 %v2614
        %v2671 = vpop.f32.mrf.mxu0
        %v2672 = vadd.f32 0.0, %v2671
        %v2673 = vpop.f32.mrf.mxu0
        %v2674 = vpop.f32.mrf.mxu0
        %v2675 = vadd.f32 0.0, %v2674
        %v2676 = vpop.f32.mrf.mxu0
        %2677 = vmatprep.mubr.bf16.mxu0 0
        %2678 = vmatmul.mubr.bf16.gmra.mxu0 %v2617
        %v2679 = vpop.f32.mrf.mxu0
        %v2680 = vadd.f32 0.0, %v2679
        %v2681 = vpop.f32.mrf.mxu0
        %v2682 = vpop.f32.mrf.mxu0
        %v2683 = vadd.f32 0.0, %v2682
        %v2684 = vpop.f32.mrf.mxu0
        %2685 = vmatprep.mubr.bf16.mxu0 0
        %2686 = vmatmul.mubr.bf16.gmra.mxu0 %v2620
        %v2687 = vpop.f32.mrf.mxu0
        %v2688 = vadd.f32 0.0, %v2687
        %v2689 = vpop.f32.mrf.mxu0
        %v2690 = vpop.f32.mrf.mxu0
        %v2691 = vadd.f32 0.0, %v2690
        %v2692 = vpop.f32.mrf.mxu0
        %2693 = vmatprep.mubr.bf16.mxu0 0
        %2694 = vmatmul.mubr.bf16.gmra.mxu0 %v2623
        %v2695 = vpop.f32.mrf.mxu0
        %v2696 = vadd.f32 0.0, %v2695
        %v2697 = vpop.f32.mrf.mxu0
        %v2698 = vpop.f32.mrf.mxu0
        %v2699 = vadd.f32 0.0, %v2698
        %v2700 = vpop.f32.mrf.mxu0
        %2701 = vdwg.mxu0
        %v2702 = vsel %vm2302, %v2672, -1e+30
        %v2703 = vsel %vm2303, %v2675, -1e+30
        %v2704 = vsel %vm2304, %v2680, -1e+30
        %v2705 = vsel %vm2305, %v2683, -1e+30
        %v2706 = vsel %vm2306, %v2688, -1e+30
        %v2707 = vsel %vm2307, %v2691, -1e+30
        %v2708 = vsel %vm2308, %v2696, -1e+30
        %v2709 = vsel %vm2309, %v2699, -1e+30
        %v2710 = vsel %vm2322, %v2702, -inf
        %2711 = vmax.xlane.f32.xlu0 %v2710
        %v2712 = vpop.xlane.xlu0 %2711
        %v2713 = vsel %vm2322, %v2703, -inf
        %2714 = vmax.xlane.f32.xlu0 %v2713
        %v2715 = vpop.xlane.xlu0 %2714
        %v2716 = vsel %vm2322, %v2704, -inf
        %2717 = vmax.xlane.f32.xlu0 %v2716
        %v2718 = vpop.xlane.xlu0 %2717
        %v2719 = vsel %vm2322, %v2705, -inf
        %2720 = vmax.xlane.f32.xlu0 %v2719
        %v2721 = vpop.xlane.xlu0 %2720
        %v2722 = vsel %vm2322, %v2706, -inf
        %2723 = vmax.xlane.f32.xlu0 %v2722
        %v2724 = vpop.xlane.xlu0 %2723
        %v2725 = vsel %vm2322, %v2707, -inf
        %2726 = vmax.xlane.f32.xlu0 %v2725
        %v2727 = vpop.xlane.xlu0 %2726
        %v2728 = vsel %vm2322, %v2708, -inf
        %2729 = vmax.xlane.f32.xlu0 %v2728
        %v2730 = vpop.xlane.xlu0 %2729
        %v2731 = vsel %vm2322, %v2709, -inf
        %2732 = vmax.xlane.f32.xlu0 %v2731
        %v2733 = vpop.xlane.xlu0 %2732
        %v2734 = vsub.f32 %v2702, %v2712
        %v2735 = vsub.f32 %v2703, %v2715
        %v2736 = vsub.f32 %v2704, %v2718
        %v2737 = vsub.f32 %v2705, %v2721
        %v2738 = vsub.f32 %v2706, %v2724
        %v2739 = vsub.f32 %v2707, %v2727
        %v2740 = vsub.f32 %v2708, %v2730
        %v2741 = vsub.f32 %v2709, %v2733
        %v2742 = vmul.f32 %v2734, 1.442695
        %v2743 = vpow.pop %v2742
        %v2744 = vmul.f32 %v2735, 1.442695
        %v2745 = vpow.pop %v2744
        %v2746 = vmul.f32 %v2736, 1.442695
        %v2747 = vpow.pop %v2746
        %v2748 = vmul.f32 %v2737, 1.442695
        %v2749 = vpow.pop %v2748
        %v2750 = vmul.f32 %v2738, 1.442695
        %v2751 = vpow.pop %v2750
        %v2752 = vmul.f32 %v2739, 1.442695
        %v2753 = vpow.pop %v2752
        %v2754 = vmul.f32 %v2740, 1.442695
        %v2755 = vpow.pop %v2754
        %v2756 = vmul.f32 %v2741, 1.442695
        %v2757 = vpow.pop %v2756
        %v2758 = vsel %vm2322, %v2743, 0.0
        %2759 = vadd.xlane.f32.xlu0 %v2758
        %v2760 = vpop.xlane.xlu0 %2759
        %v2761 = vsel %vm2322, %v2745, 0.0
        %2762 = vadd.xlane.f32.xlu0 %v2761
        %v2763 = vpop.xlane.xlu0 %2762
        %v2764 = vsel %vm2322, %v2747, 0.0
        %2765 = vadd.xlane.f32.xlu0 %v2764
        %v2766 = vpop.xlane.xlu0 %2765
        %v2767 = vsel %vm2322, %v2749, 0.0
        %2768 = vadd.xlane.f32.xlu0 %v2767
        %v2769 = vpop.xlane.xlu0 %2768
        %v2770 = vsel %vm2322, %v2751, 0.0
        %2771 = vadd.xlane.f32.xlu0 %v2770
        %v2772 = vpop.xlane.xlu0 %2771
        %v2773 = vsel %vm2322, %v2753, 0.0
        %2774 = vadd.xlane.f32.xlu0 %v2773
        %v2775 = vpop.xlane.xlu0 %2774
        %v2776 = vsel %vm2322, %v2755, 0.0
        %2777 = vadd.xlane.f32.xlu0 %v2776
        %v2778 = vpop.xlane.xlu0 %2777
        %v2779 = vsel %vm2322, %v2757, 0.0
        %2780 = vadd.xlane.f32.xlu0 %v2779
        %v2781 = vpop.xlane.xlu0 %2780
        %v2782 = vrcp.pop %v2760
        %v2783 = vrcp.pop %v2763
        %v2784 = vrcp.pop %v2766
        %v2785 = vrcp.pop %v2769
        %v2786 = vrcp.pop %v2772
        %v2787 = vrcp.pop %v2775
        %v2788 = vrcp.pop %v2778
        %v2789 = vrcp.pop %v2781
        %v2790 = vmul.f32 %v2743, %v2782
        %v2791 = vmul.f32 %v2745, %v2783
        %v2792 = vmul.f32 %v2747, %v2784
        %v2793 = vmul.f32 %v2749, %v2785
        %v2794 = vmul.f32 %v2751, %v2786
        %v2795 = vmul.f32 %v2753, %v2787
        %v2796 = vmul.f32 %v2755, %v2788
        %v2797 = vmul.f32 %v2757, %v2789
        %v2798 = vpack.c.bf16 %v2791, %v2790
        %v2799 = vpack.c.bf16 %v2793, %v2792
        %v2800 = vpack.c.bf16 %v2795, %v2794
        %v2801 = vpack.c.bf16 %v2797, %v2796
        %2806 = vrot.lane.b32.xlu0 %v2318, 64
        %v2807 = vpop.permute.xlu0 %2806
        %2808 = vrot.lane.b32.xlu0 %v2319, 64
        %v2809 = vpop.permute.xlu0 %2808
        %2810 = vrot.lane.b32.xlu0 %v2320, 64
        %v2811 = vpop.permute.xlu0 %2810
        %2812 = vrot.lane.b32.xlu0 %v2321, 64
        %v2813 = vpop.permute.xlu0 %2812
        %v2819 = vsel %vm2322, %v2798, 0
        %v2822 = vsel %vm2322, %v2799, 0
        %v2825 = vsel %vm2322, %v2800, 0
        %v2828 = vsel %vm2322, %v2801, 0
        %2830 = vmatprep.subr.bf16.mxu0 0
        %2831 = vmatpush1.bf16.msra.mxu0 0
        %2832 = vmatprep.subr.bf16.mxu0 0
        %2833 = vmatpush1.bf16.msra.mxu0 0
        %2834 = vmatprep.subr.bf16.mxu0 0
        %2835 = vmatpush1.bf16.msra.mxu0 0
        %2836 = vmatprep.subr.bf16.mxu0 0
        %2837 = vmatpush1.bf16.msra.mxu0 0
        %2838 = vmatprep.subr.bf16.mxu0 0
        %2839 = vmatpush1.bf16.msra.mxu0 %v2813
        %2840 = vmatprep.subr.bf16.mxu0 0
        %2841 = vmatpush1.bf16.msra.mxu0 %v2811
        %2842 = vmatprep.subr.bf16.mxu0 0
        %2843 = vmatpush1.bf16.msra.mxu0 %v2809
        %2844 = vmatprep.subr.bf16.mxu0 0
        %2845 = vmatpush1.bf16.msra.mxu0 %v2807
        %2846 = vmatprep.subr.bf16.mxu0 0
        %2847 = vmatpush2.bf16.msra.mxu0 0
        %2848 = vmatprep.subr.bf16.mxu0 0
        %2849 = vmatpush2.bf16.msra.mxu0 0
        %2850 = vmatprep.subr.bf16.mxu0 0
        %2851 = vmatpush2.bf16.msra.mxu0 0
        %2852 = vmatprep.subr.bf16.mxu0 0
        %2853 = vmatpush2.bf16.msra.mxu0 0
        %2854 = vmatprep.subr.bf16.mxu0 0
        %2855 = vmatpush2.bf16.msra.mxu0 0
        %2856 = vmatprep.subr.bf16.mxu0 0
        %2857 = vmatpush2.bf16.msra.mxu0 0
        %2858 = vmatprep.subr.bf16.mxu0 0
        %2859 = vmatpush2.bf16.msra.mxu0 0
        %2860 = vmatprep.subr.bf16.mxu0 0
        %2861 = vmatpush2.bf16.msra.mxu0 0
        %2862 = vmatprep.mubr.bf16.mxu0 0
        %2863 = vmatmul.mubr.bf16.gmra.mxu0 %v2819
        %v2864 = vpop.f32.mrf.mxu0
        %v2865 = vadd.f32 0.0, %v2864
        %v2866 = vpop.f32.mrf.mxu0
        %v2867 = vpop.f32.mrf.mxu0
        %v2868 = vadd.f32 0.0, %v2867
        %v2869 = vpop.f32.mrf.mxu0
        %2870 = vmatprep.mubr.bf16.mxu0 0
        %2871 = vmatmul.mubr.bf16.gmra.mxu0 %v2822
        %v2872 = vpop.f32.mrf.mxu0
        %v2873 = vadd.f32 0.0, %v2872
        %v2874 = vpop.f32.mrf.mxu0
        %v2875 = vpop.f32.mrf.mxu0
        %v2876 = vadd.f32 0.0, %v2875
        %v2877 = vpop.f32.mrf.mxu0
        %2878 = vmatprep.mubr.bf16.mxu0 0
        %2879 = vmatmul.mubr.bf16.gmra.mxu0 %v2825
        %v2880 = vpop.f32.mrf.mxu0
        %v2881 = vadd.f32 0.0, %v2880
        %v2882 = vpop.f32.mrf.mxu0
        %v2883 = vpop.f32.mrf.mxu0
        %v2884 = vadd.f32 0.0, %v2883
        %v2885 = vpop.f32.mrf.mxu0
        %2886 = vmatprep.mubr.bf16.mxu0 0
        %2887 = vmatmul.mubr.bf16.gmra.mxu0 %v2828
        %v2888 = vpop.f32.mrf.mxu0
        %v2889 = vadd.f32 0.0, %v2888
        %v2890 = vpop.f32.mrf.mxu0
        %v2891 = vpop.f32.mrf.mxu0
        %v2892 = vadd.f32 0.0, %v2891
        %v2893 = vpop.f32.mrf.mxu0
        %2894 = vdwg.mxu0
        %v2895 = vpack.c.bf16 %v1691, %v1687
        %v2896 = vpack.c.bf16 %v1701, %v1697
        %v2897 = vpack.c.bf16 %v1711, %v1707
        %v2898 = vpack.c.bf16 %v1721, %v1717
        %v2899 = vpack.c.bf16 %v1981, %v1977
        %v2900 = vpack.c.bf16 %v1991, %v1987
        %v2901 = vpack.c.bf16 %v2001, %v1997
        %v2902 = vpack.c.bf16 %v2011, %v2007
        %v2903 = vpack.c.bf16 %v2129, %v2125
        %v2904 = vpack.c.bf16 %v2139, %v2135
        %v2905 = vpack.c.bf16 %v2149, %v2145
        %v2906 = vpack.c.bf16 %v2159, %v2155
        %v2908 = vsel %vm2322, %v2895, 0
        %v2911 = vsel %vm2322, %v2896, 0
        %v2914 = vsel %vm2322, %v2897, 0
        %v2917 = vsel %vm2322, %v2898, 0
        %v2920 = vsel %vm2322, %v2899, 0
        %v2923 = vsel %vm2322, %v2900, 0
        %v2926 = vsel %vm2322, %v2901, 0
        %v2929 = vsel %vm2322, %v2902, 0
        %2931 = vmatprep.subr.bf16.mxu0 0
        %2932 = vmatpush1.bf16.xpose.msra.mxu0 0
        %2933 = vmatprep.subr.bf16.mxu0 0
        %2934 = vmatpush1.bf16.xpose.msra.mxu0 0
        %2935 = vmatprep.subr.bf16.mxu0 0
        %2936 = vmatpush1.bf16.xpose.msra.mxu0 0
        %2937 = vmatprep.subr.bf16.mxu0 0
        %2938 = vmatpush1.bf16.xpose.msra.mxu0 0
        %2939 = vmatprep.subr.bf16.mxu0 0
        %2940 = vmatpush1.bf16.xpose.msra.mxu0 %v2929
        %2941 = vmatprep.subr.bf16.mxu0 0
        %2942 = vmatpush1.bf16.xpose.msra.mxu0 %v2926
        %2943 = vmatprep.subr.bf16.mxu0 0
        %2944 = vmatpush1.bf16.xpose.msra.mxu0 %v2923
        %2945 = vmatprep.subr.bf16.mxu0 0
        %2946 = vmatpush1.bf16.xpose.msra.mxu0 %v2920
        %2947 = vmatprep.subr.bf16.mxu0 0
        %2948 = vmatpush2.bf16.xpose.msra.mxu0 0
        %2949 = vmatprep.subr.bf16.mxu0 0
        %2950 = vmatpush2.bf16.xpose.msra.mxu0 0
        %2951 = vmatprep.subr.bf16.mxu0 0
        %2952 = vmatpush2.bf16.xpose.msra.mxu0 0
        %2953 = vmatprep.subr.bf16.mxu0 0
        %2954 = vmatpush2.bf16.xpose.msra.mxu0 0
        %2955 = vmatprep.subr.bf16.mxu0 0
        %2956 = vmatpush2.bf16.xpose.msra.mxu0 0
        %2957 = vmatprep.subr.bf16.mxu0 0
        %2958 = vmatpush2.bf16.xpose.msra.mxu0 0
        %2959 = vmatprep.subr.bf16.mxu0 0
        %2960 = vmatpush2.bf16.xpose.msra.mxu0 0
        %2961 = vmatprep.subr.bf16.mxu0 0
        %2962 = vmatpush2.bf16.xpose.msra.mxu0 0
        %2963 = vmatprep.mubr.bf16.mxu0 0
        %2964 = vmatmul.mubr.bf16.gmra.mxu0 %v2908
        %v2965 = vpop.f32.mrf.mxu0
        %v2966 = vadd.f32 0.0, %v2965
        %v2967 = vpop.f32.mrf.mxu0
        %v2968 = vpop.f32.mrf.mxu0
        %v2969 = vadd.f32 0.0, %v2968
        %v2970 = vpop.f32.mrf.mxu0
        %2971 = vmatprep.mubr.bf16.mxu0 0
        %2972 = vmatmul.mubr.bf16.gmra.mxu0 %v2911
        %v2973 = vpop.f32.mrf.mxu0
        %v2974 = vadd.f32 0.0, %v2973
        %v2975 = vpop.f32.mrf.mxu0
        %v2976 = vpop.f32.mrf.mxu0
        %v2977 = vadd.f32 0.0, %v2976
        %v2978 = vpop.f32.mrf.mxu0
        %2979 = vmatprep.mubr.bf16.mxu0 0
        %2980 = vmatmul.mubr.bf16.gmra.mxu0 %v2914
        %v2981 = vpop.f32.mrf.mxu0
        %v2982 = vadd.f32 0.0, %v2981
        %v2983 = vpop.f32.mrf.mxu0
        %v2984 = vpop.f32.mrf.mxu0
        %v2985 = vadd.f32 0.0, %v2984
        %v2986 = vpop.f32.mrf.mxu0
        %2987 = vmatprep.mubr.bf16.mxu0 0
        %2988 = vmatmul.mubr.bf16.gmra.mxu0 %v2917
        %v2989 = vpop.f32.mrf.mxu0
        %v2990 = vadd.f32 0.0, %v2989
        %v2991 = vpop.f32.mrf.mxu0
        %v2992 = vpop.f32.mrf.mxu0
        %v2993 = vadd.f32 0.0, %v2992
        %v2994 = vpop.f32.mrf.mxu0
        %2995 = vdwg.mxu0
        %v2996 = vsel %vm2302, %v2966, -1e+30
        %v2997 = vsel %vm2303, %v2969, -1e+30
        %v2998 = vsel %vm2304, %v2974, -1e+30
        %v2999 = vsel %vm2305, %v2977, -1e+30
        %v3000 = vsel %vm2306, %v2982, -1e+30
        %v3001 = vsel %vm2307, %v2985, -1e+30
        %v3002 = vsel %vm2308, %v2990, -1e+30
        %v3003 = vsel %vm2309, %v2993, -1e+30
        %v3004 = vsel %vm2322, %v2996, -inf
        %3005 = vmax.xlane.f32.xlu0 %v3004
        %v3006 = vpop.xlane.xlu0 %3005
        %v3007 = vsel %vm2322, %v2997, -inf
        %3008 = vmax.xlane.f32.xlu0 %v3007
        %v3009 = vpop.xlane.xlu0 %3008
        %v3010 = vsel %vm2322, %v2998, -inf
        %3011 = vmax.xlane.f32.xlu0 %v3010
        %v3012 = vpop.xlane.xlu0 %3011
        %v3013 = vsel %vm2322, %v2999, -inf
        %3014 = vmax.xlane.f32.xlu0 %v3013
        %v3015 = vpop.xlane.xlu0 %3014
        %v3016 = vsel %vm2322, %v3000, -inf
        %3017 = vmax.xlane.f32.xlu0 %v3016
        %v3018 = vpop.xlane.xlu0 %3017
        %v3019 = vsel %vm2322, %v3001, -inf
        %3020 = vmax.xlane.f32.xlu0 %v3019
        %v3021 = vpop.xlane.xlu0 %3020
        %v3022 = vsel %vm2322, %v3002, -inf
        %3023 = vmax.xlane.f32.xlu0 %v3022
        %v3024 = vpop.xlane.xlu0 %3023
        %v3025 = vsel %vm2322, %v3003, -inf
        %3026 = vmax.xlane.f32.xlu0 %v3025
        %v3027 = vpop.xlane.xlu0 %3026
        %v3028 = vsub.f32 %v2996, %v3006
        %v3029 = vsub.f32 %v2997, %v3009
        %v3030 = vsub.f32 %v2998, %v3012
        %v3031 = vsub.f32 %v2999, %v3015
        %v3032 = vsub.f32 %v3000, %v3018
        %v3033 = vsub.f32 %v3001, %v3021
        %v3034 = vsub.f32 %v3002, %v3024
        %v3035 = vsub.f32 %v3003, %v3027
        %v3036 = vmul.f32 %v3028, 1.442695
        %v3037 = vpow.pop %v3036
        %v3038 = vmul.f32 %v3029, 1.442695
        %v3039 = vpow.pop %v3038
        %v3040 = vmul.f32 %v3030, 1.442695
        %v3041 = vpow.pop %v3040
        %v3042 = vmul.f32 %v3031, 1.442695
        %v3043 = vpow.pop %v3042
        %v3044 = vmul.f32 %v3032, 1.442695
        %v3045 = vpow.pop %v3044
        %v3046 = vmul.f32 %v3033, 1.442695
        %v3047 = vpow.pop %v3046
        %v3048 = vmul.f32 %v3034, 1.442695
        %v3049 = vpow.pop %v3048
        %v3050 = vmul.f32 %v3035, 1.442695
        %v3051 = vpow.pop %v3050
        %v3052 = vsel %vm2322, %v3037, 0.0
        %3053 = vadd.xlane.f32.xlu0 %v3052
        %v3054 = vpop.xlane.xlu0 %3053
        %v3055 = vsel %vm2322, %v3039, 0.0
        %3056 = vadd.xlane.f32.xlu0 %v3055
        %v3057 = vpop.xlane.xlu0 %3056
        %v3058 = vsel %vm2322, %v3041, 0.0
        %3059 = vadd.xlane.f32.xlu0 %v3058
        %v3060 = vpop.xlane.xlu0 %3059
        %v3061 = vsel %vm2322, %v3043, 0.0
        %3062 = vadd.xlane.f32.xlu0 %v3061
        %v3063 = vpop.xlane.xlu0 %3062
        %v3064 = vsel %vm2322, %v3045, 0.0
        %3065 = vadd.xlane.f32.xlu0 %v3064
        %v3066 = vpop.xlane.xlu0 %3065
        %v3067 = vsel %vm2322, %v3047, 0.0
        %3068 = vadd.xlane.f32.xlu0 %v3067
        %v3069 = vpop.xlane.xlu0 %3068
        %v3070 = vsel %vm2322, %v3049, 0.0
        %3071 = vadd.xlane.f32.xlu0 %v3070
        %v3072 = vpop.xlane.xlu0 %3071
        %v3073 = vsel %vm2322, %v3051, 0.0
        %3074 = vadd.xlane.f32.xlu0 %v3073
        %v3075 = vpop.xlane.xlu0 %3074
        %v3076 = vrcp.pop %v3054
        %v3077 = vrcp.pop %v3057
        %v3078 = vrcp.pop %v3060
        %v3079 = vrcp.pop %v3063
        %v3080 = vrcp.pop %v3066
        %v3081 = vrcp.pop %v3069
        %v3082 = vrcp.pop %v3072
        %v3083 = vrcp.pop %v3075
        %v3084 = vmul.f32 %v3037, %v3076
        %v3085 = vmul.f32 %v3039, %v3077
        %v3086 = vmul.f32 %v3041, %v3078
        %v3087 = vmul.f32 %v3043, %v3079
        %v3088 = vmul.f32 %v3045, %v3080
        %v3089 = vmul.f32 %v3047, %v3081
        %v3090 = vmul.f32 %v3049, %v3082
        %v3091 = vmul.f32 %v3051, %v3083
        %v3092 = vpack.c.bf16 %v3085, %v3084
        %v3093 = vpack.c.bf16 %v3087, %v3086
        %v3094 = vpack.c.bf16 %v3089, %v3088
        %v3095 = vpack.c.bf16 %v3091, %v3090
        %v3097 = vsel %vm2322, %v3092, 0
        %v3100 = vsel %vm2322, %v3093, 0
        %v3103 = vsel %vm2322, %v3094, 0
        %v3106 = vsel %vm2322, %v3095, 0
        %3108 = vmatprep.subr.bf16.mxu0 0
        %3109 = vmatpush1.bf16.msra.mxu0 0
        %3110 = vmatprep.subr.bf16.mxu0 0
        %3111 = vmatpush1.bf16.msra.mxu0 0
        %3112 = vmatprep.subr.bf16.mxu0 0
        %3113 = vmatpush1.bf16.msra.mxu0 0
        %3114 = vmatprep.subr.bf16.mxu0 0
        %3115 = vmatpush1.bf16.msra.mxu0 0
        %3116 = vmatprep.subr.bf16.mxu0 0
        %3117 = vmatpush1.bf16.msra.mxu0 %v2906
        %3118 = vmatprep.subr.bf16.mxu0 0
        %3119 = vmatpush1.bf16.msra.mxu0 %v2905
        %3120 = vmatprep.subr.bf16.mxu0 0
        %3121 = vmatpush1.bf16.msra.mxu0 %v2904
        %3122 = vmatprep.subr.bf16.mxu0 0
        %3123 = vmatpush1.bf16.msra.mxu0 %v2903
        %3124 = vmatprep.subr.bf16.mxu0 0
        %3125 = vmatpush2.bf16.msra.mxu0 0
        %3126 = vmatprep.subr.bf16.mxu0 0
        %3127 = vmatpush2.bf16.msra.mxu0 0
        %3128 = vmatprep.subr.bf16.mxu0 0
        %3129 = vmatpush2.bf16.msra.mxu0 0
        %3130 = vmatprep.subr.bf16.mxu0 0
        %3131 = vmatpush2.bf16.msra.mxu0 0
        %3132 = vmatprep.subr.bf16.mxu0 0
        %3133 = vmatpush2.bf16.msra.mxu0 0
        %3134 = vmatprep.subr.bf16.mxu0 0
        %3135 = vmatpush2.bf16.msra.mxu0 0
        %3136 = vmatprep.subr.bf16.mxu0 0
        %3137 = vmatpush2.bf16.msra.mxu0 0
        %3138 = vmatprep.subr.bf16.mxu0 0
        %3139 = vmatpush2.bf16.msra.mxu0 0
        %3140 = vmatprep.mubr.bf16.mxu0 0
        %3141 = vmatmul.mubr.bf16.gmra.mxu0 %v3097
        %v3142 = vpop.f32.mrf.mxu0
        %v3143 = vadd.f32 0.0, %v3142
        %v3144 = vpop.f32.mrf.mxu0
        %v3145 = vpop.f32.mrf.mxu0
        %v3146 = vadd.f32 0.0, %v3145
        %v3147 = vpop.f32.mrf.mxu0
        %3148 = vmatprep.mubr.bf16.mxu0 0
        %3149 = vmatmul.mubr.bf16.gmra.mxu0 %v3100
        %v3150 = vpop.f32.mrf.mxu0
        %v3151 = vadd.f32 0.0, %v3150
        %v3152 = vpop.f32.mrf.mxu0
        %v3153 = vpop.f32.mrf.mxu0
        %v3154 = vadd.f32 0.0, %v3153
        %v3155 = vpop.f32.mrf.mxu0
        %3156 = vmatprep.mubr.bf16.mxu0 0
        %3157 = vmatmul.mubr.bf16.gmra.mxu0 %v3103
        %v3158 = vpop.f32.mrf.mxu0
        %v3159 = vadd.f32 0.0, %v3158
        %v3160 = vpop.f32.mrf.mxu0
        %v3161 = vpop.f32.mrf.mxu0
        %v3162 = vadd.f32 0.0, %v3161
        %v3163 = vpop.f32.mrf.mxu0
        %3164 = vmatprep.mubr.bf16.mxu0 0
        %3165 = vmatmul.mubr.bf16.gmra.mxu0 %v3106
        %v3166 = vpop.f32.mrf.mxu0
        %v3167 = vadd.f32 0.0, %v3166
        %v3168 = vpop.f32.mrf.mxu0
        %v3169 = vpop.f32.mrf.mxu0
        %v3170 = vadd.f32 0.0, %v3169
        %v3171 = vpop.f32.mrf.mxu0
        %3172 = vdwg.mxu0
        %3177 = vrot.lane.b32.xlu0 %v2895, 64
        %v3178 = vpop.permute.xlu0 %3177
        %3179 = vrot.lane.b32.xlu0 %v2896, 64
        %v3180 = vpop.permute.xlu0 %3179
        %3181 = vrot.lane.b32.xlu0 %v2897, 64
        %v3182 = vpop.permute.xlu0 %3181
        %3183 = vrot.lane.b32.xlu0 %v2898, 64
        %v3184 = vpop.permute.xlu0 %3183
        %3189 = vrot.lane.b32.xlu0 %v2899, 64
        %v3190 = vpop.permute.xlu0 %3189
        %3191 = vrot.lane.b32.xlu0 %v2900, 64
        %v3192 = vpop.permute.xlu0 %3191
        %3193 = vrot.lane.b32.xlu0 %v2901, 64
        %v3194 = vpop.permute.xlu0 %3193
        %3195 = vrot.lane.b32.xlu0 %v2902, 64
        %v3196 = vpop.permute.xlu0 %3195
        %v3198 = vsel %vm2322, %v3178, 0
        %v3201 = vsel %vm2322, %v3180, 0
        %v3204 = vsel %vm2322, %v3182, 0
        %v3207 = vsel %vm2322, %v3184, 0
        %v3210 = vsel %vm2322, %v3190, 0
        %v3213 = vsel %vm2322, %v3192, 0
        %v3216 = vsel %vm2322, %v3194, 0
        %v3219 = vsel %vm2322, %v3196, 0
        %3221 = vmatprep.subr.bf16.mxu0 0
        %3222 = vmatpush1.bf16.xpose.msra.mxu0 0
        %3223 = vmatprep.subr.bf16.mxu0 0
        %3224 = vmatpush1.bf16.xpose.msra.mxu0 0
        %3225 = vmatprep.subr.bf16.mxu0 0
        %3226 = vmatpush1.bf16.xpose.msra.mxu0 0
        %3227 = vmatprep.subr.bf16.mxu0 0
        %3228 = vmatpush1.bf16.xpose.msra.mxu0 0
        %3229 = vmatprep.subr.bf16.mxu0 0
        %3230 = vmatpush1.bf16.xpose.msra.mxu0 %v3219
        %3231 = vmatprep.subr.bf16.mxu0 0
        %3232 = vmatpush1.bf16.xpose.msra.mxu0 %v3216
        %3233 = vmatprep.subr.bf16.mxu0 0
        %3234 = vmatpush1.bf16.xpose.msra.mxu0 %v3213
        %3235 = vmatprep.subr.bf16.mxu0 0
        %3236 = vmatpush1.bf16.xpose.msra.mxu0 %v3210
        %3237 = vmatprep.subr.bf16.mxu0 0
        %3238 = vmatpush2.bf16.xpose.msra.mxu0 0
        %3239 = vmatprep.subr.bf16.mxu0 0
        %3240 = vmatpush2.bf16.xpose.msra.mxu0 0
        %3241 = vmatprep.subr.bf16.mxu0 0
        %3242 = vmatpush2.bf16.xpose.msra.mxu0 0
        %3243 = vmatprep.subr.bf16.mxu0 0
        %3244 = vmatpush2.bf16.xpose.msra.mxu0 0
        %3245 = vmatprep.subr.bf16.mxu0 0
        %3246 = vmatpush2.bf16.xpose.msra.mxu0 0
        %3247 = vmatprep.subr.bf16.mxu0 0
        %3248 = vmatpush2.bf16.xpose.msra.mxu0 0
        %3249 = vmatprep.subr.bf16.mxu0 0
        %3250 = vmatpush2.bf16.xpose.msra.mxu0 0
        %3251 = vmatprep.subr.bf16.mxu0 0
        %3252 = vmatpush2.bf16.xpose.msra.mxu0 0
        %3253 = vmatprep.mubr.bf16.mxu0 0
        %3254 = vmatmul.mubr.bf16.gmra.mxu0 %v3198
        %v3255 = vpop.f32.mrf.mxu0
        %v3256 = vadd.f32 0.0, %v3255
        %v3257 = vpop.f32.mrf.mxu0
        %v3258 = vpop.f32.mrf.mxu0
        %v3259 = vadd.f32 0.0, %v3258
        %v3260 = vpop.f32.mrf.mxu0
        %3261 = vmatprep.mubr.bf16.mxu0 0
        %3262 = vmatmul.mubr.bf16.gmra.mxu0 %v3201
        %v3263 = vpop.f32.mrf.mxu0
        %v3264 = vadd.f32 0.0, %v3263
        %v3265 = vpop.f32.mrf.mxu0
        %v3266 = vpop.f32.mrf.mxu0
        %v3267 = vadd.f32 0.0, %v3266
        %v3268 = vpop.f32.mrf.mxu0
        %3269 = vmatprep.mubr.bf16.mxu0 0
        %3270 = vmatmul.mubr.bf16.gmra.mxu0 %v3204
        %v3271 = vpop.f32.mrf.mxu0
        %v3272 = vadd.f32 0.0, %v3271
        %v3273 = vpop.f32.mrf.mxu0
        %v3274 = vpop.f32.mrf.mxu0
        %v3275 = vadd.f32 0.0, %v3274
        %v3276 = vpop.f32.mrf.mxu0
        %3277 = vmatprep.mubr.bf16.mxu0 0
        %3278 = vmatmul.mubr.bf16.gmra.mxu0 %v3207
        %v3279 = vpop.f32.mrf.mxu0
        %v3280 = vadd.f32 0.0, %v3279
        %v3281 = vpop.f32.mrf.mxu0
        %v3282 = vpop.f32.mrf.mxu0
        %v3283 = vadd.f32 0.0, %v3282
        %v3284 = vpop.f32.mrf.mxu0
        %3285 = vdwg.mxu0
        %v3286 = vsel %vm2302, %v3256, -1e+30
        %v3287 = vsel %vm2303, %v3259, -1e+30
        %v3288 = vsel %vm2304, %v3264, -1e+30
        %v3289 = vsel %vm2305, %v3267, -1e+30
        %v3290 = vsel %vm2306, %v3272, -1e+30
        %v3291 = vsel %vm2307, %v3275, -1e+30
        %v3292 = vsel %vm2308, %v3280, -1e+30
        %v3293 = vsel %vm2309, %v3283, -1e+30
        %v3294 = vsel %vm2322, %v3286, -inf
        %3295 = vmax.xlane.f32.xlu0 %v3294
        %v3296 = vpop.xlane.xlu0 %3295
        %v3297 = vsel %vm2322, %v3287, -inf
        %3298 = vmax.xlane.f32.xlu0 %v3297
        %v3299 = vpop.xlane.xlu0 %3298
        %v3300 = vsel %vm2322, %v3288, -inf
        %3301 = vmax.xlane.f32.xlu0 %v3300
        %v3302 = vpop.xlane.xlu0 %3301
        %v3303 = vsel %vm2322, %v3289, -inf
        %3304 = vmax.xlane.f32.xlu0 %v3303
        %v3305 = vpop.xlane.xlu0 %3304
        %v3306 = vsel %vm2322, %v3290, -inf
        %3307 = vmax.xlane.f32.xlu0 %v3306
        %v3308 = vpop.xlane.xlu0 %3307
        %v3309 = vsel %vm2322, %v3291, -inf
        %3310 = vmax.xlane.f32.xlu0 %v3309
        %v3311 = vpop.xlane.xlu0 %3310
        %v3312 = vsel %vm2322, %v3292, -inf
        %3313 = vmax.xlane.f32.xlu0 %v3312
        %v3314 = vpop.xlane.xlu0 %3313
        %v3315 = vsel %vm2322, %v3293, -inf
        %3316 = vmax.xlane.f32.xlu0 %v3315
        %v3317 = vpop.xlane.xlu0 %3316
        %v3318 = vsub.f32 %v3286, %v3296
        %v3319 = vsub.f32 %v3287, %v3299
        %v3320 = vsub.f32 %v3288, %v3302
        %v3321 = vsub.f32 %v3289, %v3305
        %v3322 = vsub.f32 %v3290, %v3308
        %v3323 = vsub.f32 %v3291, %v3311
        %v3324 = vsub.f32 %v3292, %v3314
        %v3325 = vsub.f32 %v3293, %v3317
        %v3326 = vmul.f32 %v3318, 1.442695
        %v3327 = vpow.pop %v3326
        %v3328 = vmul.f32 %v3319, 1.442695
        %v3329 = vpow.pop %v3328
        %v3330 = vmul.f32 %v3320, 1.442695
        %v3331 = vpow.pop %v3330
        %v3332 = vmul.f32 %v3321, 1.442695
        %v3333 = vpow.pop %v3332
        %v3334 = vmul.f32 %v3322, 1.442695
        %v3335 = vpow.pop %v3334
        %v3336 = vmul.f32 %v3323, 1.442695
        %v3337 = vpow.pop %v3336
        %v3338 = vmul.f32 %v3324, 1.442695
        %v3339 = vpow.pop %v3338
        %v3340 = vmul.f32 %v3325, 1.442695
        %v3341 = vpow.pop %v3340
        %v3342 = vsel %vm2322, %v3327, 0.0
        %3343 = vadd.xlane.f32.xlu0 %v3342
        %v3344 = vpop.xlane.xlu0 %3343
        %v3345 = vsel %vm2322, %v3329, 0.0
        %3346 = vadd.xlane.f32.xlu0 %v3345
        %v3347 = vpop.xlane.xlu0 %3346
        %v3348 = vsel %vm2322, %v3331, 0.0
        %3349 = vadd.xlane.f32.xlu0 %v3348
        %v3350 = vpop.xlane.xlu0 %3349
        %v3351 = vsel %vm2322, %v3333, 0.0
        %3352 = vadd.xlane.f32.xlu0 %v3351
        %v3353 = vpop.xlane.xlu0 %3352
        %v3354 = vsel %vm2322, %v3335, 0.0
        %3355 = vadd.xlane.f32.xlu0 %v3354
        %v3356 = vpop.xlane.xlu0 %3355
        %v3357 = vsel %vm2322, %v3337, 0.0
        %3358 = vadd.xlane.f32.xlu0 %v3357
        %v3359 = vpop.xlane.xlu0 %3358
        %v3360 = vsel %vm2322, %v3339, 0.0
        %3361 = vadd.xlane.f32.xlu0 %v3360
        %v3362 = vpop.xlane.xlu0 %3361
        %v3363 = vsel %vm2322, %v3341, 0.0
        %3364 = vadd.xlane.f32.xlu0 %v3363
        %v3365 = vpop.xlane.xlu0 %3364
        %v3366 = vrcp.pop %v3344
        %v3367 = vrcp.pop %v3347
        %v3368 = vrcp.pop %v3350
        %v3369 = vrcp.pop %v3353
        %v3370 = vrcp.pop %v3356
        %v3371 = vrcp.pop %v3359
        %v3372 = vrcp.pop %v3362
        %v3373 = vrcp.pop %v3365
        %v3374 = vmul.f32 %v3327, %v3366
        %v3375 = vmul.f32 %v3329, %v3367
        %v3376 = vmul.f32 %v3331, %v3368
        %v3377 = vmul.f32 %v3333, %v3369
        %v3378 = vmul.f32 %v3335, %v3370
        %v3379 = vmul.f32 %v3337, %v3371
        %v3380 = vmul.f32 %v3339, %v3372
        %v3381 = vmul.f32 %v3341, %v3373
        %v3382 = vpack.c.bf16 %v3375, %v3374
        %v3383 = vpack.c.bf16 %v3377, %v3376
        %v3384 = vpack.c.bf16 %v3379, %v3378
        %v3385 = vpack.c.bf16 %v3381, %v3380
        %3390 = vrot.lane.b32.xlu0 %v2903, 64
        %v3391 = vpop.permute.xlu0 %3390
        %3392 = vrot.lane.b32.xlu0 %v2904, 64
        %v3393 = vpop.permute.xlu0 %3392
        %3394 = vrot.lane.b32.xlu0 %v2905, 64
        %v3395 = vpop.permute.xlu0 %3394
        %3396 = vrot.lane.b32.xlu0 %v2906, 64
        %v3397 = vpop.permute.xlu0 %3396
        %v3403 = vsel %vm2322, %v3382, 0
        %v3406 = vsel %vm2322, %v3383, 0
        %v3409 = vsel %vm2322, %v3384, 0
        %v3412 = vsel %vm2322, %v3385, 0
        %3414 = vmatprep.subr.bf16.mxu0 0
        %3415 = vmatpush1.bf16.msra.mxu0 0
        %3416 = vmatprep.subr.bf16.mxu0 0
        %3417 = vmatpush1.bf16.msra.mxu0 0
        %3418 = vmatprep.subr.bf16.mxu0 0
        %3419 = vmatpush1.bf16.msra.mxu0 0
        %3420 = vmatprep.subr.bf16.mxu0 0
        %3421 = vmatpush1.bf16.msra.mxu0 0
        %3422 = vmatprep.subr.bf16.mxu0 0
        %3423 = vmatpush1.bf16.msra.mxu0 %v3397
        %3424 = vmatprep.subr.bf16.mxu0 0
        %3425 = vmatpush1.bf16.msra.mxu0 %v3395
        %3426 = vmatprep.subr.bf16.mxu0 0
        %3427 = vmatpush1.bf16.msra.mxu0 %v3393
        %3428 = vmatprep.subr.bf16.mxu0 0
        %3429 = vmatpush1.bf16.msra.mxu0 %v3391
        %3430 = vmatprep.subr.bf16.mxu0 0
        %3431 = vmatpush2.bf16.msra.mxu0 0
        %3432 = vmatprep.subr.bf16.mxu0 0
        %3433 = vmatpush2.bf16.msra.mxu0 0
        %3434 = vmatprep.subr.bf16.mxu0 0
        %3435 = vmatpush2.bf16.msra.mxu0 0
        %3436 = vmatprep.subr.bf16.mxu0 0
        %3437 = vmatpush2.bf16.msra.mxu0 0
        %3438 = vmatprep.subr.bf16.mxu0 0
        %3439 = vmatpush2.bf16.msra.mxu0 0
        %3440 = vmatprep.subr.bf16.mxu0 0
        %3441 = vmatpush2.bf16.msra.mxu0 0
        %3442 = vmatprep.subr.bf16.mxu0 0
        %3443 = vmatpush2.bf16.msra.mxu0 0
        %3444 = vmatprep.subr.bf16.mxu0 0
        %3445 = vmatpush2.bf16.msra.mxu0 0
        %3446 = vmatprep.mubr.bf16.mxu0 0
        %3447 = vmatmul.mubr.bf16.gmra.mxu0 %v3403
        %v3448 = vpop.f32.mrf.mxu0
        %v3449 = vadd.f32 0.0, %v3448
        %v3450 = vpop.f32.mrf.mxu0
        %v3451 = vpop.f32.mrf.mxu0
        %v3452 = vadd.f32 0.0, %v3451
        %v3453 = vpop.f32.mrf.mxu0
        %3454 = vmatprep.mubr.bf16.mxu0 0
        %3455 = vmatmul.mubr.bf16.gmra.mxu0 %v3406
        %v3456 = vpop.f32.mrf.mxu0
        %v3457 = vadd.f32 0.0, %v3456
        %v3458 = vpop.f32.mrf.mxu0
        %v3459 = vpop.f32.mrf.mxu0
        %v3460 = vadd.f32 0.0, %v3459
        %v3461 = vpop.f32.mrf.mxu0
        %3462 = vmatprep.mubr.bf16.mxu0 0
        %3463 = vmatmul.mubr.bf16.gmra.mxu0 %v3409
        %v3464 = vpop.f32.mrf.mxu0
        %v3465 = vadd.f32 0.0, %v3464
        %v3466 = vpop.f32.mrf.mxu0
        %v3467 = vpop.f32.mrf.mxu0
        %v3468 = vadd.f32 0.0, %v3467
        %v3469 = vpop.f32.mrf.mxu0
        %3470 = vmatprep.mubr.bf16.mxu0 0
        %3471 = vmatmul.mubr.bf16.gmra.mxu0 %v3412
        %v3472 = vpop.f32.mrf.mxu0
        %v3473 = vadd.f32 0.0, %v3472
        %v3474 = vpop.f32.mrf.mxu0
        %v3475 = vpop.f32.mrf.mxu0
        %v3476 = vadd.f32 0.0, %v3475
        %v3477 = vpop.f32.mrf.mxu0
        %3478 = vdwg.mxu0
        %v3479 = vpack.c.bf16 %v1835, %v1831
        %v3480 = vpack.c.bf16 %v1845, %v1841
        %v3481 = vpack.c.bf16 %v1855, %v1851
        %v3482 = vpack.c.bf16 %v1865, %v1861
        %v3483 = vpack.c.bf16 %v1983, %v1979
        %v3484 = vpack.c.bf16 %v1993, %v1989
        %v3485 = vpack.c.bf16 %v2003, %v1999
        %v3486 = vpack.c.bf16 %v2013, %v2009
        %v3487 = vpack.c.bf16 %v2264, %v2261
        %v3488 = vpack.c.bf16 %v2272, %v2269
        %v3489 = vpack.c.bf16 %v2280, %v2277
        %v3490 = vpack.c.bf16 %v2288, %v2285
        %v3492 = vsel %vm2322, %v3479, 0
        %v3495 = vsel %vm2322, %v3480, 0
        %v3498 = vsel %vm2322, %v3481, 0
        %v3501 = vsel %vm2322, %v3482, 0
        %v3504 = vsel %vm2322, %v3483, 0
        %v3507 = vsel %vm2322, %v3484, 0
        %v3510 = vsel %vm2322, %v3485, 0
        %v3513 = vsel %vm2322, %v3486, 0
        %3515 = vmatprep.subr.bf16.mxu0 0
        %3516 = vmatpush1.bf16.xpose.msra.mxu0 0
        %3517 = vmatprep.subr.bf16.mxu0 0
        %3518 = vmatpush1.bf16.xpose.msra.mxu0 0
        %3519 = vmatprep.subr.bf16.mxu0 0
        %3520 = vmatpush1.bf16.xpose.msra.mxu0 0
        %3521 = vmatprep.subr.bf16.mxu0 0
        %3522 = vmatpush1.bf16.xpose.msra.mxu0 0
        %3523 = vmatprep.subr.bf16.mxu0 0
        %3524 = vmatpush1.bf16.xpose.msra.mxu0 %v3513
        %3525 = vmatprep.subr.bf16.mxu0 0
        %3526 = vmatpush1.bf16.xpose.msra.mxu0 %v3510
        %3527 = vmatprep.subr.bf16.mxu0 0
        %3528 = vmatpush1.bf16.xpose.msra.mxu0 %v3507
        %3529 = vmatprep.subr.bf16.mxu0 0
        %3530 = vmatpush1.bf16.xpose.msra.mxu0 %v3504
        %3531 = vmatprep.subr.bf16.mxu0 0
        %3532 = vmatpush2.bf16.xpose.msra.mxu0 0
        %3533 = vmatprep.subr.bf16.mxu0 0
        %3534 = vmatpush2.bf16.xpose.msra.mxu0 0
        %3535 = vmatprep.subr.bf16.mxu0 0
        %3536 = vmatpush2.bf16.xpose.msra.mxu0 0
        %3537 = vmatprep.subr.bf16.mxu0 0
        %3538 = vmatpush2.bf16.xpose.msra.mxu0 0
        %3539 = vmatprep.subr.bf16.mxu0 0
        %3540 = vmatpush2.bf16.xpose.msra.mxu0 0
        %3541 = vmatprep.subr.bf16.mxu0 0
        %3542 = vmatpush2.bf16.xpose.msra.mxu0 0
        %3543 = vmatprep.subr.bf16.mxu0 0
        %3544 = vmatpush2.bf16.xpose.msra.mxu0 0
        %3545 = vmatprep.subr.bf16.mxu0 0
        %3546 = vmatpush2.bf16.xpose.msra.mxu0 0
        %3547 = vmatprep.mubr.bf16.mxu0 0
        %3548 = vmatmul.mubr.bf16.gmra.mxu0 %v3492
        %v3549 = vpop.f32.mrf.mxu0
        %v3550 = vadd.f32 0.0, %v3549
        %v3551 = vpop.f32.mrf.mxu0
        %v3552 = vpop.f32.mrf.mxu0
        %v3553 = vadd.f32 0.0, %v3552
        %v3554 = vpop.f32.mrf.mxu0
        %3555 = vmatprep.mubr.bf16.mxu0 0
        %3556 = vmatmul.mubr.bf16.gmra.mxu0 %v3495
        %v3557 = vpop.f32.mrf.mxu0
        %v3558 = vadd.f32 0.0, %v3557
        %v3559 = vpop.f32.mrf.mxu0
        %v3560 = vpop.f32.mrf.mxu0
        %v3561 = vadd.f32 0.0, %v3560
        %v3562 = vpop.f32.mrf.mxu0
        %3563 = vmatprep.mubr.bf16.mxu0 0
        %3564 = vmatmul.mubr.bf16.gmra.mxu0 %v3498
        %v3565 = vpop.f32.mrf.mxu0
        %v3566 = vadd.f32 0.0, %v3565
        %v3567 = vpop.f32.mrf.mxu0
        %v3568 = vpop.f32.mrf.mxu0
        %v3569 = vadd.f32 0.0, %v3568
        %v3570 = vpop.f32.mrf.mxu0
        %3571 = vmatprep.mubr.bf16.mxu0 0
        %3572 = vmatmul.mubr.bf16.gmra.mxu0 %v3501
        %v3573 = vpop.f32.mrf.mxu0
        %v3574 = vadd.f32 0.0, %v3573
        %v3575 = vpop.f32.mrf.mxu0
        %v3576 = vpop.f32.mrf.mxu0
        %v3577 = vadd.f32 0.0, %v3576
        %v3578 = vpop.f32.mrf.mxu0
        %3579 = vdwg.mxu0
        %v3580 = vsel %vm2302, %v3550, -1e+30
        %v3581 = vsel %vm2303, %v3553, -1e+30
        %v3582 = vsel %vm2304, %v3558, -1e+30
        %v3583 = vsel %vm2305, %v3561, -1e+30
        %v3584 = vsel %vm2306, %v3566, -1e+30
        %v3585 = vsel %vm2307, %v3569, -1e+30
        %v3586 = vsel %vm2308, %v3574, -1e+30
        %v3587 = vsel %vm2309, %v3577, -1e+30
        %v3588 = vsel %vm2322, %v3580, -inf
        %3589 = vmax.xlane.f32.xlu0 %v3588
        %v3590 = vpop.xlane.xlu0 %3589
        %v3591 = vsel %vm2322, %v3581, -inf
        %3592 = vmax.xlane.f32.xlu0 %v3591
        %v3593 = vpop.xlane.xlu0 %3592
        %v3594 = vsel %vm2322, %v3582, -inf
        %3595 = vmax.xlane.f32.xlu0 %v3594
        %v3596 = vpop.xlane.xlu0 %3595
        %v3597 = vsel %vm2322, %v3583, -inf
        %3598 = vmax.xlane.f32.xlu0 %v3597
        %v3599 = vpop.xlane.xlu0 %3598
        %v3600 = vsel %vm2322, %v3584, -inf
        %3601 = vmax.xlane.f32.xlu0 %v3600
        %v3602 = vpop.xlane.xlu0 %3601
        %v3603 = vsel %vm2322, %v3585, -inf
        %3604 = vmax.xlane.f32.xlu0 %v3603
        %v3605 = vpop.xlane.xlu0 %3604
        %v3606 = vsel %vm2322, %v3586, -inf
        %3607 = vmax.xlane.f32.xlu0 %v3606
        %v3608 = vpop.xlane.xlu0 %3607
        %v3609 = vsel %vm2322, %v3587, -inf
        %3610 = vmax.xlane.f32.xlu0 %v3609
        %v3611 = vpop.xlane.xlu0 %3610
        %v3612 = vsub.f32 %v3580, %v3590
        %v3613 = vsub.f32 %v3581, %v3593
        %v3614 = vsub.f32 %v3582, %v3596
        %v3615 = vsub.f32 %v3583, %v3599
        %v3616 = vsub.f32 %v3584, %v3602
        %v3617 = vsub.f32 %v3585, %v3605
        %v3618 = vsub.f32 %v3586, %v3608
        %v3619 = vsub.f32 %v3587, %v3611
        %v3620 = vmul.f32 %v3612, 1.442695
        %v3621 = vpow.pop %v3620
        %v3622 = vmul.f32 %v3613, 1.442695
        %v3623 = vpow.pop %v3622
        %v3624 = vmul.f32 %v3614, 1.442695
        %v3625 = vpow.pop %v3624
        %v3626 = vmul.f32 %v3615, 1.442695
        %v3627 = vpow.pop %v3626
        %v3628 = vmul.f32 %v3616, 1.442695
        %v3629 = vpow.pop %v3628
        %v3630 = vmul.f32 %v3617, 1.442695
        %v3631 = vpow.pop %v3630
        %v3632 = vmul.f32 %v3618, 1.442695
        %v3633 = vpow.pop %v3632
        %v3634 = vmul.f32 %v3619, 1.442695
        %v3635 = vpow.pop %v3634
        %v3636 = vsel %vm2322, %v3621, 0.0
        %3637 = vadd.xlane.f32.xlu0 %v3636
        %v3638 = vpop.xlane.xlu0 %3637
        %v3639 = vsel %vm2322, %v3623, 0.0
        %3640 = vadd.xlane.f32.xlu0 %v3639
        %v3641 = vpop.xlane.xlu0 %3640
        %v3642 = vsel %vm2322, %v3625, 0.0
        %3643 = vadd.xlane.f32.xlu0 %v3642
        %v3644 = vpop.xlane.xlu0 %3643
        %v3645 = vsel %vm2322, %v3627, 0.0
        %3646 = vadd.xlane.f32.xlu0 %v3645
        %v3647 = vpop.xlane.xlu0 %3646
        %v3648 = vsel %vm2322, %v3629, 0.0
        %3649 = vadd.xlane.f32.xlu0 %v3648
        %v3650 = vpop.xlane.xlu0 %3649
        %v3651 = vsel %vm2322, %v3631, 0.0
        %3652 = vadd.xlane.f32.xlu0 %v3651
        %v3653 = vpop.xlane.xlu0 %3652
        %v3654 = vsel %vm2322, %v3633, 0.0
        %3655 = vadd.xlane.f32.xlu0 %v3654
        %v3656 = vpop.xlane.xlu0 %3655
        %v3657 = vsel %vm2322, %v3635, 0.0
        %3658 = vadd.xlane.f32.xlu0 %v3657
        %v3659 = vpop.xlane.xlu0 %3658
        %v3660 = vrcp.pop %v3638
        %v3661 = vrcp.pop %v3641
        %v3662 = vrcp.pop %v3644
        %v3663 = vrcp.pop %v3647
        %v3664 = vrcp.pop %v3650
        %v3665 = vrcp.pop %v3653
        %v3666 = vrcp.pop %v3656
        %v3667 = vrcp.pop %v3659
        %v3668 = vmul.f32 %v3621, %v3660
        %v3669 = vmul.f32 %v3623, %v3661
        %v3670 = vmul.f32 %v3625, %v3662
        %v3671 = vmul.f32 %v3627, %v3663
        %v3672 = vmul.f32 %v3629, %v3664
        %v3673 = vmul.f32 %v3631, %v3665
        %v3674 = vmul.f32 %v3633, %v3666
        %v3675 = vmul.f32 %v3635, %v3667
        %v3676 = vpack.c.bf16 %v3669, %v3668
        %v3677 = vpack.c.bf16 %v3671, %v3670
        %v3678 = vpack.c.bf16 %v3673, %v3672
        %v3679 = vpack.c.bf16 %v3675, %v3674
        %v3681 = vsel %vm2322, %v3676, 0
        %v3684 = vsel %vm2322, %v3677, 0
        %v3687 = vsel %vm2322, %v3678, 0
        %v3690 = vsel %vm2322, %v3679, 0
        %3692 = vmatprep.subr.bf16.mxu0 0
        %3693 = vmatpush1.bf16.msra.mxu0 0
        %3694 = vmatprep.subr.bf16.mxu0 0
        %3695 = vmatpush1.bf16.msra.mxu0 0
        %3696 = vmatprep.subr.bf16.mxu0 0
        %3697 = vmatpush1.bf16.msra.mxu0 0
        %3698 = vmatprep.subr.bf16.mxu0 0
        %3699 = vmatpush1.bf16.msra.mxu0 0
        %3700 = vmatprep.subr.bf16.mxu0 0
        %3701 = vmatpush1.bf16.msra.mxu0 %v3490
        %3702 = vmatprep.subr.bf16.mxu0 0
        %3703 = vmatpush1.bf16.msra.mxu0 %v3489
        %3704 = vmatprep.subr.bf16.mxu0 0
        %3705 = vmatpush1.bf16.msra.mxu0 %v3488
        %3706 = vmatprep.subr.bf16.mxu0 0
        %3707 = vmatpush1.bf16.msra.mxu0 %v3487
        %3708 = vmatprep.subr.bf16.mxu0 0
        %3709 = vmatpush2.bf16.msra.mxu0 0
        %3710 = vmatprep.subr.bf16.mxu0 0
        %3711 = vmatpush2.bf16.msra.mxu0 0
        %3712 = vmatprep.subr.bf16.mxu0 0
        %3713 = vmatpush2.bf16.msra.mxu0 0
        %3714 = vmatprep.subr.bf16.mxu0 0
        %3715 = vmatpush2.bf16.msra.mxu0 0
        %3716 = vmatprep.subr.bf16.mxu0 0
        %3717 = vmatpush2.bf16.msra.mxu0 0
        %3718 = vmatprep.subr.bf16.mxu0 0
        %3719 = vmatpush2.bf16.msra.mxu0 0
        %3720 = vmatprep.subr.bf16.mxu0 0
        %3721 = vmatpush2.bf16.msra.mxu0 0
        %3722 = vmatprep.subr.bf16.mxu0 0
        %3723 = vmatpush2.bf16.msra.mxu0 0
        %3724 = vmatprep.mubr.bf16.mxu0 0
        %3725 = vmatmul.mubr.bf16.gmra.mxu0 %v3681
        %v3726 = vpop.f32.mrf.mxu0
        %v3727 = vadd.f32 0.0, %v3726
        %v3728 = vpop.f32.mrf.mxu0
        %v3729 = vpop.f32.mrf.mxu0
        %v3730 = vadd.f32 0.0, %v3729
        %v3731 = vpop.f32.mrf.mxu0
        %3732 = vmatprep.mubr.bf16.mxu0 0
        %3733 = vmatmul.mubr.bf16.gmra.mxu0 %v3684
        %v3734 = vpop.f32.mrf.mxu0
        %v3735 = vadd.f32 0.0, %v3734
        %v3736 = vpop.f32.mrf.mxu0
        %v3737 = vpop.f32.mrf.mxu0
        %v3738 = vadd.f32 0.0, %v3737
        %v3739 = vpop.f32.mrf.mxu0
        %3740 = vmatprep.mubr.bf16.mxu0 0
        %3741 = vmatmul.mubr.bf16.gmra.mxu0 %v3687
        %v3742 = vpop.f32.mrf.mxu0
        %v3743 = vadd.f32 0.0, %v3742
        %v3744 = vpop.f32.mrf.mxu0
        %v3745 = vpop.f32.mrf.mxu0
        %v3746 = vadd.f32 0.0, %v3745
        %v3747 = vpop.f32.mrf.mxu0
        %3748 = vmatprep.mubr.bf16.mxu0 0
        %3749 = vmatmul.mubr.bf16.gmra.mxu0 %v3690
        %v3750 = vpop.f32.mrf.mxu0
        %v3751 = vadd.f32 0.0, %v3750
        %v3752 = vpop.f32.mrf.mxu0
        %v3753 = vpop.f32.mrf.mxu0
        %v3754 = vadd.f32 0.0, %v3753
        %v3755 = vpop.f32.mrf.mxu0
        %3756 = vdwg.mxu0
        %3761 = vrot.lane.b32.xlu0 %v3479, 64
        %v3762 = vpop.permute.xlu0 %3761
        %3763 = vrot.lane.b32.xlu0 %v3480, 64
        %v3764 = vpop.permute.xlu0 %3763
        %3765 = vrot.lane.b32.xlu0 %v3481, 64
        %v3766 = vpop.permute.xlu0 %3765
        %3767 = vrot.lane.b32.xlu0 %v3482, 64
        %v3768 = vpop.permute.xlu0 %3767
        %3773 = vrot.lane.b32.xlu0 %v3483, 64
        %v3774 = vpop.permute.xlu0 %3773
        %3775 = vrot.lane.b32.xlu0 %v3484, 64
        %v3776 = vpop.permute.xlu0 %3775
        %3777 = vrot.lane.b32.xlu0 %v3485, 64
        %v3778 = vpop.permute.xlu0 %3777
        %3779 = vrot.lane.b32.xlu0 %v3486, 64
        %v3780 = vpop.permute.xlu0 %3779
        %v3782 = vsel %vm2322, %v3762, 0
        %v3785 = vsel %vm2322, %v3764, 0
        %v3788 = vsel %vm2322, %v3766, 0
        %v3791 = vsel %vm2322, %v3768, 0
        %v3794 = vsel %vm2322, %v3774, 0
        %v3797 = vsel %vm2322, %v3776, 0
        %v3800 = vsel %vm2322, %v3778, 0
        %v3803 = vsel %vm2322, %v3780, 0
        %3805 = vmatprep.subr.bf16.mxu0 0
        %3806 = vmatpush1.bf16.xpose.msra.mxu0 0
        %3807 = vmatprep.subr.bf16.mxu0 0
        %3808 = vmatpush1.bf16.xpose.msra.mxu0 0
        %3809 = vmatprep.subr.bf16.mxu0 0
        %3810 = vmatpush1.bf16.xpose.msra.mxu0 0
        %3811 = vmatprep.subr.bf16.mxu0 0
        %3812 = vmatpush1.bf16.xpose.msra.mxu0 0
        %3813 = vmatprep.subr.bf16.mxu0 0
        %3814 = vmatpush1.bf16.xpose.msra.mxu0 %v3803
        %3815 = vmatprep.subr.bf16.mxu0 0
        %3816 = vmatpush1.bf16.xpose.msra.mxu0 %v3800
        %3817 = vmatprep.subr.bf16.mxu0 0
        %3818 = vmatpush1.bf16.xpose.msra.mxu0 %v3797
        %3819 = vmatprep.subr.bf16.mxu0 0
        %3820 = vmatpush1.bf16.xpose.msra.mxu0 %v3794
        %3821 = vmatprep.subr.bf16.mxu0 0
        %3822 = vmatpush2.bf16.xpose.msra.mxu0 0
        %3823 = vmatprep.subr.bf16.mxu0 0
        %3824 = vmatpush2.bf16.xpose.msra.mxu0 0
        %3825 = vmatprep.subr.bf16.mxu0 0
        %3826 = vmatpush2.bf16.xpose.msra.mxu0 0
        %3827 = vmatprep.subr.bf16.mxu0 0
        %3828 = vmatpush2.bf16.xpose.msra.mxu0 0
        %3829 = vmatprep.subr.bf16.mxu0 0
        %3830 = vmatpush2.bf16.xpose.msra.mxu0 0
        %3831 = vmatprep.subr.bf16.mxu0 0
        %3832 = vmatpush2.bf16.xpose.msra.mxu0 0
        %3833 = vmatprep.subr.bf16.mxu0 0
        %3834 = vmatpush2.bf16.xpose.msra.mxu0 0
        %3835 = vmatprep.subr.bf16.mxu0 0
        %3836 = vmatpush2.bf16.xpose.msra.mxu0 0
        %3837 = vmatprep.mubr.bf16.mxu0 0
        %3838 = vmatmul.mubr.bf16.gmra.mxu0 %v3782
        %v3839 = vpop.f32.mrf.mxu0
        %v3840 = vadd.f32 0.0, %v3839
        %v3841 = vpop.f32.mrf.mxu0
        %v3842 = vpop.f32.mrf.mxu0
        %v3843 = vadd.f32 0.0, %v3842
        %v3844 = vpop.f32.mrf.mxu0
        %3845 = vmatprep.mubr.bf16.mxu0 0
        %3846 = vmatmul.mubr.bf16.gmra.mxu0 %v3785
        %v3847 = vpop.f32.mrf.mxu0
        %v3848 = vadd.f32 0.0, %v3847
        %v3849 = vpop.f32.mrf.mxu0
        %v3850 = vpop.f32.mrf.mxu0
        %v3851 = vadd.f32 0.0, %v3850
        %v3852 = vpop.f32.mrf.mxu0
        %3853 = vmatprep.mubr.bf16.mxu0 0
        %3854 = vmatmul.mubr.bf16.gmra.mxu0 %v3788
        %v3855 = vpop.f32.mrf.mxu0
        %v3856 = vadd.f32 0.0, %v3855
        %v3857 = vpop.f32.mrf.mxu0
        %v3858 = vpop.f32.mrf.mxu0
        %v3859 = vadd.f32 0.0, %v3858
        %v3860 = vpop.f32.mrf.mxu0
        %3861 = vmatprep.mubr.bf16.mxu0 0
        %3862 = vmatmul.mubr.bf16.gmra.mxu0 %v3791
        %v3863 = vpop.f32.mrf.mxu0
        %v3864 = vadd.f32 0.0, %v3863
        %v3865 = vpop.f32.mrf.mxu0
        %v3866 = vpop.f32.mrf.mxu0
        %v3867 = vadd.f32 0.0, %v3866
        %v3868 = vpop.f32.mrf.mxu0
        %3869 = vdwg.mxu0
        %v3870 = vsel %vm2302, %v3840, -1e+30
        %v3871 = vsel %vm2303, %v3843, -1e+30
        %v3872 = vsel %vm2304, %v3848, -1e+30
        %v3873 = vsel %vm2305, %v3851, -1e+30
        %v3874 = vsel %vm2306, %v3856, -1e+30
        %v3875 = vsel %vm2307, %v3859, -1e+30
        %v3876 = vsel %vm2308, %v3864, -1e+30
        %v3877 = vsel %vm2309, %v3867, -1e+30
        %v3878 = vsel %vm2322, %v3870, -inf
        %3879 = vmax.xlane.f32.xlu0 %v3878
        %v3880 = vpop.xlane.xlu0 %3879
        %v3881 = vsel %vm2322, %v3871, -inf
        %3882 = vmax.xlane.f32.xlu0 %v3881
        %v3883 = vpop.xlane.xlu0 %3882
        %v3884 = vsel %vm2322, %v3872, -inf
        %3885 = vmax.xlane.f32.xlu0 %v3884
        %v3886 = vpop.xlane.xlu0 %3885
        %v3887 = vsel %vm2322, %v3873, -inf
        %3888 = vmax.xlane.f32.xlu0 %v3887
        %v3889 = vpop.xlane.xlu0 %3888
        %v3890 = vsel %vm2322, %v3874, -inf
        %3891 = vmax.xlane.f32.xlu0 %v3890
        %v3892 = vpop.xlane.xlu0 %3891
        %v3893 = vsel %vm2322, %v3875, -inf
        %3894 = vmax.xlane.f32.xlu0 %v3893
        %v3895 = vpop.xlane.xlu0 %3894
        %v3896 = vsel %vm2322, %v3876, -inf
        %3897 = vmax.xlane.f32.xlu0 %v3896
        %v3898 = vpop.xlane.xlu0 %3897
        %v3899 = vsel %vm2322, %v3877, -inf
        %3900 = vmax.xlane.f32.xlu0 %v3899
        %v3901 = vpop.xlane.xlu0 %3900
        %v3902 = vsub.f32 %v3870, %v3880
        %v3903 = vsub.f32 %v3871, %v3883
        %v3904 = vsub.f32 %v3872, %v3886
        %v3905 = vsub.f32 %v3873, %v3889
        %v3906 = vsub.f32 %v3874, %v3892
        %v3907 = vsub.f32 %v3875, %v3895
        %v3908 = vsub.f32 %v3876, %v3898
        %v3909 = vsub.f32 %v3877, %v3901
        %v3910 = vmul.f32 %v3902, 1.442695
        %v3911 = vpow.pop %v3910
        %v3912 = vmul.f32 %v3903, 1.442695
        %v3913 = vpow.pop %v3912
        %v3914 = vmul.f32 %v3904, 1.442695
        %v3915 = vpow.pop %v3914
        %v3916 = vmul.f32 %v3905, 1.442695
        %v3917 = vpow.pop %v3916
        %v3918 = vmul.f32 %v3906, 1.442695
        %v3919 = vpow.pop %v3918
        %v3920 = vmul.f32 %v3907, 1.442695
        %v3921 = vpow.pop %v3920
        %v3922 = vmul.f32 %v3908, 1.442695
        %v3923 = vpow.pop %v3922
        %v3924 = vmul.f32 %v3909, 1.442695
        %v3925 = vpow.pop %v3924
        %v3926 = vsel %vm2322, %v3911, 0.0
        %3927 = vadd.xlane.f32.xlu0 %v3926
        %v3928 = vpop.xlane.xlu0 %3927
        %v3929 = vsel %vm2322, %v3913, 0.0
        %3930 = vadd.xlane.f32.xlu0 %v3929
        %v3931 = vpop.xlane.xlu0 %3930
        %v3932 = vsel %vm2322, %v3915, 0.0
        %3933 = vadd.xlane.f32.xlu0 %v3932
        %v3934 = vpop.xlane.xlu0 %3933
        %v3935 = vsel %vm2322, %v3917, 0.0
        %3936 = vadd.xlane.f32.xlu0 %v3935
        %v3937 = vpop.xlane.xlu0 %3936
        %v3938 = vsel %vm2322, %v3919, 0.0
        %3939 = vadd.xlane.f32.xlu0 %v3938
        %v3940 = vpop.xlane.xlu0 %3939
        %v3941 = vsel %vm2322, %v3921, 0.0
        %3942 = vadd.xlane.f32.xlu0 %v3941
        %v3943 = vpop.xlane.xlu0 %3942
        %v3944 = vsel %vm2322, %v3923, 0.0
        %3945 = vadd.xlane.f32.xlu0 %v3944
        %v3946 = vpop.xlane.xlu0 %3945
        %v3947 = vsel %vm2322, %v3925, 0.0
        %3948 = vadd.xlane.f32.xlu0 %v3947
        %v3949 = vpop.xlane.xlu0 %3948
        %v3950 = vrcp.pop %v3928
        %v3951 = vrcp.pop %v3931
        %v3952 = vrcp.pop %v3934
        %v3953 = vrcp.pop %v3937
        %v3954 = vrcp.pop %v3940
        %v3955 = vrcp.pop %v3943
        %v3956 = vrcp.pop %v3946
        %v3957 = vrcp.pop %v3949
        %v3958 = vmul.f32 %v3911, %v3950
        %v3959 = vmul.f32 %v3913, %v3951
        %v3960 = vmul.f32 %v3915, %v3952
        %v3961 = vmul.f32 %v3917, %v3953
        %v3962 = vmul.f32 %v3919, %v3954
        %v3963 = vmul.f32 %v3921, %v3955
        %v3964 = vmul.f32 %v3923, %v3956
        %v3965 = vmul.f32 %v3925, %v3957
        %v3966 = vpack.c.bf16 %v3959, %v3958
        %v3967 = vpack.c.bf16 %v3961, %v3960
        %v3968 = vpack.c.bf16 %v3963, %v3962
        %v3969 = vpack.c.bf16 %v3965, %v3964
        %3974 = vrot.lane.b32.xlu0 %v3487, 64
        %v3975 = vpop.permute.xlu0 %3974
        %3976 = vrot.lane.b32.xlu0 %v3488, 64
        %v3977 = vpop.permute.xlu0 %3976
        %3978 = vrot.lane.b32.xlu0 %v3489, 64
        %v3979 = vpop.permute.xlu0 %3978
        %3980 = vrot.lane.b32.xlu0 %v3490, 64
        %v3981 = vpop.permute.xlu0 %3980
        %v3987 = vsel %vm2322, %v3966, 0
        %v3990 = vsel %vm2322, %v3967, 0
        %v3993 = vsel %vm2322, %v3968, 0
        %v3996 = vsel %vm2322, %v3969, 0
        %3998 = vmatprep.subr.bf16.mxu0 0
        %3999 = vmatpush1.bf16.msra.mxu0 0
        %4000 = vmatprep.subr.bf16.mxu0 0
        %4001 = vmatpush1.bf16.msra.mxu0 0
        %4002 = vmatprep.subr.bf16.mxu0 0
        %4003 = vmatpush1.bf16.msra.mxu0 0
        %4004 = vmatprep.subr.bf16.mxu0 0
        %4005 = vmatpush1.bf16.msra.mxu0 0
        %4006 = vmatprep.subr.bf16.mxu0 0
        %4007 = vmatpush1.bf16.msra.mxu0 %v3981
        %4008 = vmatprep.subr.bf16.mxu0 0
        %4009 = vmatpush1.bf16.msra.mxu0 %v3979
        %4010 = vmatprep.subr.bf16.mxu0 0
        %4011 = vmatpush1.bf16.msra.mxu0 %v3977
        %4012 = vmatprep.subr.bf16.mxu0 0
        %4013 = vmatpush1.bf16.msra.mxu0 %v3975
        %4014 = vmatprep.subr.bf16.mxu0 0
        %4015 = vmatpush2.bf16.msra.mxu0 0
        %4016 = vmatprep.subr.bf16.mxu0 0
        %4017 = vmatpush2.bf16.msra.mxu0 0
        %4018 = vmatprep.subr.bf16.mxu0 0
        %4019 = vmatpush2.bf16.msra.mxu0 0
        %4020 = vmatprep.subr.bf16.mxu0 0
        %4021 = vmatpush2.bf16.msra.mxu0 0
        %4022 = vmatprep.subr.bf16.mxu0 0
        %4023 = vmatpush2.bf16.msra.mxu0 0
        %4024 = vmatprep.subr.bf16.mxu0 0
        %4025 = vmatpush2.bf16.msra.mxu0 0
        %4026 = vmatprep.subr.bf16.mxu0 0
        %4027 = vmatpush2.bf16.msra.mxu0 0
        %4028 = vmatprep.subr.bf16.mxu0 0
        %4029 = vmatpush2.bf16.msra.mxu0 0
        %4030 = vmatprep.mubr.bf16.mxu0 0
        %4031 = vmatmul.mubr.bf16.gmra.mxu0 %v3987
        %v4032 = vpop.f32.mrf.mxu0
        %v4033 = vadd.f32 0.0, %v4032
        %v4034 = vpop.f32.mrf.mxu0
        %v4035 = vpop.f32.mrf.mxu0
        %v4036 = vadd.f32 0.0, %v4035
        %v4037 = vpop.f32.mrf.mxu0
        %4038 = vmatprep.mubr.bf16.mxu0 0
        %4039 = vmatmul.mubr.bf16.gmra.mxu0 %v3990
        %v4040 = vpop.f32.mrf.mxu0
        %v4041 = vadd.f32 0.0, %v4040
        %v4042 = vpop.f32.mrf.mxu0
        %v4043 = vpop.f32.mrf.mxu0
        %v4044 = vadd.f32 0.0, %v4043
        %v4045 = vpop.f32.mrf.mxu0
        %4046 = vmatprep.mubr.bf16.mxu0 0
        %4047 = vmatmul.mubr.bf16.gmra.mxu0 %v3993
        %v4048 = vpop.f32.mrf.mxu0
        %v4049 = vadd.f32 0.0, %v4048
        %v4050 = vpop.f32.mrf.mxu0
        %v4051 = vpop.f32.mrf.mxu0
        %v4052 = vadd.f32 0.0, %v4051
        %v4053 = vpop.f32.mrf.mxu0
        %4054 = vmatprep.mubr.bf16.mxu0 0
        %4055 = vmatmul.mubr.bf16.gmra.mxu0 %v3996
        %v4056 = vpop.f32.mrf.mxu0
        %v4057 = vadd.f32 0.0, %v4056
        %v4058 = vpop.f32.mrf.mxu0
        %v4059 = vpop.f32.mrf.mxu0
        %v4060 = vadd.f32 0.0, %v4059
        %v4061 = vpop.f32.mrf.mxu0
        %4062 = vdwg.mxu0
        %4071 = vrot.lane.b32.xlu0 %v2865, 64
        %v4072 = vpop.permute.xlu0 %4071
        %4073 = vrot.lane.b32.xlu0 %v2868, 64
        %v4074 = vpop.permute.xlu0 %4073
        %4075 = vrot.lane.b32.xlu0 %v2873, 64
        %v4076 = vpop.permute.xlu0 %4075
        %4077 = vrot.lane.b32.xlu0 %v2876, 64
        %v4078 = vpop.permute.xlu0 %4077
        %4079 = vrot.lane.b32.xlu0 %v2881, 64
        %v4080 = vpop.permute.xlu0 %4079
        %4081 = vrot.lane.b32.xlu0 %v2884, 64
        %v4082 = vpop.permute.xlu0 %4081
        %4083 = vrot.lane.b32.xlu0 %v2889, 64
        %v4084 = vpop.permute.xlu0 %4083
        %4085 = vrot.lane.b32.xlu0 %v2892, 64
        %v4086 = vpop.permute.xlu0 %4085
        %4103 = vrot.lane.b32.xlu0 %v3449, 64
        %v4104 = vpop.permute.xlu0 %4103
        %4105 = vrot.lane.b32.xlu0 %v3452, 64
        %v4106 = vpop.permute.xlu0 %4105
        %4107 = vrot.lane.b32.xlu0 %v3457, 64
        %v4108 = vpop.permute.xlu0 %4107
        %4109 = vrot.lane.b32.xlu0 %v3460, 64
        %v4110 = vpop.permute.xlu0 %4109
        %4111 = vrot.lane.b32.xlu0 %v3465, 64
        %v4112 = vpop.permute.xlu0 %4111
        %4113 = vrot.lane.b32.xlu0 %v3468, 64
        %v4114 = vpop.permute.xlu0 %4113
        %4115 = vrot.lane.b32.xlu0 %v3473, 64
        %v4116 = vpop.permute.xlu0 %4115
        %4117 = vrot.lane.b32.xlu0 %v3476, 64
        %v4118 = vpop.permute.xlu0 %4117
        %4135 = vrot.lane.b32.xlu0 %v4033, 64
        %v4136 = vpop.permute.xlu0 %4135
        %4137 = vrot.lane.b32.xlu0 %v4036, 64
        %v4138 = vpop.permute.xlu0 %4137
        %4139 = vrot.lane.b32.xlu0 %v4041, 64
        %v4140 = vpop.permute.xlu0 %4139
        %4141 = vrot.lane.b32.xlu0 %v4044, 64
        %v4142 = vpop.permute.xlu0 %4141
        %4143 = vrot.lane.b32.xlu0 %v4049, 64
        %v4144 = vpop.permute.xlu0 %4143
        %4145 = vrot.lane.b32.xlu0 %v4052, 64
        %v4146 = vpop.permute.xlu0 %4145
        %4147 = vrot.lane.b32.xlu0 %v4057, 64
        %v4148 = vpop.permute.xlu0 %4147
        %4149 = vrot.lane.b32.xlu0 %v4060, 64
        %v4150 = vpop.permute.xlu0 %4149
        %v4159 = vsel %vm2322, %v2559, %v4072
        %v4160 = vsel %vm2322, %v2562, %v4074
        %v4161 = vsel %vm2322, %v2567, %v4076
        %v4162 = vsel %vm2322, %v2570, %v4078
        %v4163 = vsel %vm2322, %v2575, %v4080
        %v4164 = vsel %vm2322, %v2578, %v4082
        %v4165 = vsel %vm2322, %v2583, %v4084
        %v4166 = vsel %vm2322, %v2586, %v4086
        %v4167 = vsel %vm2322, %v3143, %v4104
        %v4168 = vsel %vm2322, %v3146, %v4106
        %v4169 = vsel %vm2322, %v3151, %v4108
        %v4170 = vsel %vm2322, %v3154, %v4110
        %v4171 = vsel %vm2322, %v3159, %v4112
        %v4172 = vsel %vm2322, %v3162, %v4114
        %v4173 = vsel %vm2322, %v3167, %v4116
        %v4174 = vsel %vm2322, %v3170, %v4118
        %v4175 = vsel %vm2322, %v3727, %v4136
        %v4176 = vsel %vm2322, %v3730, %v4138
        %v4177 = vsel %vm2322, %v3735, %v4140
        %v4178 = vsel %vm2322, %v3738, %v4142
        %v4179 = vsel %vm2322, %v3743, %v4144
        %v4180 = vsel %vm2322, %v3746, %v4146
        %v4181 = vsel %vm2322, %v3751, %v4148
        %v4182 = vsel %vm2322, %v3754, %v4150
        %v4183 = vpack.c.bf16 %v4160, %v4159
        %v4184 = vpack.c.bf16 %v4168, %v4167
        %v4185 = vpack.c.bf16 %v4176, %v4175
        %v4186 = vpack.c.bf16 %v4162, %v4161
        %v4187 = vpack.c.bf16 %v4170, %v4169
        %v4188 = vpack.c.bf16 %v4178, %v4177
        %v4189 = vpack.c.bf16 %v4164, %v4163
        %v4190 = vpack.c.bf16 %v4172, %v4171
        %v4191 = vpack.c.bf16 %v4180, %v4179
        %v4192 = vpack.c.bf16 %v4166, %v4165
        %v4193 = vpack.c.bf16 %v4174, %v4173
        %v4194 = vpack.c.bf16 %v4182, %v4181
        %v4195 = vld [vmem:[%s2] sm:$0xff]
        %v4196 = vld [vmem:[%s2 + $0x8] sm:$0xf]
        %v4197 = vld [vmem:[%s2 + $0xc] sm:$0xff]
        %v4198 = vld [vmem:[%s2 + $0x14] sm:$0xf]
        %v4199 = vld [vmem:[%s2 + $0x18] sm:$0xff]
        %v4200 = vld [vmem:[%s2 + $0x20] sm:$0xf]
        %v4201 = vld [vmem:[%s2 + $0x24] sm:$0xff]
        %v4202 = vld [vmem:[%s2 + $0x2c] sm:$0xf]
        %v4203 = vld [vmem:[%s2 + $0x30] sm:$0xff]
        %v4204 = vld [vmem:[%s2 + $0x38] sm:$0xf]
        %v4205 = vld [vmem:[%s2 + $0x3c] sm:$0xff]
        %v4206 = vld [vmem:[%s2 + $0x44] sm:$0xf]
        %v4207 = vld [vmem:[%s2 + $0x48] sm:$0xff]
        %v4208 = vld [vmem:[%s2 + $0x50] sm:$0xf]
        %v4209 = vld [vmem:[%s2 + $0x54] sm:$0xff]
        %v4210 = vld [vmem:[%s2 + $0x5c] sm:$0xf]
        %v4211 = vld [vmem:[%s2 + $0x60] sm:$0xff]
        %v4212 = vld [vmem:[%s2 + $0x68] sm:$0xf]
        %v4213 = vld [vmem:[%s2 + $0x6c] sm:$0xff]
        %v4214 = vld [vmem:[%s2 + $0x74] sm:$0xf]
        %v4215 = vld [vmem:[%s2 + $0x78] sm:$0xff]
        %v4216 = vld [vmem:[%s2 + $0x80] sm:$0xf]
        %v4217 = vld [vmem:[%s2 + $0x84] sm:$0xff]
        %v4218 = vld [vmem:[%s2 + $0x8c] sm:$0xf]
        %v4219 = vld [vmem:[%s2 + $0x90] sm:$0xff]
        %v4220 = vld [vmem:[%s2 + $0x98] sm:$0xf]
        %v4221 = vld [vmem:[%s2 + $0x9c] sm:$0xff]
        %v4222 = vld [vmem:[%s2 + $0xa4] sm:$0xf]
        %v4223 = vld [vmem:[%s2 + $0xa8] sm:$0xff]
        %v4224 = vld [vmem:[%s2 + $0xb0] sm:$0xf]
        %v4225 = vld [vmem:[%s2 + $0xb4] sm:$0xff]
        %v4226 = vld [vmem:[%s2 + $0xbc] sm:$0xf]
        %v4227 = vld [vmem:[%s2 + $0xc0] sm:$0xff]
        %v4228 = vld [vmem:[%s2 + $0xc8] sm:$0xf]
        %v4229 = vld [vmem:[%s2 + $0xcc] sm:$0xff]
        %v4230 = vld [vmem:[%s2 + $0xd4] sm:$0xf]
        %v4231 = vld [vmem:[%s2 + $0xd8] sm:$0xff]
        %v4232 = vld [vmem:[%s2 + $0xe0] sm:$0xf]
        %v4233 = vld [vmem:[%s2 + $0xe4] sm:$0xff]
        %v4234 = vld [vmem:[%s2 + $0xec] sm:$0xf]
        %v4235 = vld [vmem:[%s2 + $0xf0] sm:$0xff]
        %v4236 = vld [vmem:[%s2 + $0xf8] sm:$0xf]
        %v4237 = vld [vmem:[%s2 + $0xfc] sm:$0xff]
        %v4238 = vld [vmem:[%s2 + $0x104] sm:$0xf]
        %v4239 = vld [vmem:[%s2 + $0x108] sm:$0xff]
        %v4240 = vld [vmem:[%s2 + $0x110] sm:$0xf]
        %v4241 = vld [vmem:[%s2 + $0x114] sm:$0xff]
        %v4242 = vld [vmem:[%s2 + $0x11c] sm:$0xf]
        %v4243 = vld [vmem:[%s2 + $0x120] sm:$0xff]
        %v4244 = vld [vmem:[%s2 + $0x128] sm:$0xf]
        %v4245 = vld [vmem:[%s2 + $0x12c] sm:$0xff]
        %v4246 = vld [vmem:[%s2 + $0x134] sm:$0xf]
        %v4247 = vld [vmem:[%s2 + $0x138] sm:$0xff]
        %v4248 = vld [vmem:[%s2 + $0x140] sm:$0xf]
        %v4249 = vld [vmem:[%s2 + $0x144] sm:$0xff]
        %v4250 = vld [vmem:[%s2 + $0x14c] sm:$0xf]
        %v4251 = vld [vmem:[%s2 + $0x150] sm:$0xff]
        %v4252 = vld [vmem:[%s2 + $0x158] sm:$0xf]
        %v4253 = vld [vmem:[%s2 + $0x15c] sm:$0xff]
        %v4254 = vld [vmem:[%s2 + $0x164] sm:$0xf]
        %v4255 = vld [vmem:[%s2 + $0x168] sm:$0xff]
        %v4256 = vld [vmem:[%s2 + $0x170] sm:$0xf]
        %v4257 = vld [vmem:[%s2 + $0x174] sm:$0xff]
        %v4258 = vld [vmem:[%s2 + $0x17c] sm:$0xf]
        %v4259 = vld [vmem:[%s2 + $0x180] sm:$0xff]
        %v4260 = vld [vmem:[%s2 + $0x188] sm:$0xf]
        %v4261 = vld [vmem:[%s2 + $0x18c] sm:$0xff]
        %v4262 = vld [vmem:[%s2 + $0x194] sm:$0xf]
        %v4263 = vld [vmem:[%s2 + $0x198] sm:$0xff]
        %v4264 = vld [vmem:[%s2 + $0x1a0] sm:$0xf]
        %v4265 = vld [vmem:[%s2 + $0x1a4] sm:$0xff]
        %v4266 = vld [vmem:[%s2 + $0x1ac] sm:$0xf]
        %v4267 = vld [vmem:[%s2 + $0x1b0] sm:$0xff]
        %v4268 = vld [vmem:[%s2 + $0x1b8] sm:$0xf]
        %v4269 = vld [vmem:[%s2 + $0x1bc] sm:$0xff]
        %v4270 = vld [vmem:[%s2 + $0x1c4] sm:$0xf]
        %v4271 = vld [vmem:[%s2 + $0x1c8] sm:$0xff]
        %v4272 = vld [vmem:[%s2 + $0x1d0] sm:$0xf]
        %v4273 = vld [vmem:[%s2 + $0x1d4] sm:$0xff]
        %v4274 = vld [vmem:[%s2 + $0x1dc] sm:$0xf]
        %v4275 = vld [vmem:[%s2 + $0x1e0] sm:$0xff]
        %v4276 = vld [vmem:[%s2 + $0x1e8] sm:$0xf]
        %v4277 = vld [vmem:[%s2 + $0x1ec] sm:$0xff]
        %v4278 = vld [vmem:[%s2 + $0x1f4] sm:$0xf]
        %v4279 = vld [vmem:[%s2 + $0x1f8] sm:$0xff]
        %v4280 = vld [vmem:[%s2 + $0x200] sm:$0xf]
        %v4281 = vld [vmem:[%s2 + $0x204] sm:$0xff]
        %v4282 = vld [vmem:[%s2 + $0x20c] sm:$0xf]
        %v4283 = vld [vmem:[%s2 + $0x210] sm:$0xff]
        %v4284 = vld [vmem:[%s2 + $0x218] sm:$0xf]
        %v4285 = vld [vmem:[%s2 + $0x21c] sm:$0xff]
        %v4286 = vld [vmem:[%s2 + $0x224] sm:$0xf]
        %v4287 = vld [vmem:[%s2 + $0x228] sm:$0xff]
        %v4288 = vld [vmem:[%s2 + $0x230] sm:$0xf]
        %v4289 = vld [vmem:[%s2 + $0x234] sm:$0xff]
        %v4290 = vld [vmem:[%s2 + $0x23c] sm:$0xf]
        %v4291 = vld [vmem:[%s3] sm:$0x7]
        %v4293 = vlaneseq
        %v4294 = vshrl.u32 %v4293, 7
        %v4295 = vsub.s32 0, %v4294
        %v4296 = vrot.slane %v4291, %v4295
        %v4297 = vlaneseq
        %v4298 = vshrl.u32 %v4297, 7
        %v4299 = vsub.s32 1, %v4298
        %v4300 = vrot.slane %v4291, %v4299
        %v4301 = vlaneseq
        %v4302 = vshrl.u32 %v4301, 7
        %v4303 = vsub.s32 2, %v4302
        %v4304 = vrot.slane %v4291, %v4303
        %v4404 = vunpack.c.l.b16 %v4195
        %v4405 = vunpack.c.h.b16 %v4195
        %v4406 = vunpack.c.l.b16 %v4196
        %v4407 = vunpack.c.l.b16 %v4197
        %v4408 = vunpack.c.h.b16 %v4197
        %v4409 = vunpack.c.l.b16 %v4198
        %v4410 = vunpack.c.l.b16 %v4199
        %v4411 = vunpack.c.h.b16 %v4199
        %v4412 = vunpack.c.l.b16 %v4200
        %v4413 = vunpack.c.l.b16 %v4201
        %v4414 = vunpack.c.h.b16 %v4201
        %v4415 = vunpack.c.l.b16 %v4202
        %v4416 = vunpack.c.l.b16 %v4203
        %v4417 = vunpack.c.h.b16 %v4203
        %v4418 = vunpack.c.l.b16 %v4204
        %v4419 = vunpack.c.l.b16 %v4205
        %v4420 = vunpack.c.h.b16 %v4205
        %v4421 = vunpack.c.l.b16 %v4206
        %v4422 = vunpack.c.l.b16 %v4207
        %v4423 = vunpack.c.h.b16 %v4207
        %v4424 = vunpack.c.l.b16 %v4208
        %v4425 = vunpack.c.l.b16 %v4209
        %v4426 = vunpack.c.h.b16 %v4209
        %v4427 = vunpack.c.l.b16 %v4210
        %v4428 = vunpack.c.l.b16 %v4211
        %v4429 = vunpack.c.h.b16 %v4211
        %v4430 = vunpack.c.l.b16 %v4212
        %v4431 = vunpack.c.l.b16 %v4213
        %v4432 = vunpack.c.h.b16 %v4213
        %v4433 = vunpack.c.l.b16 %v4214
        %v4434 = vunpack.c.l.b16 %v4215
        %v4435 = vunpack.c.h.b16 %v4215
        %v4436 = vunpack.c.l.b16 %v4216
        %v4437 = vunpack.c.l.b16 %v4217
        %v4438 = vunpack.c.h.b16 %v4217
        %v4439 = vunpack.c.l.b16 %v4218
        %v4440 = vunpack.c.l.b16 %v4219
        %v4441 = vunpack.c.h.b16 %v4219
        %v4442 = vunpack.c.l.b16 %v4220
        %v4443 = vunpack.c.l.b16 %v4221
        %v4444 = vunpack.c.h.b16 %v4221
        %v4445 = vunpack.c.l.b16 %v4222
        %v4446 = vunpack.c.l.b16 %v4223
        %v4447 = vunpack.c.h.b16 %v4223
        %v4448 = vunpack.c.l.b16 %v4224
        %v4449 = vunpack.c.l.b16 %v4225
        %v4450 = vunpack.c.h.b16 %v4225
        %v4451 = vunpack.c.l.b16 %v4226
        %v4452 = vunpack.c.l.b16 %v4227
        %v4453 = vunpack.c.h.b16 %v4227
        %v4454 = vunpack.c.l.b16 %v4228
        %v4455 = vunpack.c.l.b16 %v4229
        %v4456 = vunpack.c.h.b16 %v4229
        %v4457 = vunpack.c.l.b16 %v4230
        %v4458 = vunpack.c.l.b16 %v4231
        %v4459 = vunpack.c.h.b16 %v4231
        %v4460 = vunpack.c.l.b16 %v4232
        %v4461 = vunpack.c.l.b16 %v4233
        %v4462 = vunpack.c.h.b16 %v4233
        %v4463 = vunpack.c.l.b16 %v4234
        %v4464 = vunpack.c.l.b16 %v4235
        %v4465 = vunpack.c.h.b16 %v4235
        %v4466 = vunpack.c.l.b16 %v4236
        %v4467 = vunpack.c.l.b16 %v4237
        %v4468 = vunpack.c.h.b16 %v4237
        %v4469 = vunpack.c.l.b16 %v4238
        %v4470 = vunpack.c.l.b16 %v4239
        %v4471 = vunpack.c.h.b16 %v4239
        %v4472 = vunpack.c.l.b16 %v4240
        %v4473 = vunpack.c.l.b16 %v4241
        %v4474 = vunpack.c.h.b16 %v4241
        %v4475 = vunpack.c.l.b16 %v4242
        %v4476 = vunpack.c.l.b16 %v4243
        %v4477 = vunpack.c.h.b16 %v4243
        %v4478 = vunpack.c.l.b16 %v4244
        %v4479 = vunpack.c.l.b16 %v4245
        %v4480 = vunpack.c.h.b16 %v4245
        %v4481 = vunpack.c.l.b16 %v4246
        %v4482 = vunpack.c.l.b16 %v4247
        %v4483 = vunpack.c.h.b16 %v4247
        %v4484 = vunpack.c.l.b16 %v4248
        %v4485 = vunpack.c.l.b16 %v4249
        %v4486 = vunpack.c.h.b16 %v4249
        %v4487 = vunpack.c.l.b16 %v4250
        %v4488 = vunpack.c.l.b16 %v4251
        %v4489 = vunpack.c.h.b16 %v4251
        %v4490 = vunpack.c.l.b16 %v4252
        %v4491 = vunpack.c.l.b16 %v4253
        %v4492 = vunpack.c.h.b16 %v4253
        %v4493 = vunpack.c.l.b16 %v4254
        %v4494 = vunpack.c.l.b16 %v4255
        %v4495 = vunpack.c.h.b16 %v4255
        %v4496 = vunpack.c.l.b16 %v4256
        %v4497 = vunpack.c.l.b16 %v4257
        %v4498 = vunpack.c.h.b16 %v4257
        %v4499 = vunpack.c.l.b16 %v4258
        %v4500 = vunpack.c.l.b16 %v4259
        %v4501 = vunpack.c.h.b16 %v4259
        %v4502 = vunpack.c.l.b16 %v4260
        %v4503 = vunpack.c.l.b16 %v4261
        %v4504 = vunpack.c.h.b16 %v4261
        %v4505 = vunpack.c.l.b16 %v4262
        %v4506 = vunpack.c.l.b16 %v4263
        %v4507 = vunpack.c.h.b16 %v4263
        %v4508 = vunpack.c.l.b16 %v4264
        %v4509 = vunpack.c.l.b16 %v4265
        %v4510 = vunpack.c.h.b16 %v4265
        %v4511 = vunpack.c.l.b16 %v4266
        %v4512 = vunpack.c.l.b16 %v4267
        %v4513 = vunpack.c.h.b16 %v4267
        %v4514 = vunpack.c.l.b16 %v4268
        %v4515 = vunpack.c.l.b16 %v4269
        %v4516 = vunpack.c.h.b16 %v4269
        %v4517 = vunpack.c.l.b16 %v4270
        %v4518 = vunpack.c.l.b16 %v4271
        %v4519 = vunpack.c.h.b16 %v4271
        %v4520 = vunpack.c.l.b16 %v4272
        %v4521 = vunpack.c.l.b16 %v4273
        %v4522 = vunpack.c.h.b16 %v4273
        %v4523 = vunpack.c.l.b16 %v4274
        %v4524 = vunpack.c.l.b16 %v4275
        %v4525 = vunpack.c.h.b16 %v4275
        %v4526 = vunpack.c.l.b16 %v4276
        %v4527 = vunpack.c.l.b16 %v4277
        %v4528 = vunpack.c.h.b16 %v4277
        %v4529 = vunpack.c.l.b16 %v4278
        %v4530 = vunpack.c.l.b16 %v4279
        %v4531 = vunpack.c.h.b16 %v4279
        %v4532 = vunpack.c.l.b16 %v4280
        %v4533 = vunpack.c.l.b16 %v4281
        %v4534 = vunpack.c.h.b16 %v4281
        %v4535 = vunpack.c.l.b16 %v4282
        %v4536 = vunpack.c.l.b16 %v4283
        %v4537 = vunpack.c.h.b16 %v4283
        %v4538 = vunpack.c.l.b16 %v4284
        %v4539 = vunpack.c.l.b16 %v4285
        %v4540 = vunpack.c.h.b16 %v4285
        %v4541 = vunpack.c.l.b16 %v4286
        %v4542 = vunpack.c.l.b16 %v4287
        %v4543 = vunpack.c.h.b16 %v4287
        %v4544 = vunpack.c.l.b16 %v4288
        %v4545 = vunpack.c.l.b16 %v4289
        %v4546 = vunpack.c.h.b16 %v4289
        %v4547 = vunpack.c.l.b16 %v4290
        %v4548 = vpack.c.b16 %v4407, %v4404
        %v4549 = vpack.c.b16 %v4408, %v4405
        %v4550 = vpack.c.b16 %v4409, %v4406
        %v4551 = vpack.c.b16 %v4413, %v4410
        %v4552 = vpack.c.b16 %v4414, %v4411
        %v4553 = vpack.c.b16 %v4415, %v4412
        %v4554 = vpack.c.b16 %v4419, %v4416
        %v4555 = vpack.c.b16 %v4420, %v4417
        %v4556 = vpack.c.b16 %v4421, %v4418
        %v4557 = vpack.c.b16 %v4425, %v4422
        %v4558 = vpack.c.b16 %v4426, %v4423
        %v4559 = vpack.c.b16 %v4427, %v4424
        %v4560 = vpack.c.b16 %v4431, %v4428
        %v4561 = vpack.c.b16 %v4432, %v4429
        %v4562 = vpack.c.b16 %v4433, %v4430
        %v4563 = vpack.c.b16 %v4437, %v4434
        %v4564 = vpack.c.b16 %v4438, %v4435
        %v4565 = vpack.c.b16 %v4439, %v4436
        %v4566 = vpack.c.b16 %v4443, %v4440
        %v4567 = vpack.c.b16 %v4444, %v4441
        %v4568 = vpack.c.b16 %v4445, %v4442
        %v4569 = vpack.c.b16 %v4449, %v4446
        %v4570 = vpack.c.b16 %v4450, %v4447
        %v4571 = vpack.c.b16 %v4451, %v4448
        %v4572 = vpack.c.b16 %v4455, %v4452
        %v4573 = vpack.c.b16 %v4456, %v4453
        %v4574 = vpack.c.b16 %v4457, %v4454
        %v4575 = vpack.c.b16 %v4461, %v4458
        %v4576 = vpack.c.b16 %v4462, %v4459
        %v4577 = vpack.c.b16 %v4463, %v4460
        %v4578 = vpack.c.b16 %v4467, %v4464
        %v4579 = vpack.c.b16 %v4468, %v4465
        %v4580 = vpack.c.b16 %v4469, %v4466
        %v4581 = vpack.c.b16 %v4473, %v4470
        %v4582 = vpack.c.b16 %v4474, %v4471
        %v4583 = vpack.c.b16 %v4475, %v4472
        %v4584 = vpack.c.b16 %v4479, %v4476
        %v4585 = vpack.c.b16 %v4480, %v4477
        %v4586 = vpack.c.b16 %v4481, %v4478
        %v4587 = vpack.c.b16 %v4485, %v4482
        %v4588 = vpack.c.b16 %v4486, %v4483
        %v4589 = vpack.c.b16 %v4487, %v4484
        %v4590 = vpack.c.b16 %v4491, %v4488
        %v4591 = vpack.c.b16 %v4492, %v4489
        %v4592 = vpack.c.b16 %v4493, %v4490
        %v4593 = vpack.c.b16 %v4497, %v4494
        %v4594 = vpack.c.b16 %v4498, %v4495
        %v4595 = vpack.c.b16 %v4499, %v4496
        %v4596 = vpack.c.b16 %v4503, %v4500
        %v4597 = vpack.c.b16 %v4504, %v4501
        %v4598 = vpack.c.b16 %v4505, %v4502
        %v4599 = vpack.c.b16 %v4509, %v4506
        %v4600 = vpack.c.b16 %v4510, %v4507
        %v4601 = vpack.c.b16 %v4511, %v4508
        %v4602 = vpack.c.b16 %v4515, %v4512
        %v4603 = vpack.c.b16 %v4516, %v4513
        %v4604 = vpack.c.b16 %v4517, %v4514
        %v4605 = vpack.c.b16 %v4521, %v4518
        %v4606 = vpack.c.b16 %v4522, %v4519
        %v4607 = vpack.c.b16 %v4523, %v4520
        %v4608 = vpack.c.b16 %v4527, %v4524
        %v4609 = vpack.c.b16 %v4528, %v4525
        %v4610 = vpack.c.b16 %v4529, %v4526
        %v4611 = vpack.c.b16 %v4533, %v4530
        %v4612 = vpack.c.b16 %v4534, %v4531
        %v4613 = vpack.c.b16 %v4535, %v4532
        %v4614 = vpack.c.b16 %v4539, %v4536
        %v4615 = vpack.c.b16 %v4540, %v4537
        %v4616 = vpack.c.b16 %v4541, %v4538
        %v4617 = vpack.c.b16 %v4545, %v4542
        %v4618 = vpack.c.b16 %v4546, %v4543
        %v4619 = vpack.c.b16 %v4547, %v4544
        %4692 = vmatprep.subr.bf16.mxu0 %v4570
        %4693 = vmatpush1.bf16.msra.mxu0 %v4569
        %4694 = vmatprep.subr.bf16.mxu0 %v4567
        %4695 = vmatpush1.bf16.msra.mxu0 %v4566
        %4696 = vmatprep.subr.bf16.mxu0 %v4564
        %4697 = vmatpush1.bf16.msra.mxu0 %v4563
        %4698 = vmatprep.subr.bf16.mxu0 %v4561
        %4699 = vmatpush1.bf16.msra.mxu0 %v4560
        %4700 = vmatprep.subr.bf16.mxu0 %v4558
        %4701 = vmatpush1.bf16.msra.mxu0 %v4557
        %4702 = vmatprep.subr.bf16.mxu0 %v4555
        %4703 = vmatpush1.bf16.msra.mxu0 %v4554
        %4704 = vmatprep.subr.bf16.mxu0 %v4552
        %4705 = vmatpush1.bf16.msra.mxu0 %v4551
        %4706 = vmatprep.subr.bf16.mxu0 %v4549
        %4707 = vmatpush1.bf16.msra.mxu0 %v4548
        %4708 = vmatprep.subr.bf16.mxu0 %v4594
        %4709 = vmatpush2.bf16.msra.mxu0 %v4593
        %4710 = vmatprep.subr.bf16.mxu0 %v4591
        %4711 = vmatpush2.bf16.msra.mxu0 %v4590
        %4712 = vmatprep.subr.bf16.mxu0 %v4588
        %4713 = vmatpush2.bf16.msra.mxu0 %v4587
        %4714 = vmatprep.subr.bf16.mxu0 %v4585
        %4715 = vmatpush2.bf16.msra.mxu0 %v4584
        %4716 = vmatprep.subr.bf16.mxu0 %v4582
        %4717 = vmatpush2.bf16.msra.mxu0 %v4581
        %4718 = vmatprep.subr.bf16.mxu0 %v4579
        %4719 = vmatpush2.bf16.msra.mxu0 %v4578
        %4720 = vmatprep.subr.bf16.mxu0 %v4576
        %4721 = vmatpush2.bf16.msra.mxu0 %v4575
        %4722 = vmatprep.subr.bf16.mxu0 %v4573
        %4723 = vmatpush2.bf16.msra.mxu0 %v4572
        %4724 = vmatprep.mubr.bf16.mxu0 %v4184
        %4725 = vmatmul.mubr.bf16.gmra.mxu0 %v4183
        %v4726 = vpop.f32.mrf.mxu0
        %v4727 = vadd.f32 %v4296, %v4726
        %v4728 = vpop.f32.mrf.mxu0
        %v4729 = vadd.f32 %v4300, %v4728
        %v4730 = vpop.f32.mrf.mxu0
        %v4731 = vadd.f32 %v4296, %v4730
        %v4732 = vpop.f32.mrf.mxu0
        %v4733 = vadd.f32 %v4300, %v4732
        %4734 = vmatprep.mubr.bf16.mxu0 %v4187
        %4735 = vmatmul.mubr.bf16.gmra.mxu0 %v4186
        %v4736 = vpop.f32.mrf.mxu0
        %v4737 = vadd.f32 %v4296, %v4736
        %v4738 = vpop.f32.mrf.mxu0
        %v4739 = vadd.f32 %v4300, %v4738
        %v4740 = vpop.f32.mrf.mxu0
        %v4741 = vadd.f32 %v4296, %v4740
        %v4742 = vpop.f32.mrf.mxu0
        %v4743 = vadd.f32 %v4300, %v4742
        %4744 = vmatprep.mubr.bf16.mxu0 %v4190
        %4745 = vmatmul.mubr.bf16.gmra.mxu0 %v4189
        %v4746 = vpop.f32.mrf.mxu0
        %v4747 = vadd.f32 %v4296, %v4746
        %v4748 = vpop.f32.mrf.mxu0
        %v4749 = vadd.f32 %v4300, %v4748
        %v4750 = vpop.f32.mrf.mxu0
        %v4751 = vadd.f32 %v4296, %v4750
        %v4752 = vpop.f32.mrf.mxu0
        %v4753 = vadd.f32 %v4300, %v4752
        %4754 = vmatprep.mubr.bf16.mxu0 %v4193
        %4755 = vmatmul.mubr.bf16.gmra.mxu0 %v4192
        %v4756 = vpop.f32.mrf.mxu0
        %v4757 = vadd.f32 %v4296, %v4756
        %v4758 = vpop.f32.mrf.mxu0
        %v4759 = vadd.f32 %v4300, %v4758
        %v4760 = vpop.f32.mrf.mxu0
        %v4761 = vadd.f32 %v4296, %v4760
        %v4762 = vpop.f32.mrf.mxu0
        %v4763 = vadd.f32 %v4300, %v4762
        %4764 = vdwg.mxu0
        %4765 = vmatprep.subr.bf16.mxu0 %v4618
        %4766 = vmatpush1.bf16.msra.mxu0 %v4617
        %4767 = vmatprep.subr.bf16.mxu0 %v4615
        %4768 = vmatpush1.bf16.msra.mxu0 %v4614
        %4769 = vmatprep.subr.bf16.mxu0 %v4612
        %4770 = vmatpush1.bf16.msra.mxu0 %v4611
        %4771 = vmatprep.subr.bf16.mxu0 %v4609
        %4772 = vmatpush1.bf16.msra.mxu0 %v4608
        %4773 = vmatprep.subr.bf16.mxu0 %v4606
        %4774 = vmatpush1.bf16.msra.mxu0 %v4605
        %4775 = vmatprep.subr.bf16.mxu0 %v4603
        %4776 = vmatpush1.bf16.msra.mxu0 %v4602
        %4777 = vmatprep.subr.bf16.mxu0 %v4600
        %4778 = vmatpush1.bf16.msra.mxu0 %v4599
        %4779 = vmatprep.subr.bf16.mxu0 %v4597
        %4780 = vmatpush1.bf16.msra.mxu0 %v4596
        %4781 = vmatprep.subr.bf16.mxu0 0
        %4782 = vmatpush2.bf16.msra.mxu0 0
        %4783 = vmatprep.subr.bf16.mxu0 0
        %4784 = vmatpush2.bf16.msra.mxu0 0
        %4785 = vmatprep.subr.bf16.mxu0 0
        %4786 = vmatpush2.bf16.msra.mxu0 0
        %4787 = vmatprep.subr.bf16.mxu0 0
        %4788 = vmatpush2.bf16.msra.mxu0 0
        %4789 = vmatprep.subr.bf16.mxu0 0
        %4790 = vmatpush2.bf16.msra.mxu0 0
        %4791 = vmatprep.subr.bf16.mxu0 0
        %4792 = vmatpush2.bf16.msra.mxu0 0
        %4793 = vmatprep.subr.bf16.mxu0 0
        %4794 = vmatpush2.bf16.msra.mxu0 0
        %4795 = vmatprep.subr.bf16.mxu0 0
        %4796 = vmatpush2.bf16.msra.mxu0 0
        %4797 = vmatprep.mubr.bf16.mxu0 0
        %4798 = vmatmul.mubr.bf16.gmra.mxu0 %v4185
        %v4799 = vpop.f32.mrf.mxu0
        %v4800 = vadd.f32 %v4727, %v4799
        %v4801 = vpop.f32.mrf.mxu0
        %v4802 = vadd.f32 %v4729, %v4801
        %v4803 = vpop.f32.mrf.mxu0
        %v4804 = vadd.f32 %v4731, %v4803
        %v4805 = vpop.f32.mrf.mxu0
        %v4806 = vadd.f32 %v4733, %v4805
        %4807 = vmatprep.mubr.bf16.mxu0 0
        %4808 = vmatmul.mubr.bf16.gmra.mxu0 %v4188
        %v4809 = vpop.f32.mrf.mxu0
        %v4810 = vadd.f32 %v4737, %v4809
        %v4811 = vpop.f32.mrf.mxu0
        %v4812 = vadd.f32 %v4739, %v4811
        %v4813 = vpop.f32.mrf.mxu0
        %v4814 = vadd.f32 %v4741, %v4813
        %v4815 = vpop.f32.mrf.mxu0
        %v4816 = vadd.f32 %v4743, %v4815
        %4817 = vmatprep.mubr.bf16.mxu0 0
        %4818 = vmatmul.mubr.bf16.gmra.mxu0 %v4191
        %v4819 = vpop.f32.mrf.mxu0
        %v4820 = vadd.f32 %v4747, %v4819
        %v4821 = vpop.f32.mrf.mxu0
        %v4822 = vadd.f32 %v4749, %v4821
        %v4823 = vpop.f32.mrf.mxu0
        %v4824 = vadd.f32 %v4751, %v4823
        %v4825 = vpop.f32.mrf.mxu0
        %v4826 = vadd.f32 %v4753, %v4825
        %4827 = vmatprep.mubr.bf16.mxu0 0
        %4828 = vmatmul.mubr.bf16.gmra.mxu0 %v4194
        %v4829 = vpop.f32.mrf.mxu0
        %v4830 = vadd.f32 %v4757, %v4829
        %v4831 = vpop.f32.mrf.mxu0
        %v4832 = vadd.f32 %v4759, %v4831
        %v4833 = vpop.f32.mrf.mxu0
        %v4834 = vadd.f32 %v4761, %v4833
        %v4835 = vpop.f32.mrf.mxu0
        %v4836 = vadd.f32 %v4763, %v4835
        %4837 = vdwg.mxu0
        %4838 = vmatprep.subr.bf16.mxu0 0
        %4839 = vmatpush1.bf16.msra.mxu0 %v4571
        %4840 = vmatprep.subr.bf16.mxu0 0
        %4841 = vmatpush1.bf16.msra.mxu0 %v4568
        %4842 = vmatprep.subr.bf16.mxu0 0
        %4843 = vmatpush1.bf16.msra.mxu0 %v4565
        %4844 = vmatprep.subr.bf16.mxu0 0
        %4845 = vmatpush1.bf16.msra.mxu0 %v4562
        %4846 = vmatprep.subr.bf16.mxu0 0
        %4847 = vmatpush1.bf16.msra.mxu0 %v4559
        %4848 = vmatprep.subr.bf16.mxu0 0
        %4849 = vmatpush1.bf16.msra.mxu0 %v4556
        %4850 = vmatprep.subr.bf16.mxu0 0
        %4851 = vmatpush1.bf16.msra.mxu0 %v4553
        %4852 = vmatprep.subr.bf16.mxu0 0
        %4853 = vmatpush1.bf16.msra.mxu0 %v4550
        %4854 = vmatprep.subr.bf16.mxu0 0
        %4855 = vmatpush2.bf16.msra.mxu0 %v4595
        %4856 = vmatprep.subr.bf16.mxu0 0
        %4857 = vmatpush2.bf16.msra.mxu0 %v4592
        %4858 = vmatprep.subr.bf16.mxu0 0
        %4859 = vmatpush2.bf16.msra.mxu0 %v4589
        %4860 = vmatprep.subr.bf16.mxu0 0
        %4861 = vmatpush2.bf16.msra.mxu0 %v4586
        %4862 = vmatprep.subr.bf16.mxu0 0
        %4863 = vmatpush2.bf16.msra.mxu0 %v4583
        %4864 = vmatprep.subr.bf16.mxu0 0
        %4865 = vmatpush2.bf16.msra.mxu0 %v4580
        %4866 = vmatprep.subr.bf16.mxu0 0
        %4867 = vmatpush2.bf16.msra.mxu0 %v4577
        %4868 = vmatprep.subr.bf16.mxu0 0
        %4869 = vmatpush2.bf16.msra.mxu0 %v4574
        %4870 = vmatprep.mubr.bf16.mxu0 %v4184
        %4871 = vmatmul.mubr.bf16.gmra.mxu0 %v4183
        %v4872 = vpop.f32.mrf.mxu0
        %v4873 = vadd.f32 %v4304, %v4872
        %v4874 = vpop.f32.mrf.mxu0
        %v4875 = vpop.f32.mrf.mxu0
        %v4876 = vadd.f32 %v4304, %v4875
        %v4877 = vpop.f32.mrf.mxu0
        %4878 = vmatprep.mubr.bf16.mxu0 %v4187
        %4879 = vmatmul.mubr.bf16.gmra.mxu0 %v4186
        %v4880 = vpop.f32.mrf.mxu0
        %v4881 = vadd.f32 %v4304, %v4880
        %v4882 = vpop.f32.mrf.mxu0
        %v4883 = vpop.f32.mrf.mxu0
        %v4884 = vadd.f32 %v4304, %v4883
        %v4885 = vpop.f32.mrf.mxu0
        %4886 = vmatprep.mubr.bf16.mxu0 %v4190
        %4887 = vmatmul.mubr.bf16.gmra.mxu0 %v4189
        %v4888 = vpop.f32.mrf.mxu0
        %v4889 = vadd.f32 %v4304, %v4888
        %v4890 = vpop.f32.mrf.mxu0
        %v4891 = vpop.f32.mrf.mxu0
        %v4892 = vadd.f32 %v4304, %v4891
        %v4893 = vpop.f32.mrf.mxu0
        %4894 = vmatprep.mubr.bf16.mxu0 %v4193
        %4895 = vmatmul.mubr.bf16.gmra.mxu0 %v4192
        %v4896 = vpop.f32.mrf.mxu0
        %v4897 = vadd.f32 %v4304, %v4896
        %v4898 = vpop.f32.mrf.mxu0
        %v4899 = vpop.f32.mrf.mxu0
        %v4900 = vadd.f32 %v4304, %v4899
        %v4901 = vpop.f32.mrf.mxu0
        %4902 = vdwg.mxu0
        %4903 = vmatprep.subr.bf16.mxu0 0
        %4904 = vmatpush1.bf16.msra.mxu0 %v4619
        %4905 = vmatprep.subr.bf16.mxu0 0
        %4906 = vmatpush1.bf16.msra.mxu0 %v4616
        %4907 = vmatprep.subr.bf16.mxu0 0
        %4908 = vmatpush1.bf16.msra.mxu0 %v4613
        %4909 = vmatprep.subr.bf16.mxu0 0
        %4910 = vmatpush1.bf16.msra.mxu0 %v4610
        %4911 = vmatprep.subr.bf16.mxu0 0
        %4912 = vmatpush1.bf16.msra.mxu0 %v4607
        %4913 = vmatprep.subr.bf16.mxu0 0
        %4914 = vmatpush1.bf16.msra.mxu0 %v4604
        %4915 = vmatprep.subr.bf16.mxu0 0
        %4916 = vmatpush1.bf16.msra.mxu0 %v4601
        %4917 = vmatprep.subr.bf16.mxu0 0
        %4918 = vmatpush1.bf16.msra.mxu0 %v4598
        %4919 = vmatprep.subr.bf16.mxu0 0
        %4920 = vmatpush2.bf16.msra.mxu0 0
        %4921 = vmatprep.subr.bf16.mxu0 0
        %4922 = vmatpush2.bf16.msra.mxu0 0
        %4923 = vmatprep.subr.bf16.mxu0 0
        %4924 = vmatpush2.bf16.msra.mxu0 0
        %4925 = vmatprep.subr.bf16.mxu0 0
        %4926 = vmatpush2.bf16.msra.mxu0 0
        %4927 = vmatprep.subr.bf16.mxu0 0
        %4928 = vmatpush2.bf16.msra.mxu0 0
        %4929 = vmatprep.subr.bf16.mxu0 0
        %4930 = vmatpush2.bf16.msra.mxu0 0
        %4931 = vmatprep.subr.bf16.mxu0 0
        %4932 = vmatpush2.bf16.msra.mxu0 0
        %4933 = vmatprep.subr.bf16.mxu0 0
        %4934 = vmatpush2.bf16.msra.mxu0 0
        %4935 = vmatprep.mubr.bf16.mxu0 0
        %4936 = vmatmul.mubr.bf16.gmra.mxu0 %v4185
        %v4937 = vpop.f32.mrf.mxu0
        %v4938 = vadd.f32 %v4873, %v4937
        %v4939 = vpop.f32.mrf.mxu0
        %v4940 = vpop.f32.mrf.mxu0
        %v4941 = vadd.f32 %v4876, %v4940
        %v4942 = vpop.f32.mrf.mxu0
        %4943 = vmatprep.mubr.bf16.mxu0 0
        %4944 = vmatmul.mubr.bf16.gmra.mxu0 %v4188
        %v4945 = vpop.f32.mrf.mxu0
        %v4946 = vadd.f32 %v4881, %v4945
        %v4947 = vpop.f32.mrf.mxu0
        %v4948 = vpop.f32.mrf.mxu0
        %v4949 = vadd.f32 %v4884, %v4948
        %v4950 = vpop.f32.mrf.mxu0
        %4951 = vmatprep.mubr.bf16.mxu0 0
        %4952 = vmatmul.mubr.bf16.gmra.mxu0 %v4191
        %v4953 = vpop.f32.mrf.mxu0
        %v4954 = vadd.f32 %v4889, %v4953
        %v4955 = vpop.f32.mrf.mxu0
        %v4956 = vpop.f32.mrf.mxu0
        %v4957 = vadd.f32 %v4892, %v4956
        %v4958 = vpop.f32.mrf.mxu0
        %4959 = vmatprep.mubr.bf16.mxu0 0
        %4960 = vmatmul.mubr.bf16.gmra.mxu0 %v4194
        %v4961 = vpop.f32.mrf.mxu0
        %v4962 = vadd.f32 %v4897, %v4961
        %v4963 = vpop.f32.mrf.mxu0
        %v4964 = vpop.f32.mrf.mxu0
        %v4965 = vadd.f32 %v4900, %v4964
        %v4966 = vpop.f32.mrf.mxu0
        %4967 = vdwg.mxu0
        %4968 = vst [vmem:[%s190] sm:$0xff] %v4800
        %4969 = vst [vmem:[%s190 + $0x8] sm:$0xff] %v4802
        %4970 = vst [vmem:[%s190 + $0x10] sm:$0xff] %v4938
        %4971 = vst [vmem:[%s190 + $0x18] sm:$0xff] %v4804
        %4972 = vst [vmem:[%s190 + $0x20] sm:$0xff] %v4806
        %4973 = vst [vmem:[%s190 + $0x28] sm:$0xff] %v4941
        %4974 = vst [vmem:[%s190 + $0x30] sm:$0xff] %v4810
        %4975 = vst [vmem:[%s190 + $0x38] sm:$0xff] %v4812
        %4976 = vst [vmem:[%s190 + $0x40] sm:$0xff] %v4946
        %4977 = vst [vmem:[%s190 + $0x48] sm:$0xff] %v4814
        %4978 = vst [vmem:[%s190 + $0x50] sm:$0xff] %v4816
        %4979 = vst [vmem:[%s190 + $0x58] sm:$0xff] %v4949
        %4980 = vst [vmem:[%s190 + $0x60] sm:$0xff] %v4820
        %4981 = vst [vmem:[%s190 + $0x68] sm:$0xff] %v4822
        %4982 = vst [vmem:[%s190 + $0x70] sm:$0xff] %v4954
        %4983 = vst [vmem:[%s190 + $0x78] sm:$0xff] %v4824
        %4984 = vst [vmem:[%s190 + $0x80] sm:$0xff] %v4826
        %4985 = vst [vmem:[%s190 + $0x88] sm:$0xff] %v4957
        %4986 = vst [vmem:[%s190 + $0x90] sm:$0xff] %v4830
        %4987 = vst [vmem:[%s190 + $0x98] sm:$0xff] %v4832
        %4988 = vst [vmem:[%s190 + $0xa0] sm:$0xff] %v4962
        %4989 = vst [vmem:[%s190 + $0xa8] sm:$0xff] %v4834
        %4990 = vst [vmem:[%s190 + $0xb0] sm:$0xff] %v4836
        %4991 = vst [vmem:[%s190 + $0xb8] sm:$0xff] %v4965
        %s4992 = sand.u32 %s115, 1
        %s4993 = scalar_lea.sflag [#allocation3], %s4992
        %s4994 = sand.u32 %s115, 1
        %s4995 = smul.addr %s4994, 192
        %s4996 = scalar_lea.vmem [#allocation2], %s4995
        // Predicated region
        $region37: #{multi_head_attention.1} parent=35 // pred_check
          %p4997 = pneg %p125
        $region38: #{multi_head_attention.1} parent=35 // pred_check_branch
          %4999 = sbr.rel (%p4997) target = $region40
        $region39: #{multi_head_attention.1} parent=35 // pred_region
          %s5001 = ssub.s32 3072, 3072
          %5002 = vsyncadd %s4993, %s5001
          %s5003 = smul.addr %s18, 24
          %s5004 = smul.addr %s5003, 128
          %s5005 = scalar_lea.hbm %s4, %s5004
          %s5006 = sshll.u32 %s4996, 4
          %s5007 = int_to_ptr.vmem [resolvable:$true] %s5006
          %5012 = dma.vmem_to_hbm [thread:$0]  %s5007, 3072, %s5005, %s4993, 384, 384, 24
        $region40: #{multi_head_attention.1} parent=35 // pred_fallthru
          _
      $region36: #{multi_head_attention.1} parent=5 // pred_fallthru
        _
      %p5013 = scmp.le.s32.totalorder 2, %s13
      // Predicated region
      $region41: #{multi_head_attention.1} parent=5 // pred_check
        %p5014 = pneg %p5013
      $region42: #{multi_head_attention.1} parent=5 // pred_check_branch
        %5016 = sbr.rel (%p5014) target = $region44
      $region43: #{multi_head_attention.1} parent=5 // pred_region
        %s5017 = ssub.s32 %s13, 2
        // Predicated region
        $region45: #{multi_head_attention.1} parent=43 // pred_check
          %p5018 = pneg %p131
        $region46: #{multi_head_attention.1} parent=43 // pred_check_branch
          %5020 = sbr.rel (%p5018) target = $region48
        $region47: #{multi_head_attention.1} parent=43 // pred_region
          %s5021 = sand.u32 %s116, 1
          %s5022 = scalar_lea.sflag [#allocation3], %s5021
          %s5023 = sand.u32 %s116, 1
          %s5024 = smul.addr %s5023, 192
          %s5025 = scalar_lea.vmem [#allocation2], %s5024
          %5026 = dma.done %s5022, 3072
        $region48: #{multi_head_attention.1} parent=43 // pred_fallthru
          _
      $region44: #{multi_head_attention.1} parent=5 // pred_fallthru
        _
    $region6: #{multi_head_attention.1} parent=1 // loop_footer
      %s17 = sadd.s32 1, %s13
    $region7: #{multi_head_attention.1} parent=1 // loop_footer_branch
      %12 = sbr.rel target = $region3
    $region8: #{multi_head_attention.1} parent=1 // loop_exit
      _
    %5027 = vsyncpa [#allocation3], 1
    %s5028 = scalar_lea.sflag [#allocation3], 1
    %5029 = vsyncpa %s5028, 1

</llo_original>
